<compile_context>
chip_gen: v6e
topology: v6e:2x2x1
jax: 0.10.0
libtpu: 0.0.40
codegen_flags: <defaults>
</compile_context>

<pallas_src>
import math
from functools import partial

import numpy as np
import jax
import jax.numpy as jnp
from jax import lax
from jax.experimental import pallas as pl
from jax.experimental.pallas import tpu as pltpu


# ----------------------------- configuration --------------------------------
STATE_DIM = 6
ACT_DIM = 4
N_BLOCKS = 2
H_DIM = 32
CONTEXT_LEN = 8          # T
N_HEADS = 3              # must be 3 (see note above)
MAX_TIMESTEP = 64
B = 2

NEG_INF = -1e30
HEAD_OUT = 1 + STATE_DIM + ACT_DIM     # 11 (rtg | state | action)
HEAD_PAD = 128                         # lane-dense padded head / vector width
VEC_PAD = 128
FEAT_PAD = 16                          # raw feature cols [rtg|state|act|0pad]


def _layernorm(x, g, b, eps=1e-5):
    mu = jnp.mean(x, axis=-1, keepdims=True)
    var = jnp.mean(jnp.square(x - mu), axis=-1, keepdims=True)
    return (x - mu) * lax.rsqrt(var + eps) * g + b


def _erf(x):
    # Abramowitz & Stegun 7.1.26 (|abs err| < 1.5e-7): uses only exp/div/VPU
    # ops that are guaranteed to lower in Mosaic; matches exact erf to f32.
    p = 0.3275911
    a1, a2, a3, a4, a5 = (0.254829592, -0.284496736, 1.421413741,
                          -1.453152027, 1.061405429)
    ax = jnp.abs(x)
    t = 1.0 / (1.0 + p * ax)
    poly = ((((a5 * t + a4) * t + a3) * t + a2) * t + a1) * t
    y = 1.0 - poly * jnp.exp(-ax * ax)
    return jnp.where(x >= 0, y, -y)


def _gelu_exact(x):
    # PyTorch nn.GELU() default (erf-based, exact).
    return 0.5 * x * (1.0 + _erf(x * (1.0 / math.sqrt(2.0))))


# ------------------------------ Pallas kernel --------------------------------
def dt_kernel(feat_ref, ts_ref, mask_ref, wemb_ref, ttab_ref, wmats_ref,
              wm2_ref, whead_ref, vecs_ref, gvecs_ref, out_ref,
              *, n_blocks, D, Bsz, T, max_t):
    gv = gvecs_ref[...]                          # (8, 128)
    ln_e_g = gv[0:1, 0:D]
    ln_e_b = gv[1:2, 0:D]
    head_b = gv[2:3, :]                          # (1, 128); cols >= 11 zero
    emb_b = gv[3:4, 0:3 * D]                     # packed [br_e | bs_e | ba_e]

    BT = Bsz * T

    # ---- fused embeddings -------------------------------------------------
    feat = feat_ref[...].astype(jnp.float32)     # (BT, 16) = [rtg|state|act|0]
    ts = ts_ref[...]                             # (BT, 1) int32
    # timestep embedding as a one-hot MXU matmul against a 3x-tiled table
    oh = (ts == lax.broadcasted_iota(jnp.int32, (BT, max_t), 1)).astype(jnp.float32)
    emb = (jnp.dot(feat, wemb_ref[...], preferred_element_type=jnp.float32)
           + jnp.dot(oh, ttab_ref[...], preferred_element_type=jnp.float32)
           + emb_b)                              # (BT, 3D): [r_emb|s_emb|a_emb]

    # rearrange rows to (batch, modality, time) order -> x2 (B*3*T, D)
    parts = []
    for b in range(Bsz):
        rowblk = emb[b * T:(b + 1) * T, :]
        for m in range(3):
            parts.append(rowblk[:, m * D:(m + 1) * D])
    x2 = jnp.concatenate(parts, axis=0)

    # embed_ln
    x2 = _layernorm(x2, ln_e_g, ln_e_b)

    mask_bias = mask_ref[...]                    # (R, R) additive: 0 / -1e30

    for blk in range(n_blocks):
        w = wmats_ref[blk]                       # (D, 384): 128-aligned segments
        wm2 = wm2_ref[blk]                       # (4D, D)
        vec = vecs_ref[blk]                      # (8, 128)

        bqkv = vec[0:1, :]                       # [bq*scale | bk | bv | 0]
        bp = vec[1:2, 0:D]
        bm1 = vec[2:3, :]
        bm2 = vec[3:4, 0:D]
        ln1_g = vec[4:5, 0:D]
        ln1_b = vec[5:6, 0:D]
        ln2_g = vec[6:7, 0:D]
        ln2_b = vec[7:8, 0:D]

        # ---- masked causal attention (per-modality "head", fused QKV) ----
        # q is pre-scaled by 1/sqrt(D) at pack time (folded into Wq, bq).
        qkv = jnp.dot(x2, w[:, 0:128], preferred_element_type=jnp.float32) + bqkv
        q = qkv[:, 0:D]
        k = qkv[:, D:2 * D]
        v = qkv[:, 2 * D:3 * D]

        scores = lax.dot_general(q, k, (((1,), (1,)), ((), ())),
                                 preferred_element_type=jnp.float32) + mask_bias
        m = jnp.max(scores, axis=-1, keepdims=True)
        e = jnp.exp(scores - m)
        l = jnp.sum(e, axis=-1, keepdims=True)
        # normalize after the PV matmul; reciprocal on the EUP slot
        att = (jnp.dot(e, v, preferred_element_type=jnp.float32)
               * pl.reciprocal(l, approx=True))

        proj = jnp.dot(att, w[:, 128:256],
                       preferred_element_type=jnp.float32)[:, 0:D] + bp

        # att_drop / proj_drop / mlp dropout: identity in eval mode
        x2 = x2 + proj
        x2 = _layernorm(x2, ln1_g, ln1_b)

        # ---- MLP ----
        hmid = jnp.dot(x2, w[:, 256:384], preferred_element_type=jnp.float32) + bm1
        hmid = _gelu_exact(hmid)
        mlp = jnp.dot(hmid, wm2, preferred_element_type=jnp.float32) + bm2

        x2 = x2 + mlp
        x2 = _layernorm(x2, ln2_g, ln2_b)

    # ---- merged, lane-dense prediction heads ----
    # columns: [0] = rtg, [1:7] = state, [7:11] = action, [11:128] = zero pad
    out_ref[...] = jnp.dot(x2, whead_ref[...],
                           preferred_element_type=jnp.float32) + head_b


# ------------------------------ parameter init --------------------------------
def init_params(key):
    D, nb = H_DIM, N_BLOCKS
    ks = iter(jax.random.split(key, 64))

    def w(shape, s=0.02):
        return jax.random.normal(next(ks), shape, jnp.float32) * s

    p = {}
    # embedding layers
    p['embed_timestep'] = w((MAX_TIMESTEP, D))
    p['Ws_e'] = w((D, STATE_DIM)); p['bs_e'] = w((D,))
    p['Wr_e'] = w((D, 1));         p['br_e'] = w((D,))
    p['Wa_e'] = w((D, ACT_DIM));   p['ba_e'] = w((D,))

    # transformer parameters (PyTorch convention: Linear weight is (out, in))
    p['ln_e_g'] = jnp.ones((D,), jnp.float32)
    p['ln_e_b'] = jnp.zeros((D,), jnp.float32)

    p['Wq'] = w((nb, D, D)); p['bq'] = w((nb, D))
    p['Wk'] = w((nb, D, D)); p['bk'] = w((nb, D))
    p['Wv'] = w((nb, D, D)); p['bv'] = w((nb, D))
    p['Wp'] = w((nb, D, D)); p['bp'] = w((nb, D))
    p['ln1_g'] = jnp.ones((nb, D), jnp.float32)
    p['ln1_b'] = jnp.zeros((nb, D), jnp.float32)
    p['Wm1'] = w((nb, 4 * D, D)); p['bm1'] = w((nb, 4 * D))
    p['Wm2'] = w((nb, D, 4 * D)); p['bm2'] = w((nb, D))
    p['ln2_g'] = jnp.ones((nb, D), jnp.float32)
    p['ln2_b'] = jnp.zeros((nb, D), jnp.float32)

    p['Wr_h'] = w((1, D));         p['br_h'] = w((1,))
    p['Ws_h'] = w((STATE_DIM, D)); p['bs_h'] = w((STATE_DIM,))
    p['Wa_h'] = w((ACT_DIM, D));   p['ba_h'] = w((ACT_DIM,))
    return p


# --------------------------- one-time packing ---------------------------------
def _pad_last(x, target):
    pad = target - x.shape[-1]
    if pad == 0:
        return x
    return jnp.pad(x, [(0, 0)] * (x.ndim - 1) + [(0, pad)])


def _attn_mask_bias(Bb, T):
    """Additive mask: attend iff same (batch, modality) sequence AND causal."""
    R = Bb * 3 * T
    idx = np.arange(R)
    seq = idx // T            # combined (batch * 3 + modality) sequence id
    tim = idx % T
    allow = (seq[:, None] == seq[None, :]) & (tim[:, None] >= tim[None, :])
    return jnp.asarray(np.where(allow, 0.0, NEG_INF), dtype=jnp.float32)


def pack_params(p):
    """Run ONCE at init: pre-transpose weights to (in, out), fold 1/sqrt(D)
    into Wq/bq, and pack everything into a few lane-aligned buffers."""
    D, nb = H_DIM, N_BLOCKS
    scale = 1.0 / math.sqrt(D)
    swap = lambda a: jnp.swapaxes(a, -1, -2)

    # (nb, D, 384): [Wq*s|Wk|Wv (96->pad128) | Wproj (32->pad128) | Wmlp1 (128)]
    qkv = _pad_last(jnp.concatenate(
        [swap(p['Wq']) * scale, swap(p['Wk']), swap(p['Wv'])], axis=-1), 128)
    wp = _pad_last(swap(p['Wp']), 128)
    wm1 = swap(p['Wm1'])
    w_mats = jnp.concatenate([qkv, wp, wm1], axis=-1)

    w_m2 = swap(p['Wm2'])                                   # (nb, 4D, D)

    vecs = jnp.stack([
        _pad_last(jnp.concatenate([p['bq'] * scale, p['bk'], p['bv']], axis=-1),
                  VEC_PAD),
        _pad_last(p['bp'], VEC_PAD),
        _pad_last(p['bm1'], VEC_PAD),
        _pad_last(p['bm2'], VEC_PAD),
        _pad_last(p['ln1_g'], VEC_PAD),
        _pad_last(p['ln1_b'], VEC_PAD),
        _pad_last(p['ln2_g'], VEC_PAD),
        _pad_last(p['ln2_b'], VEC_PAD),
    ], axis=1)                                              # (nb, 8, 128)

    w_head = _pad_last(
        jnp.concatenate([swap(p['Wr_h']), swap(p['Ws_h']), swap(p['Wa_h'])],
                        axis=-1),
        HEAD_PAD)                                           # (D, 128)

    gvecs = jnp.zeros((8, VEC_PAD), jnp.float32)
    gvecs = gvecs.at[0, :D].set(p['ln_e_g'])
    gvecs = gvecs.at[1, :D].set(p['ln_e_b'])
    gvecs = gvecs.at[2, :HEAD_OUT].set(
        jnp.concatenate([p['br_h'], p['bs_h'], p['ba_h']], axis=-1))
    gvecs = gvecs.at[3, :3 * D].set(
        jnp.concatenate([p['br_e'], p['bs_e'], p['ba_e']], axis=-1))

    # block-diagonal embedding weight over modality: (FEAT_PAD, 3D)
    w_emb = jnp.zeros((FEAT_PAD, 3 * D), jnp.float32)
    w_emb = w_emb.at[0:1, 0:D].set(swap(p['Wr_e']))
    w_emb = w_emb.at[1:1 + STATE_DIM, D:2 * D].set(swap(p['Ws_e']))
    w_emb = w_emb.at[1 + STATE_DIM:HEAD_OUT, 2 * D:3 * D].set(swap(p['Wa_e']))

    # timestep table tiled 3x along columns -> one-hot matmul adds t_emb to
    # all three modality segments at once
    t_table = jnp.concatenate([p['embed_timestep']] * 3, axis=-1)  # (MAX_T, 3D)

    mask = _attn_mask_bias(B, CONTEXT_LEN)                  # (R, R)

    return dict(w_mats=w_mats, w_m2=w_m2, w_head=w_head, vecs=vecs,
                gvecs=gvecs, w_emb=w_emb, t_table=t_table, mask=mask)


# ------------------------------ forward wrapper --------------------------------
@jax.jit
def decision_transformer_forward(packed, time_steps, states, actions,
                                 returns_to_go):
    Bb, T, S = states.shape
    A = actions.shape[-1]
    D = H_DIM
    R = Bb * 3 * T
    BT = Bb * T

    # Only per-call glue: one tiny concat (raw features) + free reshapes.
    feat = jnp.concatenate(
        [returns_to_go, states, actions,
         jnp.zeros((Bb, T, FEAT_PAD - (1 + S + A)), jnp.float32)],
        axis=-1).reshape(BT, FEAT_PAD)
    ts2d = time_steps.astype(jnp.int32).reshape(BT, 1)

    kernel_inputs = (feat, ts2d, packed['mask'], packed['w_emb'],
                     packed['t_table'], packed['w_mats'], packed['w_m2'],
                     packed['w_head'], packed['vecs'], packed['gvecs'])

    def _full_spec(a):
        nd = a.ndim
        return pl.BlockSpec(a.shape, lambda i, _nd=nd: (0,) * _nd)

    out = pl.pallas_call(
        partial(dt_kernel, n_blocks=N_BLOCKS, D=D, Bsz=Bb, T=T,
                max_t=MAX_TIMESTEP),
        out_shape=jax.ShapeDtypeStruct((R, HEAD_PAD), jnp.float32),
        grid_spec=pltpu.PrefetchScalarGridSpec(
            num_scalar_prefetch=0,
            grid=(1,),                                   # single fused step
            in_specs=[_full_spec(a) for a in kernel_inputs],
            out_specs=pl.BlockSpec((R, HEAD_PAD), lambda i: (0, 0)),
        ),
        compiler_params=pltpu.CompilerParams(
            dimension_semantics=("arbitrary",)),
    )(*kernel_inputs)

    out = out.reshape(Bb, 3, T, HEAD_PAD)
    rtg_pred = out[:, 0, :, 0:1]                              # returns token
    state_pred = out[:, 1, :, 1:1 + S]                        # state token
    act_pred = out[:, 2, :, 1 + S:1 + S + A]                  # action token
    return rtg_pred, state_pred, act_pred


# ----------------------------------- main --------------------------------------
if __name__ == "__main__":
    key = jax.random.PRNGKey(0)
    kp, k1, k2, k3, k4 = jax.random.split(key, 5)

    params = init_params(kp)
    packed = pack_params(params)          # one-time packing, outside the hot path

    time_steps = jax.random.randint(k1, (B, CONTEXT_LEN), 0, MAX_TIMESTEP,
                                    dtype=jnp.int32)
    states = jax.random.normal(k2, (B, CONTEXT_LEN, STATE_DIM), jnp.float32)
    actions = jax.random.normal(k3, (B, CONTEXT_LEN, ACT_DIM), jnp.float32)
    returns_to_go = jax.random.normal(k4, (B, CONTEXT_LEN, 1), jnp.float32)

    rtg_pred, state_pred, act_pred = decision_transformer_forward(
        packed, time_steps, states, actions, returns_to_go)
    jax.block_until_ready((rtg_pred, state_pred, act_pred))

    assert rtg_pred.shape == (B, CONTEXT_LEN, 1)
    assert state_pred.shape == (B, CONTEXT_LEN, STATE_DIM)
    assert act_pred.shape == (B, CONTEXT_LEN, ACT_DIM)
    print("KERNEL_OK")
</pallas_src>

<mosaic_0001>
module attributes {stable_mosaic.version = 11 : i64} {
  func.func @dt_kernel(%arg0: i32, %arg1: memref<16x16xf32, #tpu.memory_space<vmem>>, %arg2: memref<16x1xi32, #tpu.memory_space<vmem>>, %arg3: memref<48x48xf32, #tpu.memory_space<vmem>>, %arg4: memref<16x96xf32, #tpu.memory_space<vmem>>, %arg5: memref<64x96xf32, #tpu.memory_space<vmem>>, %arg6: memref<2x32x384xf32, #tpu.memory_space<vmem>>, %arg7: memref<2x128x32xf32, #tpu.memory_space<vmem>>, %arg8: memref<32x128xf32, #tpu.memory_space<vmem>>, %arg9: memref<2x8x128xf32, #tpu.memory_space<vmem>>, %arg10: memref<8x128xf32, #tpu.memory_space<vmem>>, %arg11: memref<48x128xf32, #tpu.memory_space<vmem>>) attributes {dimension_semantics = [#tpu.dimension_semantics<arbitrary>], iteration_bounds = array<i64: 1>, scalar_prefetch = 0 : i64, scratch_operands = 0 : i64, tpu.core_type = #tpu.core_type<tc>, window_params = [{pipeline_mode = #tpu.pipeline_mode<synchronous>, transform_indices = @transform_0, window_bounds = array<i64: 16, 16>}, {pipeline_mode = #tpu.pipeline_mode<synchronous>, transform_indices = @transform_1, window_bounds = array<i64: 16, 1>}, {pipeline_mode = #tpu.pipeline_mode<synchronous>, transform_indices = @transform_2, window_bounds = array<i64: 48, 48>}, {pipeline_mode = #tpu.pipeline_mode<synchronous>, transform_indices = @transform_3, window_bounds = array<i64: 16, 96>}, {pipeline_mode = #tpu.pipeline_mode<synchronous>, transform_indices = @transform_4, window_bounds = array<i64: 64, 96>}, {pipeline_mode = #tpu.pipeline_mode<synchronous>, transform_indices = @transform_5, window_bounds = array<i64: 2, 32, 384>}, {pipeline_mode = #tpu.pipeline_mode<synchronous>, transform_indices = @transform_6, window_bounds = array<i64: 2, 128, 32>}, {pipeline_mode = #tpu.pipeline_mode<synchronous>, transform_indices = @transform_7, window_bounds = array<i64: 32, 128>}, {pipeline_mode = #tpu.pipeline_mode<synchronous>, transform_indices = @transform_8, window_bounds = array<i64: 2, 8, 128>}, {pipeline_mode = #tpu.pipeline_mode<synchronous>, transform_indices = @transform_9, window_bounds = array<i64: 8, 128>}, {pipeline_mode = #tpu.pipeline_mode<synchronous>, transform_indices = @transform_10, window_bounds = array<i64: 48, 128>}]} {
    %c0 = arith.constant 0 : index
    %c0_0 = arith.constant 0 : index
    %0 = vector.load %arg10[%c0, %c0_0] : memref<8x128xf32, #tpu.memory_space<vmem>>, vector<8x128xf32>
    %1 = vector.extract_strided_slice %0 {offsets = [0, 0], sizes = [1, 32], strides = [1, 1]} : vector<8x128xf32> to vector<1x32xf32>
    %2 = vector.extract_strided_slice %0 {offsets = [1, 0], sizes = [1, 32], strides = [1, 1]} : vector<8x128xf32> to vector<1x32xf32>
    %3 = vector.extract_strided_slice %0 {offsets = [2, 0], sizes = [1, 128], strides = [1, 1]} : vector<8x128xf32> to vector<1x128xf32>
    %4 = vector.extract_strided_slice %0 {offsets = [3, 0], sizes = [1, 96], strides = [1, 1]} : vector<8x128xf32> to vector<1x96xf32>
    %c0_1 = arith.constant 0 : index
    %c0_2 = arith.constant 0 : index
    %5 = vector.load %arg1[%c0_1, %c0_2] : memref<16x16xf32, #tpu.memory_space<vmem>>, vector<16x16xf32>
    %c0_3 = arith.constant 0 : index
    %c0_4 = arith.constant 0 : index
    %6 = vector.load %arg2[%c0_3, %c0_4] : memref<16x1xi32, #tpu.memory_space<vmem>>, vector<16x1xi32>
    %7 = tpu.iota {dimensions = array<i32: 1>} : vector<16x64xi32>
    %8 = vector.broadcast %6 : vector<16x1xi32> to vector<16x64xi32>
    %9 = arith.cmpi eq, %8, %7 : vector<16x64xi32>
    %10 = arith.extui %9 : vector<16x64xi1> to vector<16x64xi32>
    %11 = arith.sitofp %10 : vector<16x64xi32> to vector<16x64xf32>
    %c0_5 = arith.constant 0 : index
    %c0_6 = arith.constant 0 : index
    %12 = vector.load %arg4[%c0_5, %c0_6] : memref<16x96xf32, #tpu.memory_space<vmem>>, vector<16x96xf32>
    %cst = arith.constant dense<0.000000e+00> : vector<16x96xf32>
    %13 = tpu.matmul %5, %12, %cst {dimension_numbers = #tpu.dot_dimension_numbers<[1], [0], [0], [1], [0, 0, 1, 1], [], []>} : vector<16x16xf32>, vector<16x96xf32>, vector<16x96xf32> -> vector<16x96xf32>
    %c0_7 = arith.constant 0 : index
    %c0_8 = arith.constant 0 : index
    %14 = vector.load %arg5[%c0_7, %c0_8] : memref<64x96xf32, #tpu.memory_space<vmem>>, vector<64x96xf32>
    %cst_9 = arith.constant dense<0.000000e+00> : vector<16x96xf32>
    %15 = tpu.matmul %11, %14, %cst_9 {dimension_numbers = #tpu.dot_dimension_numbers<[1], [0], [0], [1], [0, 0, 1, 1], [], []>} : vector<16x64xf32>, vector<64x96xf32>, vector<16x96xf32> -> vector<16x96xf32>
    %16 = arith.addf %13, %15 : vector<16x96xf32>
    %17 = vector.broadcast %4 : vector<1x96xf32> to vector<16x96xf32>
    %18 = arith.addf %16, %17 : vector<16x96xf32>
    %19 = vector.extract_strided_slice %18 {offsets = [0, 0], sizes = [8, 96], strides = [1, 1]} : vector<16x96xf32> to vector<8x96xf32>
    %20 = vector.extract_strided_slice %19 {offsets = [0, 0], sizes = [8, 32], strides = [1, 1]} : vector<8x96xf32> to vector<8x32xf32>
    %21 = vector.extract_strided_slice %19 {offsets = [0, 32], sizes = [8, 32], strides = [1, 1]} : vector<8x96xf32> to vector<8x32xf32>
    %22 = vector.extract_strided_slice %19 {offsets = [0, 64], sizes = [8, 32], strides = [1, 1]} : vector<8x96xf32> to vector<8x32xf32>
    %23 = vector.extract_strided_slice %18 {offsets = [8, 0], sizes = [8, 96], strides = [1, 1]} : vector<16x96xf32> to vector<8x96xf32>
    %24 = vector.extract_strided_slice %23 {offsets = [0, 0], sizes = [8, 32], strides = [1, 1]} : vector<8x96xf32> to vector<8x32xf32>
    %25 = vector.extract_strided_slice %23 {offsets = [0, 32], sizes = [8, 32], strides = [1, 1]} : vector<8x96xf32> to vector<8x32xf32>
    %26 = vector.extract_strided_slice %23 {offsets = [0, 64], sizes = [8, 32], strides = [1, 1]} : vector<8x96xf32> to vector<8x32xf32>
    %27 = tpu.concatenate %20, %21, %22, %24, %25, %26 in 0 : vector<8x32xf32>, vector<8x32xf32>, vector<8x32xf32>, vector<8x32xf32>, vector<8x32xf32>, vector<8x32xf32> -> vector<48x32xf32>
    %cst_10 = arith.constant dense<0.000000e+00> : vector<48xf32>
    %28 = vector.multi_reduction <add>, %27, %cst_10 [1] : vector<48x32xf32> to vector<48xf32>
    %29 = vector.shape_cast %28 : vector<48xf32> to vector<48x1xf32>
    %cst_11 = arith.constant 3.200000e+01 : f32
    %30 = vector.broadcast %cst_11 : f32 to vector<48x1xf32>
    %31 = arith.divf %29, %30 : vector<48x1xf32>
    %32 = vector.broadcast %31 : vector<48x1xf32> to vector<48x32xf32>
    %33 = arith.subf %27, %32 : vector<48x32xf32>
    %34 = arith.mulf %33, %33 : vector<48x32xf32>
    %cst_12 = arith.constant dense<0.000000e+00> : vector<48xf32>
    %35 = vector.multi_reduction <add>, %34, %cst_12 [1] : vector<48x32xf32> to vector<48xf32>
    %36 = vector.shape_cast %35 : vector<48xf32> to vector<48x1xf32>
    %cst_13 = arith.constant 3.200000e+01 : f32
    %37 = vector.broadcast %cst_13 : f32 to vector<48x1xf32>
    %38 = arith.divf %36, %37 : vector<48x1xf32>
    %39 = vector.broadcast %31 : vector<48x1xf32> to vector<48x32xf32>
    %40 = arith.subf %27, %39 : vector<48x32xf32>
    %cst_14 = arith.constant 9.99999974E-6 : f32
    %41 = vector.broadcast %cst_14 : f32 to vector<48x1xf32>
    %42 = arith.addf %38, %41 : vector<48x1xf32>
    %43 = math.rsqrt %42 : vector<48x1xf32>
    %44 = vector.broadcast %43 : vector<48x1xf32> to vector<48x32xf32>
    %45 = arith.mulf %40, %44 : vector<48x32xf32>
    %46 = vector.broadcast %1 : vector<1x32xf32> to vector<48x32xf32>
    %47 = arith.mulf %45, %46 : vector<48x32xf32>
    %48 = vector.broadcast %2 : vector<1x32xf32> to vector<48x32xf32>
    %49 = arith.addf %47, %48 : vector<48x32xf32>
    %c0_15 = arith.constant 0 : index
    %c0_16 = arith.constant 0 : index
    %50 = vector.load %arg3[%c0_15, %c0_16] : memref<48x48xf32, #tpu.memory_space<vmem>>, vector<48x48xf32>
    %c0_17 = arith.constant 0 : index
    %c0_18 = arith.constant 0 : index
    %c0_19 = arith.constant 0 : index
    %51 = vector.load %arg6[%c0_17, %c0_18, %c0_19] : memref<2x32x384xf32, #tpu.memory_space<vmem>>, vector<1x32x384xf32>
    %52 = vector.shape_cast %51 : vector<1x32x384xf32> to vector<32x384xf32>
    %c0_20 = arith.constant 0 : index
    %c0_21 = arith.constant 0 : index
    %c0_22 = arith.constant 0 : index
    %53 = vector.load %arg7[%c0_20, %c0_21, %c0_22] : memref<2x128x32xf32, #tpu.memory_space<vmem>>, vector<1x128x32xf32>
    %54 = vector.shape_cast %53 : vector<1x128x32xf32> to vector<128x32xf32>
    %c0_23 = arith.constant 0 : index
    %c0_24 = arith.constant 0 : index
    %c0_25 = arith.constant 0 : index
    %55 = vector.load %arg9[%c0_23, %c0_24, %c0_25] : memref<2x8x128xf32, #tpu.memory_space<vmem>>, vector<1x8x128xf32>
    %56 = vector.shape_cast %55 : vector<1x8x128xf32> to vector<8x128xf32>
    %57 = vector.extract_strided_slice %56 {offsets = [0, 0], sizes = [1, 128], strides = [1, 1]} : vector<8x128xf32> to vector<1x128xf32>
    %58 = vector.extract_strided_slice %56 {offsets = [1, 0], sizes = [1, 32], strides = [1, 1]} : vector<8x128xf32> to vector<1x32xf32>
    %59 = vector.extract_strided_slice %56 {offsets = [2, 0], sizes = [1, 128], strides = [1, 1]} : vector<8x128xf32> to vector<1x128xf32>
    %60 = vector.extract_strided_slice %56 {offsets = [3, 0], sizes = [1, 32], strides = [1, 1]} : vector<8x128xf32> to vector<1x32xf32>
    %61 = vector.extract_strided_slice %56 {offsets = [4, 0], sizes = [1, 32], strides = [1, 1]} : vector<8x128xf32> to vector<1x32xf32>
    %62 = vector.extract_strided_slice %56 {offsets = [5, 0], sizes = [1, 32], strides = [1, 1]} : vector<8x128xf32> to vector<1x32xf32>
    %63 = vector.extract_strided_slice %56 {offsets = [6, 0], sizes = [1, 32], strides = [1, 1]} : vector<8x128xf32> to vector<1x32xf32>
    %64 = vector.extract_strided_slice %56 {offsets = [7, 0], sizes = [1, 32], strides = [1, 1]} : vector<8x128xf32> to vector<1x32xf32>
    %65 = vector.extract_strided_slice %52 {offsets = [0, 0], sizes = [32, 128], strides = [1, 1]} : vector<32x384xf32> to vector<32x128xf32>
    %cst_26 = arith.constant dense<0.000000e+00> : vector<48x128xf32>
    %66 = tpu.matmul %49, %65, %cst_26 {dimension_numbers = #tpu.dot_dimension_numbers<[1], [0], [0], [1], [0, 0, 1, 1], [], []>} : vector<48x32xf32>, vector<32x128xf32>, vector<48x128xf32> -> vector<48x128xf32>
    %67 = vector.broadcast %57 : vector<1x128xf32> to vector<48x128xf32>
    %68 = arith.addf %66, %67 : vector<48x128xf32>
    %69 = vector.extract_strided_slice %68 {offsets = [0, 0], sizes = [48, 32], strides = [1, 1]} : vector<48x128xf32> to vector<48x32xf32>
    %70 = vector.extract_strided_slice %68 {offsets = [0, 32], sizes = [48, 32], strides = [1, 1]} : vector<48x128xf32> to vector<48x32xf32>
    %71 = vector.extract_strided_slice %68 {offsets = [0, 64], sizes = [48, 32], strides = [1, 1]} : vector<48x128xf32> to vector<48x32xf32>
    %cst_27 = arith.constant dense<0.000000e+00> : vector<48x48xf32>
    %72 = tpu.matmul %69, %70, %cst_27 {dimension_numbers = #tpu.dot_dimension_numbers<[1], [1], [0], [0], [0, 0, 1, 0], [], []>} : vector<48x32xf32>, vector<48x32xf32>, vector<48x48xf32> -> vector<48x48xf32>
    %73 = arith.addf %72, %50 : vector<48x48xf32>
    %cst_28 = arith.constant dense<0xFF800000> : vector<48xf32>
    %74 = vector.multi_reduction <maximumf>, %73, %cst_28 [1] : vector<48x48xf32> to vector<48xf32>
    %75 = vector.shape_cast %74 : vector<48xf32> to vector<48x1xf32>
    %76 = vector.broadcast %75 : vector<48x1xf32> to vector<48x48xf32>
    %77 = arith.subf %73, %76 : vector<48x48xf32>
    %78 = math.exp %77 : vector<48x48xf32>
    %cst_29 = arith.constant dense<0.000000e+00> : vector<48xf32>
    %79 = vector.multi_reduction <add>, %78, %cst_29 [1] : vector<48x48xf32> to vector<48xf32>
    %80 = vector.shape_cast %79 : vector<48xf32> to vector<48x1xf32>
    %cst_30 = arith.constant dense<0.000000e+00> : vector<48x32xf32>
    %81 = tpu.matmul %78, %71, %cst_30 {dimension_numbers = #tpu.dot_dimension_numbers<[1], [0], [0], [1], [0, 0, 1, 1], [], []>} : vector<48x48xf32>, vector<48x32xf32>, vector<48x32xf32> -> vector<48x32xf32>
    %82 = tpu.reciprocal %80 {approx = true} : vector<48x1xf32> -> vector<48x1xf32>
    %83 = vector.broadcast %82 : vector<48x1xf32> to vector<48x32xf32>
    %84 = arith.mulf %81, %83 : vector<48x32xf32>
    %85 = vector.extract_strided_slice %52 {offsets = [0, 128], sizes = [32, 128], strides = [1, 1]} : vector<32x384xf32> to vector<32x128xf32>
    %cst_31 = arith.constant dense<0.000000e+00> : vector<48x128xf32>
    %86 = tpu.matmul %84, %85, %cst_31 {dimension_numbers = #tpu.dot_dimension_numbers<[1], [0], [0], [1], [0, 0, 1, 1], [], []>} : vector<48x32xf32>, vector<32x128xf32>, vector<48x128xf32> -> vector<48x128xf32>
    %87 = vector.extract_strided_slice %86 {offsets = [0, 0], sizes = [48, 32], strides = [1, 1]} : vector<48x128xf32> to vector<48x32xf32>
    %88 = vector.broadcast %58 : vector<1x32xf32> to vector<48x32xf32>
    %89 = arith.addf %87, %88 : vector<48x32xf32>
    %90 = arith.addf %49, %89 : vector<48x32xf32>
    %cst_32 = arith.constant dense<0.000000e+00> : vector<48xf32>
    %91 = vector.multi_reduction <add>, %90, %cst_32 [1] : vector<48x32xf32> to vector<48xf32>
    %92 = vector.shape_cast %91 : vector<48xf32> to vector<48x1xf32>
    %cst_33 = arith.constant 3.200000e+01 : f32
    %93 = vector.broadcast %cst_33 : f32 to vector<48x1xf32>
    %94 = arith.divf %92, %93 : vector<48x1xf32>
    %95 = vector.broadcast %94 : vector<48x1xf32> to vector<48x32xf32>
    %96 = arith.subf %90, %95 : vector<48x32xf32>
    %97 = arith.mulf %96, %96 : vector<48x32xf32>
    %cst_34 = arith.constant dense<0.000000e+00> : vector<48xf32>
    %98 = vector.multi_reduction <add>, %97, %cst_34 [1] : vector<48x32xf32> to vector<48xf32>
    %99 = vector.shape_cast %98 : vector<48xf32> to vector<48x1xf32>
    %cst_35 = arith.constant 3.200000e+01 : f32
    %100 = vector.broadcast %cst_35 : f32 to vector<48x1xf32>
    %101 = arith.divf %99, %100 : vector<48x1xf32>
    %102 = vector.broadcast %94 : vector<48x1xf32> to vector<48x32xf32>
    %103 = arith.subf %90, %102 : vector<48x32xf32>
    %cst_36 = arith.constant 9.99999974E-6 : f32
    %104 = vector.broadcast %cst_36 : f32 to vector<48x1xf32>
    %105 = arith.addf %101, %104 : vector<48x1xf32>
    %106 = math.rsqrt %105 : vector<48x1xf32>
    %107 = vector.broadcast %106 : vector<48x1xf32> to vector<48x32xf32>
    %108 = arith.mulf %103, %107 : vector<48x32xf32>
    %109 = vector.broadcast %61 : vector<1x32xf32> to vector<48x32xf32>
    %110 = arith.mulf %108, %109 : vector<48x32xf32>
    %111 = vector.broadcast %62 : vector<1x32xf32> to vector<48x32xf32>
    %112 = arith.addf %110, %111 : vector<48x32xf32>
    %113 = vector.extract_strided_slice %52 {offsets = [0, 256], sizes = [32, 128], strides = [1, 1]} : vector<32x384xf32> to vector<32x128xf32>
    %cst_37 = arith.constant dense<0.000000e+00> : vector<48x128xf32>
    %114 = tpu.matmul %112, %113, %cst_37 {dimension_numbers = #tpu.dot_dimension_numbers<[1], [0], [0], [1], [0, 0, 1, 1], [], []>} : vector<48x32xf32>, vector<32x128xf32>, vector<48x128xf32> -> vector<48x128xf32>
    %115 = vector.broadcast %59 : vector<1x128xf32> to vector<48x128xf32>
    %116 = arith.addf %114, %115 : vector<48x128xf32>
    %cst_38 = arith.constant 5.000000e-01 : f32
    %117 = vector.broadcast %cst_38 : f32 to vector<48x128xf32>
    %118 = arith.mulf %117, %116 : vector<48x128xf32>
    %cst_39 = arith.constant 0.707106769 : f32
    %119 = vector.broadcast %cst_39 : f32 to vector<48x128xf32>
    %120 = arith.mulf %116, %119 : vector<48x128xf32>
    %121 = math.absf %120 : vector<48x128xf32>
    %cst_40 = arith.constant 0.327591091 : f32
    %122 = vector.broadcast %cst_40 : f32 to vector<48x128xf32>
    %123 = arith.mulf %122, %121 : vector<48x128xf32>
    %cst_41 = arith.constant 1.000000e+00 : f32
    %124 = vector.broadcast %cst_41 : f32 to vector<48x128xf32>
    %125 = arith.addf %124, %123 : vector<48x128xf32>
    %cst_42 = arith.constant 1.000000e+00 : f32
    %126 = vector.broadcast %cst_42 : f32 to vector<48x128xf32>
    %127 = arith.divf %126, %125 : vector<48x128xf32>
    %cst_43 = arith.constant 1.06140542 : f32
    %128 = vector.broadcast %cst_43 : f32 to vector<48x128xf32>
    %129 = arith.mulf %128, %127 : vector<48x128xf32>
    %cst_44 = arith.constant -1.45315206 : f32
    %130 = vector.broadcast %cst_44 : f32 to vector<48x128xf32>
    %131 = arith.addf %129, %130 : vector<48x128xf32>
    %132 = arith.mulf %131, %127 : vector<48x128xf32>
    %cst_45 = arith.constant 1.42141378 : f32
    %133 = vector.broadcast %cst_45 : f32 to vector<48x128xf32>
    %134 = arith.addf %132, %133 : vector<48x128xf32>
    %135 = arith.mulf %134, %127 : vector<48x128xf32>
    %cst_46 = arith.constant -0.284496725 : f32
    %136 = vector.broadcast %cst_46 : f32 to vector<48x128xf32>
    %137 = arith.addf %135, %136 : vector<48x128xf32>
    %138 = arith.mulf %137, %127 : vector<48x128xf32>
    %cst_47 = arith.constant 0.254829586 : f32
    %139 = vector.broadcast %cst_47 : f32 to vector<48x128xf32>
    %140 = arith.addf %138, %139 : vector<48x128xf32>
    %141 = arith.mulf %140, %127 : vector<48x128xf32>
    %cst_48 = arith.constant 0.000000e+00 : f32
    %142 = vector.broadcast %cst_48 : f32 to vector<48x128xf32>
    %143 = arith.subf %142, %121 : vector<48x128xf32>
    %144 = arith.mulf %143, %121 : vector<48x128xf32>
    %145 = math.exp %144 : vector<48x128xf32>
    %146 = arith.mulf %141, %145 : vector<48x128xf32>
    %cst_49 = arith.constant 1.000000e+00 : f32
    %147 = vector.broadcast %cst_49 : f32 to vector<48x128xf32>
    %148 = arith.subf %147, %146 : vector<48x128xf32>
    %cst_50 = arith.constant 0.000000e+00 : f32
    %149 = vector.broadcast %cst_50 : f32 to vector<48x128xf32>
    %150 = arith.cmpf oge, %120, %149 : vector<48x128xf32>
    %cst_51 = arith.constant 0.000000e+00 : f32
    %151 = vector.broadcast %cst_51 : f32 to vector<48x128xf32>
    %152 = arith.subf %151, %148 : vector<48x128xf32>
    %153 = arith.select %150, %148, %152 : vector<48x128xi1>, vector<48x128xf32>
    %cst_52 = arith.constant 1.000000e+00 : f32
    %154 = vector.broadcast %cst_52 : f32 to vector<48x128xf32>
    %155 = arith.addf %154, %153 : vector<48x128xf32>
    %156 = arith.mulf %118, %155 : vector<48x128xf32>
    %cst_53 = arith.constant dense<0.000000e+00> : vector<48x32xf32>
    %157 = tpu.matmul %156, %54, %cst_53 {dimension_numbers = #tpu.dot_dimension_numbers<[1], [0], [0], [1], [0, 0, 1, 1], [], []>} : vector<48x128xf32>, vector<128x32xf32>, vector<48x32xf32> -> vector<48x32xf32>
    %158 = vector.broadcast %60 : vector<1x32xf32> to vector<48x32xf32>
    %159 = arith.addf %157, %158 : vector<48x32xf32>
    %160 = arith.addf %112, %159 : vector<48x32xf32>
    %cst_54 = arith.constant dense<0.000000e+00> : vector<48xf32>
    %161 = vector.multi_reduction <add>, %160, %cst_54 [1] : vector<48x32xf32> to vector<48xf32>
    %162 = vector.shape_cast %161 : vector<48xf32> to vector<48x1xf32>
    %cst_55 = arith.constant 3.200000e+01 : f32
    %163 = vector.broadcast %cst_55 : f32 to vector<48x1xf32>
    %164 = arith.divf %162, %163 : vector<48x1xf32>
    %165 = vector.broadcast %164 : vector<48x1xf32> to vector<48x32xf32>
    %166 = arith.subf %160, %165 : vector<48x32xf32>
    %167 = arith.mulf %166, %166 : vector<48x32xf32>
    %cst_56 = arith.constant dense<0.000000e+00> : vector<48xf32>
    %168 = vector.multi_reduction <add>, %167, %cst_56 [1] : vector<48x32xf32> to vector<48xf32>
    %169 = vector.shape_cast %168 : vector<48xf32> to vector<48x1xf32>
    %cst_57 = arith.constant 3.200000e+01 : f32
    %170 = vector.broadcast %cst_57 : f32 to vector<48x1xf32>
    %171 = arith.divf %169, %170 : vector<48x1xf32>
    %172 = vector.broadcast %164 : vector<48x1xf32> to vector<48x32xf32>
    %173 = arith.subf %160, %172 : vector<48x32xf32>
    %cst_58 = arith.constant 9.99999974E-6 : f32
    %174 = vector.broadcast %cst_58 : f32 to vector<48x1xf32>
    %175 = arith.addf %171, %174 : vector<48x1xf32>
    %176 = math.rsqrt %175 : vector<48x1xf32>
    %177 = vector.broadcast %176 : vector<48x1xf32> to vector<48x32xf32>
    %178 = arith.mulf %173, %177 : vector<48x32xf32>
    %179 = vector.broadcast %63 : vector<1x32xf32> to vector<48x32xf32>
    %180 = arith.mulf %178, %179 : vector<48x32xf32>
    %181 = vector.broadcast %64 : vector<1x32xf32> to vector<48x32xf32>
    %182 = arith.addf %180, %181 : vector<48x32xf32>
    %c1 = arith.constant 1 : index
    %c0_59 = arith.constant 0 : index
    %c0_60 = arith.constant 0 : index
    %183 = vector.load %arg6[%c1, %c0_59, %c0_60] : memref<2x32x384xf32, #tpu.memory_space<vmem>>, vector<1x32x384xf32>
    %184 = vector.shape_cast %183 : vector<1x32x384xf32> to vector<32x384xf32>
    %c1_61 = arith.constant 1 : index
    %c0_62 = arith.constant 0 : index
    %c0_63 = arith.constant 0 : index
    %185 = vector.load %arg7[%c1_61, %c0_62, %c0_63] : memref<2x128x32xf32, #tpu.memory_space<vmem>>, vector<1x128x32xf32>
    %186 = vector.shape_cast %185 : vector<1x128x32xf32> to vector<128x32xf32>
    %c1_64 = arith.constant 1 : index
    %c0_65 = arith.constant 0 : index
    %c0_66 = arith.constant 0 : index
    %187 = vector.load %arg9[%c1_64, %c0_65, %c0_66] : memref<2x8x128xf32, #tpu.memory_space<vmem>>, vector<1x8x128xf32>
    %188 = vector.shape_cast %187 : vector<1x8x128xf32> to vector<8x128xf32>
    %189 = vector.extract_strided_slice %188 {offsets = [0, 0], sizes = [1, 128], strides = [1, 1]} : vector<8x128xf32> to vector<1x128xf32>
    %190 = vector.extract_strided_slice %188 {offsets = [1, 0], sizes = [1, 32], strides = [1, 1]} : vector<8x128xf32> to vector<1x32xf32>
    %191 = vector.extract_strided_slice %188 {offsets = [2, 0], sizes = [1, 128], strides = [1, 1]} : vector<8x128xf32> to vector<1x128xf32>
    %192 = vector.extract_strided_slice %188 {offsets = [3, 0], sizes = [1, 32], strides = [1, 1]} : vector<8x128xf32> to vector<1x32xf32>
    %193 = vector.extract_strided_slice %188 {offsets = [4, 0], sizes = [1, 32], strides = [1, 1]} : vector<8x128xf32> to vector<1x32xf32>
    %194 = vector.extract_strided_slice %188 {offsets = [5, 0], sizes = [1, 32], strides = [1, 1]} : vector<8x128xf32> to vector<1x32xf32>
    %195 = vector.extract_strided_slice %188 {offsets = [6, 0], sizes = [1, 32], strides = [1, 1]} : vector<8x128xf32> to vector<1x32xf32>
    %196 = vector.extract_strided_slice %188 {offsets = [7, 0], sizes = [1, 32], strides = [1, 1]} : vector<8x128xf32> to vector<1x32xf32>
    %197 = vector.extract_strided_slice %184 {offsets = [0, 0], sizes = [32, 128], strides = [1, 1]} : vector<32x384xf32> to vector<32x128xf32>
    %cst_67 = arith.constant dense<0.000000e+00> : vector<48x128xf32>
    %198 = tpu.matmul %182, %197, %cst_67 {dimension_numbers = #tpu.dot_dimension_numbers<[1], [0], [0], [1], [0, 0, 1, 1], [], []>} : vector<48x32xf32>, vector<32x128xf32>, vector<48x128xf32> -> vector<48x128xf32>
    %199 = vector.broadcast %189 : vector<1x128xf32> to vector<48x128xf32>
    %200 = arith.addf %198, %199 : vector<48x128xf32>
    %201 = vector.extract_strided_slice %200 {offsets = [0, 0], sizes = [48, 32], strides = [1, 1]} : vector<48x128xf32> to vector<48x32xf32>
    %202 = vector.extract_strided_slice %200 {offsets = [0, 32], sizes = [48, 32], strides = [1, 1]} : vector<48x128xf32> to vector<48x32xf32>
    %203 = vector.extract_strided_slice %200 {offsets = [0, 64], sizes = [48, 32], strides = [1, 1]} : vector<48x128xf32> to vector<48x32xf32>
    %cst_68 = arith.constant dense<0.000000e+00> : vector<48x48xf32>
    %204 = tpu.matmul %201, %202, %cst_68 {dimension_numbers = #tpu.dot_dimension_numbers<[1], [1], [0], [0], [0, 0, 1, 0], [], []>} : vector<48x32xf32>, vector<48x32xf32>, vector<48x48xf32> -> vector<48x48xf32>
    %205 = arith.addf %204, %50 : vector<48x48xf32>
    %cst_69 = arith.constant dense<0xFF800000> : vector<48xf32>
    %206 = vector.multi_reduction <maximumf>, %205, %cst_69 [1] : vector<48x48xf32> to vector<48xf32>
    %207 = vector.shape_cast %206 : vector<48xf32> to vector<48x1xf32>
    %208 = vector.broadcast %207 : vector<48x1xf32> to vector<48x48xf32>
    %209 = arith.subf %205, %208 : vector<48x48xf32>
    %210 = math.exp %209 : vector<48x48xf32>
    %cst_70 = arith.constant dense<0.000000e+00> : vector<48xf32>
    %211 = vector.multi_reduction <add>, %210, %cst_70 [1] : vector<48x48xf32> to vector<48xf32>
    %212 = vector.shape_cast %211 : vector<48xf32> to vector<48x1xf32>
    %cst_71 = arith.constant dense<0.000000e+00> : vector<48x32xf32>
    %213 = tpu.matmul %210, %203, %cst_71 {dimension_numbers = #tpu.dot_dimension_numbers<[1], [0], [0], [1], [0, 0, 1, 1], [], []>} : vector<48x48xf32>, vector<48x32xf32>, vector<48x32xf32> -> vector<48x32xf32>
    %214 = tpu.reciprocal %212 {approx = true} : vector<48x1xf32> -> vector<48x1xf32>
    %215 = vector.broadcast %214 : vector<48x1xf32> to vector<48x32xf32>
    %216 = arith.mulf %213, %215 : vector<48x32xf32>
    %217 = vector.extract_strided_slice %184 {offsets = [0, 128], sizes = [32, 128], strides = [1, 1]} : vector<32x384xf32> to vector<32x128xf32>
    %cst_72 = arith.constant dense<0.000000e+00> : vector<48x128xf32>
    %218 = tpu.matmul %216, %217, %cst_72 {dimension_numbers = #tpu.dot_dimension_numbers<[1], [0], [0], [1], [0, 0, 1, 1], [], []>} : vector<48x32xf32>, vector<32x128xf32>, vector<48x128xf32> -> vector<48x128xf32>
    %219 = vector.extract_strided_slice %218 {offsets = [0, 0], sizes = [48, 32], strides = [1, 1]} : vector<48x128xf32> to vector<48x32xf32>
    %220 = vector.broadcast %190 : vector<1x32xf32> to vector<48x32xf32>
    %221 = arith.addf %219, %220 : vector<48x32xf32>
    %222 = arith.addf %182, %221 : vector<48x32xf32>
    %cst_73 = arith.constant dense<0.000000e+00> : vector<48xf32>
    %223 = vector.multi_reduction <add>, %222, %cst_73 [1] : vector<48x32xf32> to vector<48xf32>
    %224 = vector.shape_cast %223 : vector<48xf32> to vector<48x1xf32>
    %cst_74 = arith.constant 3.200000e+01 : f32
    %225 = vector.broadcast %cst_74 : f32 to vector<48x1xf32>
    %226 = arith.divf %224, %225 : vector<48x1xf32>
    %227 = vector.broadcast %226 : vector<48x1xf32> to vector<48x32xf32>
    %228 = arith.subf %222, %227 : vector<48x32xf32>
    %229 = arith.mulf %228, %228 : vector<48x32xf32>
    %cst_75 = arith.constant dense<0.000000e+00> : vector<48xf32>
    %230 = vector.multi_reduction <add>, %229, %cst_75 [1] : vector<48x32xf32> to vector<48xf32>
    %231 = vector.shape_cast %230 : vector<48xf32> to vector<48x1xf32>
    %cst_76 = arith.constant 3.200000e+01 : f32
    %232 = vector.broadcast %cst_76 : f32 to vector<48x1xf32>
    %233 = arith.divf %231, %232 : vector<48x1xf32>
    %234 = vector.broadcast %226 : vector<48x1xf32> to vector<48x32xf32>
    %235 = arith.subf %222, %234 : vector<48x32xf32>
    %cst_77 = arith.constant 9.99999974E-6 : f32
    %236 = vector.broadcast %cst_77 : f32 to vector<48x1xf32>
    %237 = arith.addf %233, %236 : vector<48x1xf32>
    %238 = math.rsqrt %237 : vector<48x1xf32>
    %239 = vector.broadcast %238 : vector<48x1xf32> to vector<48x32xf32>
    %240 = arith.mulf %235, %239 : vector<48x32xf32>
    %241 = vector.broadcast %193 : vector<1x32xf32> to vector<48x32xf32>
    %242 = arith.mulf %240, %241 : vector<48x32xf32>
    %243 = vector.broadcast %194 : vector<1x32xf32> to vector<48x32xf32>
    %244 = arith.addf %242, %243 : vector<48x32xf32>
    %245 = vector.extract_strided_slice %184 {offsets = [0, 256], sizes = [32, 128], strides = [1, 1]} : vector<32x384xf32> to vector<32x128xf32>
    %cst_78 = arith.constant dense<0.000000e+00> : vector<48x128xf32>
    %246 = tpu.matmul %244, %245, %cst_78 {dimension_numbers = #tpu.dot_dimension_numbers<[1], [0], [0], [1], [0, 0, 1, 1], [], []>} : vector<48x32xf32>, vector<32x128xf32>, vector<48x128xf32> -> vector<48x128xf32>
    %247 = vector.broadcast %191 : vector<1x128xf32> to vector<48x128xf32>
    %248 = arith.addf %246, %247 : vector<48x128xf32>
    %cst_79 = arith.constant 5.000000e-01 : f32
    %249 = vector.broadcast %cst_79 : f32 to vector<48x128xf32>
    %250 = arith.mulf %249, %248 : vector<48x128xf32>
    %cst_80 = arith.constant 0.707106769 : f32
    %251 = vector.broadcast %cst_80 : f32 to vector<48x128xf32>
    %252 = arith.mulf %248, %251 : vector<48x128xf32>
    %253 = math.absf %252 : vector<48x128xf32>
    %cst_81 = arith.constant 0.327591091 : f32
    %254 = vector.broadcast %cst_81 : f32 to vector<48x128xf32>
    %255 = arith.mulf %254, %253 : vector<48x128xf32>
    %cst_82 = arith.constant 1.000000e+00 : f32
    %256 = vector.broadcast %cst_82 : f32 to vector<48x128xf32>
    %257 = arith.addf %256, %255 : vector<48x128xf32>
    %cst_83 = arith.constant 1.000000e+00 : f32
    %258 = vector.broadcast %cst_83 : f32 to vector<48x128xf32>
    %259 = arith.divf %258, %257 : vector<48x128xf32>
    %cst_84 = arith.constant 1.06140542 : f32
    %260 = vector.broadcast %cst_84 : f32 to vector<48x128xf32>
    %261 = arith.mulf %260, %259 : vector<48x128xf32>
    %cst_85 = arith.constant -1.45315206 : f32
    %262 = vector.broadcast %cst_85 : f32 to vector<48x128xf32>
    %263 = arith.addf %261, %262 : vector<48x128xf32>
    %264 = arith.mulf %263, %259 : vector<48x128xf32>
    %cst_86 = arith.constant 1.42141378 : f32
    %265 = vector.broadcast %cst_86 : f32 to vector<48x128xf32>
    %266 = arith.addf %264, %265 : vector<48x128xf32>
    %267 = arith.mulf %266, %259 : vector<48x128xf32>
    %cst_87 = arith.constant -0.284496725 : f32
    %268 = vector.broadcast %cst_87 : f32 to vector<48x128xf32>
    %269 = arith.addf %267, %268 : vector<48x128xf32>
    %270 = arith.mulf %269, %259 : vector<48x128xf32>
    %cst_88 = arith.constant 0.254829586 : f32
    %271 = vector.broadcast %cst_88 : f32 to vector<48x128xf32>
    %272 = arith.addf %270, %271 : vector<48x128xf32>
    %273 = arith.mulf %272, %259 : vector<48x128xf32>
    %cst_89 = arith.constant 0.000000e+00 : f32
    %274 = vector.broadcast %cst_89 : f32 to vector<48x128xf32>
    %275 = arith.subf %274, %253 : vector<48x128xf32>
    %276 = arith.mulf %275, %253 : vector<48x128xf32>
    %277 = math.exp %276 : vector<48x128xf32>
    %278 = arith.mulf %273, %277 : vector<48x128xf32>
    %cst_90 = arith.constant 1.000000e+00 : f32
    %279 = vector.broadcast %cst_90 : f32 to vector<48x128xf32>
    %280 = arith.subf %279, %278 : vector<48x128xf32>
    %cst_91 = arith.constant 0.000000e+00 : f32
    %281 = vector.broadcast %cst_91 : f32 to vector<48x128xf32>
    %282 = arith.cmpf oge, %252, %281 : vector<48x128xf32>
    %cst_92 = arith.constant 0.000000e+00 : f32
    %283 = vector.broadcast %cst_92 : f32 to vector<48x128xf32>
    %284 = arith.subf %283, %280 : vector<48x128xf32>
    %285 = arith.select %282, %280, %284 : vector<48x128xi1>, vector<48x128xf32>
    %cst_93 = arith.constant 1.000000e+00 : f32
    %286 = vector.broadcast %cst_93 : f32 to vector<48x128xf32>
    %287 = arith.addf %286, %285 : vector<48x128xf32>
    %288 = arith.mulf %250, %287 : vector<48x128xf32>
    %cst_94 = arith.constant dense<0.000000e+00> : vector<48x32xf32>
    %289 = tpu.matmul %288, %186, %cst_94 {dimension_numbers = #tpu.dot_dimension_numbers<[1], [0], [0], [1], [0, 0, 1, 1], [], []>} : vector<48x128xf32>, vector<128x32xf32>, vector<48x32xf32> -> vector<48x32xf32>
    %290 = vector.broadcast %192 : vector<1x32xf32> to vector<48x32xf32>
    %291 = arith.addf %289, %290 : vector<48x32xf32>
    %292 = arith.addf %244, %291 : vector<48x32xf32>
    %cst_95 = arith.constant dense<0.000000e+00> : vector<48xf32>
    %293 = vector.multi_reduction <add>, %292, %cst_95 [1] : vector<48x32xf32> to vector<48xf32>
    %294 = vector.shape_cast %293 : vector<48xf32> to vector<48x1xf32>
    %cst_96 = arith.constant 3.200000e+01 : f32
    %295 = vector.broadcast %cst_96 : f32 to vector<48x1xf32>
    %296 = arith.divf %294, %295 : vector<48x1xf32>
    %297 = vector.broadcast %296 : vector<48x1xf32> to vector<48x32xf32>
    %298 = arith.subf %292, %297 : vector<48x32xf32>
    %299 = arith.mulf %298, %298 : vector<48x32xf32>
    %cst_97 = arith.constant dense<0.000000e+00> : vector<48xf32>
    %300 = vector.multi_reduction <add>, %299, %cst_97 [1] : vector<48x32xf32> to vector<48xf32>
    %301 = vector.shape_cast %300 : vector<48xf32> to vector<48x1xf32>
    %cst_98 = arith.constant 3.200000e+01 : f32
    %302 = vector.broadcast %cst_98 : f32 to vector<48x1xf32>
    %303 = arith.divf %301, %302 : vector<48x1xf32>
    %304 = vector.broadcast %296 : vector<48x1xf32> to vector<48x32xf32>
    %305 = arith.subf %292, %304 : vector<48x32xf32>
    %cst_99 = arith.constant 9.99999974E-6 : f32
    %306 = vector.broadcast %cst_99 : f32 to vector<48x1xf32>
    %307 = arith.addf %303, %306 : vector<48x1xf32>
    %308 = math.rsqrt %307 : vector<48x1xf32>
    %309 = vector.broadcast %308 : vector<48x1xf32> to vector<48x32xf32>
    %310 = arith.mulf %305, %309 : vector<48x32xf32>
    %311 = vector.broadcast %195 : vector<1x32xf32> to vector<48x32xf32>
    %312 = arith.mulf %310, %311 : vector<48x32xf32>
    %313 = vector.broadcast %196 : vector<1x32xf32> to vector<48x32xf32>
    %314 = arith.addf %312, %313 : vector<48x32xf32>
    %c0_100 = arith.constant 0 : index
    %c0_101 = arith.constant 0 : index
    %315 = vector.load %arg8[%c0_100, %c0_101] : memref<32x128xf32, #tpu.memory_space<vmem>>, vector<32x128xf32>
    %cst_102 = arith.constant dense<0.000000e+00> : vector<48x128xf32>
    %316 = tpu.matmul %314, %315, %cst_102 {dimension_numbers = #tpu.dot_dimension_numbers<[1], [0], [0], [1], [0, 0, 1, 1], [], []>} : vector<48x32xf32>, vector<32x128xf32>, vector<48x128xf32> -> vector<48x128xf32>
    %317 = vector.broadcast %3 : vector<1x128xf32> to vector<48x128xf32>
    %318 = arith.addf %316, %317 : vector<48x128xf32>
    %c0_103 = arith.constant 0 : index
    %c0_104 = arith.constant 0 : index
    %319 = vector.load %arg11[%c0_103, %c0_104] : memref<48x128xf32, #tpu.memory_space<vmem>>, vector<48x128xf32>
    tpu.vector_store %arg11[%c0_103, %c0_104], %318 {strides = array<i32>} : memref<48x128xf32, #tpu.memory_space<vmem>>, vector<48x128xf32>,
    return
  }
  func.func @transform_0(%arg0: i32) -> (i32, i32) {
    %c0_i32 = arith.constant 0 : i32
    %c0_i32_0 = arith.constant 0 : i32
    %c0_i32_1 = arith.constant 0 : i32
    return %c0_i32, %c0_i32_0 : i32, i32
  }
  func.func @transform_1(%arg0: i32) -> (i32, i32) {
    %c0_i32 = arith.constant 0 : i32
    %c0_i32_0 = arith.constant 0 : i32
    %c0_i32_1 = arith.constant 0 : i32
    return %c0_i32, %c0_i32_0 : i32, i32
  }
  func.func @transform_2(%arg0: i32) -> (i32, i32) {
    %c0_i32 = arith.constant 0 : i32
    %c0_i32_0 = arith.constant 0 : i32
    %c0_i32_1 = arith.constant 0 : i32
    return %c0_i32, %c0_i32_0 : i32, i32
  }
  func.func @transform_3(%arg0: i32) -> (i32, i32) {
    %c0_i32 = arith.constant 0 : i32
    %c0_i32_0 = arith.constant 0 : i32
    %c0_i32_1 = arith.constant 0 : i32
    return %c0_i32, %c0_i32_0 : i32, i32
  }
  func.func @transform_4(%arg0: i32) -> (i32, i32) {
    %c0_i32 = arith.constant 0 : i32
    %c0_i32_0 = arith.constant 0 : i32
    %c0_i32_1 = arith.constant 0 : i32
    return %c0_i32, %c0_i32_0 : i32, i32
  }
  func.func @transform_5(%arg0: i32) -> (i32, i32, i32) {
    %c0_i32 = arith.constant 0 : i32
    %c0_i32_0 = arith.constant 0 : i32
    %c0_i32_1 = arith.constant 0 : i32
    %c0_i32_2 = arith.constant 0 : i32
    return %c0_i32, %c0_i32_0, %c0_i32_1 : i32, i32, i32
  }
  func.func @transform_6(%arg0: i32) -> (i32, i32, i32) {
    %c0_i32 = arith.constant 0 : i32
    %c0_i32_0 = arith.constant 0 : i32
    %c0_i32_1 = arith.constant 0 : i32
    %c0_i32_2 = arith.constant 0 : i32
    return %c0_i32, %c0_i32_0, %c0_i32_1 : i32, i32, i32
  }
  func.func @transform_7(%arg0: i32) -> (i32, i32) {
    %c0_i32 = arith.constant 0 : i32
    %c0_i32_0 = arith.constant 0 : i32
    %c0_i32_1 = arith.constant 0 : i32
    return %c0_i32, %c0_i32_0 : i32, i32
  }
  func.func @transform_8(%arg0: i32) -> (i32, i32, i32) {
    %c0_i32 = arith.constant 0 : i32
    %c0_i32_0 = arith.constant 0 : i32
    %c0_i32_1 = arith.constant 0 : i32
    %c0_i32_2 = arith.constant 0 : i32
    return %c0_i32, %c0_i32_0, %c0_i32_1 : i32, i32, i32
  }
  func.func @transform_9(%arg0: i32) -> (i32, i32) {
    %c0_i32 = arith.constant 0 : i32
    %c0_i32_0 = arith.constant 0 : i32
    %c0_i32_1 = arith.constant 0 : i32
    return %c0_i32, %c0_i32_0 : i32, i32
  }
  func.func @transform_10(%arg0: i32) -> (i32, i32) {
    %c0_i32 = arith.constant 0 : i32
    %c0_i32_0 = arith.constant 0 : i32
    %c0_i32_1 = arith.constant 0 : i32
    return %c0_i32, %c0_i32_0 : i32, i32
  }
}

</mosaic_0001>

<llo_original>
// kernel: decision_transformer_forward.1
$region0: #{decision_transformer_forward.1}
  #allocation0 [shape = 'u32[]', space=smem, size = 0x4, offset = 0x4, fixed_abs, tag = 'smem constant byte address 0x4 - core index']
  #allocation1 [shape = 'u32[144,128]{1,0:T(1,128)}', space=vmem, size = 0x12000, scoped, tag = 'internal scratch']
  %s0 = inlined_call_operand.vmem [shape: f32[16,16], index: 0, kind: input, shape index: {}]
  %s1 = inlined_call_operand.vmem [shape: s32[16,1], index: 1, kind: input, shape index: {}]
  %s2 = inlined_call_operand.vmem [shape: f32[48,48], index: 2, kind: input, shape index: {}]
  %s3 = inlined_call_operand.vmem [shape: f32[16,96], index: 3, kind: input, shape index: {}]
  %s4 = inlined_call_operand.vmem [shape: f32[64,96], index: 4, kind: input, shape index: {}]
  %s5 = inlined_call_operand.vmem [shape: f32[2,32,384], index: 5, kind: input, shape index: {}]
  %s6 = inlined_call_operand.vmem [shape: f32[2,128,32], index: 6, kind: input, shape index: {}]
  %s7 = inlined_call_operand.vmem [shape: f32[32,128], index: 7, kind: input, shape index: {}]
  %s8 = inlined_call_operand.vmem [shape: f32[2,8,128], index: 8, kind: input, shape index: {}]
  %s9 = inlined_call_operand.vmem [shape: f32[8,128], index: 9, kind: input, shape index: {}]
  %s10 = inlined_call_operand.vmem [shape: f32[48,128], index: 10, kind: output, shape index: {}]
  %s11 = sld [smem:[#allocation0]]
  $region50: #{decision_transformer_forward.1} parent=0
    _
  %s13 = ssub.s32 1, %s11
  %s14 = scalar_select 0, %s13, %s11
  // Predicated region
  $region2: #{decision_transformer_forward.1} parent=0 // pred_check
    _
  $region3: #{decision_transformer_forward.1} parent=0 // pred_check_branch
    %16 = sbr.rel (0) target = $region5
  $region4: #{decision_transformer_forward.1} parent=0 // pred_region
    _
  $region5: #{decision_transformer_forward.1} parent=0 // pred_fallthru
    _
  // Predicated region
  $region6: #{decision_transformer_forward.1} parent=0 // pred_check
    _
  $region7: #{decision_transformer_forward.1} parent=0 // pred_check_branch
    %18 = sbr.rel (0) target = $region9
  $region8: #{decision_transformer_forward.1} parent=0 // pred_region
    _
  $region9: #{decision_transformer_forward.1} parent=0 // pred_fallthru
    _
  // Predicated region
  $region10: #{decision_transformer_forward.1} parent=0 // pred_check
    _
  $region11: #{decision_transformer_forward.1} parent=0 // pred_check_branch
    %20 = sbr.rel (0) target = $region13
  $region12: #{decision_transformer_forward.1} parent=0 // pred_region
    _
  $region13: #{decision_transformer_forward.1} parent=0 // pred_fallthru
    _
  // Predicated region
  $region14: #{decision_transformer_forward.1} parent=0 // pred_check
    _
  $region15: #{decision_transformer_forward.1} parent=0 // pred_check_branch
    %22 = sbr.rel (0) target = $region17
  $region16: #{decision_transformer_forward.1} parent=0 // pred_region
    _
  $region17: #{decision_transformer_forward.1} parent=0 // pred_fallthru
    _
  // Predicated region
  $region18: #{decision_transformer_forward.1} parent=0 // pred_check
    _
  $region19: #{decision_transformer_forward.1} parent=0 // pred_check_branch
    %24 = sbr.rel (0) target = $region21
  $region20: #{decision_transformer_forward.1} parent=0 // pred_region
    _
  $region21: #{decision_transformer_forward.1} parent=0 // pred_fallthru
    _
  // Predicated region
  $region22: #{decision_transformer_forward.1} parent=0 // pred_check
    _
  $region23: #{decision_transformer_forward.1} parent=0 // pred_check_branch
    %26 = sbr.rel (0) target = $region25
  $region24: #{decision_transformer_forward.1} parent=0 // pred_region
    _
  $region25: #{decision_transformer_forward.1} parent=0 // pred_fallthru
    _
  // Predicated region
  $region26: #{decision_transformer_forward.1} parent=0 // pred_check
    _
  $region27: #{decision_transformer_forward.1} parent=0 // pred_check_branch
    %28 = sbr.rel (0) target = $region29
  $region28: #{decision_transformer_forward.1} parent=0 // pred_region
    _
  $region29: #{decision_transformer_forward.1} parent=0 // pred_fallthru
    _
  // Predicated region
  $region30: #{decision_transformer_forward.1} parent=0 // pred_check
    _
  $region31: #{decision_transformer_forward.1} parent=0 // pred_check_branch
    %30 = sbr.rel (0) target = $region33
  $region32: #{decision_transformer_forward.1} parent=0 // pred_region
    _
  $region33: #{decision_transformer_forward.1} parent=0 // pred_fallthru
    _
  // Predicated region
  $region34: #{decision_transformer_forward.1} parent=0 // pred_check
    _
  $region35: #{decision_transformer_forward.1} parent=0 // pred_check_branch
    %32 = sbr.rel (0) target = $region37
  $region36: #{decision_transformer_forward.1} parent=0 // pred_region
    _
  $region37: #{decision_transformer_forward.1} parent=0 // pred_fallthru
    _
  // Predicated region
  $region38: #{decision_transformer_forward.1} parent=0 // pred_check
    _
  $region39: #{decision_transformer_forward.1} parent=0 // pred_check_branch
    %34 = sbr.rel (0) target = $region41
  $region40: #{decision_transformer_forward.1} parent=0 // pred_region
    _
  $region41: #{decision_transformer_forward.1} parent=0 // pred_fallthru
    _
  %v35 = vld [vmem:[%s9] sm:$0xff]
  %v36 = vld [vmem:[%s0] sm:$0xff]
  %v37 = vld [vmem:[%s0 + $0x8] sm:$0xff]
  %v38 = vld [vmem:[%s1] sm:$0xff]
  %v39 = vld [vmem:[%s1 + $0x8] sm:$0xff]
  %v40 = vlaneseq
  %v41 = vand.u32 %v40, 127
  %42 = vset.pattern.permute.xlu0 0
  %43 = vperm.xlu0 %42, %v38
  %v44 = vpop.permute.xlu0 %43
  %45 = vset.pattern.permute.xlu0 0
  %46 = vperm.xlu0 %45, %v39
  %v47 = vpop.permute.xlu0 %46
  %vm48 = vcmp.eq.s32.totalorder %v44, %v41
  %vm49 = vcmp.eq.s32.totalorder %v47, %v41
  %v50 = vsel %vm48, 1, 0
  %v51 = vsel %vm49, 1, 0
  %v52 = vcvt.s32.f32 %v50
  %v53 = vcvt.s32.f32 %v51
  %v54 = vld [vmem:[%s3] sm:$0xff]
  %v55 = vld [vmem:[%s3 + $0x8] sm:$0xff]
  %v56 = vld [vmem:[%s4] sm:$0xff]
  %v57 = vld [vmem:[%s4 + $0x8] sm:$0xff]
  %v58 = vld [vmem:[%s4 + $0x10] sm:$0xff]
  %v59 = vld [vmem:[%s4 + $0x18] sm:$0xff]
  %v60 = vld [vmem:[%s4 + $0x20] sm:$0xff]
  %v61 = vld [vmem:[%s4 + $0x28] sm:$0xff]
  %v62 = vld [vmem:[%s4 + $0x30] sm:$0xff]
  %v63 = vld [vmem:[%s4 + $0x38] sm:$0xff]
  %vm64 = vcmask 523264
  %v66 = vsel %vm64, %v52, 0
  %v69 = vsel %vm64, %v53, 0
  %71 = vmatprep.subr.mxu0 0.0
  %72 = vmatpush1.msra.mxu0 0.0
  %73 = vmatprep.subr.mxu0 0.0
  %74 = vmatpush1.msra.mxu0 0.0
  %75 = vmatprep.subr.mxu0 0.0
  %76 = vmatpush1.msra.mxu0 0.0
  %77 = vmatprep.subr.mxu0 0.0
  %78 = vmatpush1.msra.mxu0 0.0
  %79 = vmatprep.subr.mxu0 0.0
  %80 = vmatpush1.msra.mxu0 0.0
  %81 = vmatprep.subr.mxu0 0.0
  %82 = vmatpush1.msra.mxu0 0.0
  %83 = vmatprep.subr.mxu0 0.0
  %84 = vmatpush1.msra.mxu0 0.0
  %85 = vmatprep.subr.mxu0 0.0
  %86 = vmatpush1.msra.mxu0 0.0
  %87 = vmatprep.subr.mxu0 0.0
  %88 = vmatpush1.msra.mxu0 %v63
  %89 = vmatprep.subr.mxu0 0.0
  %90 = vmatpush1.msra.mxu0 %v62
  %91 = vmatprep.subr.mxu0 0.0
  %92 = vmatpush1.msra.mxu0 %v61
  %93 = vmatprep.subr.mxu0 0.0
  %94 = vmatpush1.msra.mxu0 %v60
  %95 = vmatprep.subr.mxu0 0.0
  %96 = vmatpush1.msra.mxu0 %v59
  %97 = vmatprep.subr.mxu0 0.0
  %98 = vmatpush1.msra.mxu0 %v58
  %99 = vmatprep.subr.mxu0 0.0
  %100 = vmatpush1.msra.mxu0 %v57
  %101 = vmatprep.subr.mxu0 0.0
  %102 = vmatpush1.msra.mxu0 %v56
  %103 = vmatprep.subr.mxu0 0.0
  %104 = vmatpush2.msra.mxu0 0.0
  %105 = vmatprep.subr.mxu0 0.0
  %106 = vmatpush2.msra.mxu0 0.0
  %107 = vmatprep.subr.mxu0 0.0
  %108 = vmatpush2.msra.mxu0 0.0
  %109 = vmatprep.subr.mxu0 0.0
  %110 = vmatpush2.msra.mxu0 0.0
  %111 = vmatprep.subr.mxu0 0.0
  %112 = vmatpush2.msra.mxu0 0.0
  %113 = vmatprep.subr.mxu0 0.0
  %114 = vmatpush2.msra.mxu0 0.0
  %115 = vmatprep.subr.mxu0 0.0
  %116 = vmatpush2.msra.mxu0 0.0
  %117 = vmatprep.subr.mxu0 0.0
  %118 = vmatpush2.msra.mxu0 0.0
  %119 = vmatprep.subr.mxu0 0.0
  %120 = vmatpush2.msra.mxu0 0.0
  %121 = vmatprep.subr.mxu0 0.0
  %122 = vmatpush2.msra.mxu0 0.0
  %123 = vmatprep.subr.mxu0 0.0
  %124 = vmatpush2.msra.mxu0 0.0
  %125 = vmatprep.subr.mxu0 0.0
  %126 = vmatpush2.msra.mxu0 0.0
  %127 = vmatprep.subr.mxu0 0.0
  %128 = vmatpush2.msra.mxu0 0.0
  %129 = vmatprep.subr.mxu0 0.0
  %130 = vmatpush2.msra.mxu0 0.0
  %131 = vmatprep.subr.mxu0 0.0
  %132 = vmatpush2.msra.mxu0 0.0
  %133 = vmatprep.subr.mxu0 0.0
  %134 = vmatpush2.msra.mxu0 0.0
  %135 = vmatprep.mubr.f32.mxu0 0.0
  %136 = vmatmul.mubr.f32.gmra.mxu0 %v66
  %v137 = vpop.f32.mrf.mxu0
  %v138 = vadd.f32 0.0, %v137
  %v139 = vpop.f32.mrf.mxu0
  %140 = vmatprep.mubr.f32.mxu0 0.0
  %141 = vmatmul.mubr.f32.gmra.mxu0 %v69
  %v142 = vpop.f32.mrf.mxu0
  %v143 = vadd.f32 0.0, %v142
  %v144 = vpop.f32.mrf.mxu0
  %145 = vdwg.mxu0
  %vm146 = vcmask 130048
  %v148 = vsel %vm146, %v36, 0
  %v151 = vsel %vm146, %v37, 0
  %153 = vmatprep.subr.mxu0 0.0
  %154 = vmatpush1.msra.mxu0 0.0
  %155 = vmatprep.subr.mxu0 0.0
  %156 = vmatpush1.msra.mxu0 0.0
  %157 = vmatprep.subr.mxu0 0.0
  %158 = vmatpush1.msra.mxu0 0.0
  %159 = vmatprep.subr.mxu0 0.0
  %160 = vmatpush1.msra.mxu0 0.0
  %161 = vmatprep.subr.mxu0 0.0
  %162 = vmatpush1.msra.mxu0 0.0
  %163 = vmatprep.subr.mxu0 0.0
  %164 = vmatpush1.msra.mxu0 0.0
  %165 = vmatprep.subr.mxu0 0.0
  %166 = vmatpush1.msra.mxu0 0.0
  %167 = vmatprep.subr.mxu0 0.0
  %168 = vmatpush1.msra.mxu0 0.0
  %169 = vmatprep.subr.mxu0 0.0
  %170 = vmatpush1.msra.mxu0 0.0
  %171 = vmatprep.subr.mxu0 0.0
  %172 = vmatpush1.msra.mxu0 0.0
  %173 = vmatprep.subr.mxu0 0.0
  %174 = vmatpush1.msra.mxu0 0.0
  %175 = vmatprep.subr.mxu0 0.0
  %176 = vmatpush1.msra.mxu0 0.0
  %177 = vmatprep.subr.mxu0 0.0
  %178 = vmatpush1.msra.mxu0 0.0
  %179 = vmatprep.subr.mxu0 0.0
  %180 = vmatpush1.msra.mxu0 0.0
  %181 = vmatprep.subr.mxu0 0.0
  %182 = vmatpush1.msra.mxu0 %v55
  %183 = vmatprep.subr.mxu0 0.0
  %184 = vmatpush1.msra.mxu0 %v54
  %185 = vmatprep.subr.mxu0 0.0
  %186 = vmatpush2.msra.mxu0 0.0
  %187 = vmatprep.subr.mxu0 0.0
  %188 = vmatpush2.msra.mxu0 0.0
  %189 = vmatprep.subr.mxu0 0.0
  %190 = vmatpush2.msra.mxu0 0.0
  %191 = vmatprep.subr.mxu0 0.0
  %192 = vmatpush2.msra.mxu0 0.0
  %193 = vmatprep.subr.mxu0 0.0
  %194 = vmatpush2.msra.mxu0 0.0
  %195 = vmatprep.subr.mxu0 0.0
  %196 = vmatpush2.msra.mxu0 0.0
  %197 = vmatprep.subr.mxu0 0.0
  %198 = vmatpush2.msra.mxu0 0.0
  %199 = vmatprep.subr.mxu0 0.0
  %200 = vmatpush2.msra.mxu0 0.0
  %201 = vmatprep.subr.mxu0 0.0
  %202 = vmatpush2.msra.mxu0 0.0
  %203 = vmatprep.subr.mxu0 0.0
  %204 = vmatpush2.msra.mxu0 0.0
  %205 = vmatprep.subr.mxu0 0.0
  %206 = vmatpush2.msra.mxu0 0.0
  %207 = vmatprep.subr.mxu0 0.0
  %208 = vmatpush2.msra.mxu0 0.0
  %209 = vmatprep.subr.mxu0 0.0
  %210 = vmatpush2.msra.mxu0 0.0
  %211 = vmatprep.subr.mxu0 0.0
  %212 = vmatpush2.msra.mxu0 0.0
  %213 = vmatprep.subr.mxu0 0.0
  %214 = vmatpush2.msra.mxu0 0.0
  %215 = vmatprep.subr.mxu0 0.0
  %216 = vmatpush2.msra.mxu0 0.0
  %217 = vmatprep.mubr.f32.mxu0 0.0
  %218 = vmatmul.mubr.f32.gmra.mxu0 %v148
  %v219 = vpop.f32.mrf.mxu0
  %v220 = vadd.f32 %v138, %v219
  %v221 = vpop.f32.mrf.mxu0
  %222 = vmatprep.mubr.f32.mxu0 0.0
  %223 = vmatmul.mubr.f32.gmra.mxu0 %v151
  %v224 = vpop.f32.mrf.mxu0
  %v225 = vadd.f32 %v143, %v224
  %v226 = vpop.f32.mrf.mxu0
  %227 = vdwg.mxu0
  %v228 = vlaneseq
  %v229 = vshrl.u32 %v228, 7
  %v230 = vsub.s32 3, %v229
  %v231 = vrot.slane %v35, %v230
  %v232 = vadd.f32 %v220, %v231
  %v233 = vadd.f32 %v225, %v231
  %235 = vrot.lane.b32.xlu0 %v232, 96
  %v236 = vpop.permute.xlu0 %235
  %238 = vrot.lane.b32.xlu0 %v232, 64
  %v239 = vpop.permute.xlu0 %238
  %242 = vrot.lane.b32.xlu0 %v233, 96
  %v243 = vpop.permute.xlu0 %242
  %245 = vrot.lane.b32.xlu0 %v233, 64
  %v246 = vpop.permute.xlu0 %245
  %vm248 = vcmask 261120
  %v249 = vsel %vm248, %v232, 0.0
  %250 = vadd.xlane.f32.xlu0 %v249
  %v251 = vpop.xlane.xlu0 %250
  %v252 = vsel %vm248, %v236, 0.0
  %253 = vadd.xlane.f32.xlu0 %v252
  %v254 = vpop.xlane.xlu0 %253
  %v255 = vsel %vm248, %v239, 0.0
  %256 = vadd.xlane.f32.xlu0 %v255
  %v257 = vpop.xlane.xlu0 %256
  %v258 = vsel %vm248, %v233, 0.0
  %259 = vadd.xlane.f32.xlu0 %v258
  %v260 = vpop.xlane.xlu0 %259
  %v261 = vsel %vm248, %v243, 0.0
  %262 = vadd.xlane.f32.xlu0 %v261
  %v263 = vpop.xlane.xlu0 %262
  %v264 = vsel %vm248, %v246, 0.0
  %265 = vadd.xlane.f32.xlu0 %v264
  %v266 = vpop.xlane.xlu0 %265
  %v267 = vrcp.pop 32.0
  %v268 = vmul.f32 %v251, %v267
  %v269 = vmul.f32 %v254, %v267
  %v270 = vmul.f32 %v257, %v267
  %v271 = vmul.f32 %v260, %v267
  %v272 = vmul.f32 %v263, %v267
  %v273 = vmul.f32 %v266, %v267
  %v274 = vsub.f32 %v232, %v268
  %v275 = vsub.f32 %v236, %v269
  %v276 = vsub.f32 %v239, %v270
  %v277 = vsub.f32 %v233, %v271
  %v278 = vsub.f32 %v243, %v272
  %v279 = vsub.f32 %v246, %v273
  %v280 = vmul.f32 %v274, %v274
  %v281 = vmul.f32 %v275, %v275
  %v282 = vmul.f32 %v276, %v276
  %v283 = vmul.f32 %v277, %v277
  %v284 = vmul.f32 %v278, %v278
  %v285 = vmul.f32 %v279, %v279
  %v286 = vsel %vm248, %v280, 0.0
  %287 = vadd.xlane.f32.xlu0 %v286
  %v288 = vpop.xlane.xlu0 %287
  %v289 = vsel %vm248, %v281, 0.0
  %290 = vadd.xlane.f32.xlu0 %v289
  %v291 = vpop.xlane.xlu0 %290
  %v292 = vsel %vm248, %v282, 0.0
  %293 = vadd.xlane.f32.xlu0 %v292
  %v294 = vpop.xlane.xlu0 %293
  %v295 = vsel %vm248, %v283, 0.0
  %296 = vadd.xlane.f32.xlu0 %v295
  %v297 = vpop.xlane.xlu0 %296
  %v298 = vsel %vm248, %v284, 0.0
  %299 = vadd.xlane.f32.xlu0 %v298
  %v300 = vpop.xlane.xlu0 %299
  %v301 = vsel %vm248, %v285, 0.0
  %302 = vadd.xlane.f32.xlu0 %v301
  %v303 = vpop.xlane.xlu0 %302
  %v304 = vmul.f32 %v288, %v267
  %v305 = vmul.f32 %v291, %v267
  %v306 = vmul.f32 %v294, %v267
  %v307 = vmul.f32 %v297, %v267
  %v308 = vmul.f32 %v300, %v267
  %v309 = vmul.f32 %v303, %v267
  %v310 = vadd.f32 %v304, 1e-05
  %v311 = vadd.f32 %v305, 1e-05
  %v312 = vadd.f32 %v306, 1e-05
  %v313 = vadd.f32 %v307, 1e-05
  %v314 = vadd.f32 %v308, 1e-05
  %v315 = vadd.f32 %v309, 1e-05
  %v316 = vrsqrt.pop %v310
  %v317 = vrsqrt.pop %v311
  %v318 = vrsqrt.pop %v312
  %v319 = vrsqrt.pop %v313
  %v320 = vrsqrt.pop %v314
  %v321 = vrsqrt.pop %v315
  %v322 = vmul.f32 %v274, %v316
  %v323 = vmul.f32 %v275, %v317
  %v324 = vmul.f32 %v276, %v318
  %v325 = vmul.f32 %v277, %v319
  %v326 = vmul.f32 %v278, %v320
  %v327 = vmul.f32 %v279, %v321
  %v328 = vlaneseq
  %v329 = vshrl.u32 %v328, 7
  %v330 = vsub.s32 0, %v329
  %v331 = vrot.slane %v35, %v330
  %v332 = vmul.f32 %v322, %v331
  %v333 = vmul.f32 %v323, %v331
  %v334 = vmul.f32 %v324, %v331
  %v335 = vmul.f32 %v325, %v331
  %v336 = vmul.f32 %v326, %v331
  %v337 = vmul.f32 %v327, %v331
  %v338 = vlaneseq
  %v339 = vshrl.u32 %v338, 7
  %v340 = vsub.s32 1, %v339
  %v341 = vrot.slane %v35, %v340
  %v342 = vadd.f32 %v332, %v341
  %v343 = vadd.f32 %v333, %v341
  %v344 = vadd.f32 %v334, %v341
  %v345 = vadd.f32 %v335, %v341
  %v346 = vadd.f32 %v336, %v341
  %v347 = vadd.f32 %v337, %v341
  %v348 = vld [vmem:[%s2] sm:$0xff]
  %v349 = vld [vmem:[%s2 + $0x8] sm:$0xff]
  %v350 = vld [vmem:[%s2 + $0x10] sm:$0xff]
  %v351 = vld [vmem:[%s2 + $0x18] sm:$0xff]
  %v352 = vld [vmem:[%s2 + $0x20] sm:$0xff]
  %v353 = vld [vmem:[%s2 + $0x28] sm:$0xff]
  %v354 = vld [vmem:[%s5] sm:$0xff]
  %v355 = vld [vmem:[%s5 + $0x8] sm:$0xff]
  %v356 = vld [vmem:[%s5 + $0x10] sm:$0xff]
  %v357 = vld [vmem:[%s5 + $0x18] sm:$0xff]
  %v358 = vld [vmem:[%s5 + $0x20] sm:$0xff]
  %v359 = vld [vmem:[%s5 + $0x28] sm:$0xff]
  %v360 = vld [vmem:[%s5 + $0x30] sm:$0xff]
  %v361 = vld [vmem:[%s5 + $0x38] sm:$0xff]
  %v362 = vld [vmem:[%s5 + $0x40] sm:$0xff]
  %v363 = vld [vmem:[%s5 + $0x48] sm:$0xff]
  %v364 = vld [vmem:[%s5 + $0x50] sm:$0xff]
  %v365 = vld [vmem:[%s5 + $0x58] sm:$0xff]
  %v366 = vld [vmem:[%s6] sm:$0xff]
  %v367 = vld [vmem:[%s6 + $0x8] sm:$0xff]
  %v368 = vld [vmem:[%s6 + $0x10] sm:$0xff]
  %v369 = vld [vmem:[%s6 + $0x18] sm:$0xff]
  %v370 = vld [vmem:[%s6 + $0x20] sm:$0xff]
  %v371 = vld [vmem:[%s6 + $0x28] sm:$0xff]
  %v372 = vld [vmem:[%s6 + $0x30] sm:$0xff]
  %v373 = vld [vmem:[%s6 + $0x38] sm:$0xff]
  %v374 = vld [vmem:[%s6 + $0x40] sm:$0xff]
  %v375 = vld [vmem:[%s6 + $0x48] sm:$0xff]
  %v376 = vld [vmem:[%s6 + $0x50] sm:$0xff]
  %v377 = vld [vmem:[%s6 + $0x58] sm:$0xff]
  %v378 = vld [vmem:[%s6 + $0x60] sm:$0xff]
  %v379 = vld [vmem:[%s6 + $0x68] sm:$0xff]
  %v380 = vld [vmem:[%s6 + $0x70] sm:$0xff]
  %v381 = vld [vmem:[%s6 + $0x78] sm:$0xff]
  %v382 = vld [vmem:[%s8] sm:$0xff]
  %v383 = vlaneseq
  %v384 = vshrl.u32 %v383, 7
  %v385 = vsub.s32 0, %v384
  %v386 = vrot.slane %v382, %v385
  %v388 = vsel %vm248, %v342, 0
  %v391 = vsel %vm248, %v343, 0
  %v394 = vsel %vm248, %v344, 0
  %v397 = vsel %vm248, %v345, 0
  %v400 = vsel %vm248, %v346, 0
  %v403 = vsel %vm248, %v347, 0
  %405 = vmatprep.subr.mxu0 0.0
  %406 = vmatpush1.msra.mxu0 0.0
  %407 = vmatprep.subr.mxu0 0.0
  %408 = vmatpush1.msra.mxu0 0.0
  %409 = vmatprep.subr.mxu0 0.0
  %410 = vmatpush1.msra.mxu0 0.0
  %411 = vmatprep.subr.mxu0 0.0
  %412 = vmatpush1.msra.mxu0 0.0
  %413 = vmatprep.subr.mxu0 0.0
  %414 = vmatpush1.msra.mxu0 0.0
  %415 = vmatprep.subr.mxu0 0.0
  %416 = vmatpush1.msra.mxu0 0.0
  %417 = vmatprep.subr.mxu0 0.0
  %418 = vmatpush1.msra.mxu0 0.0
  %419 = vmatprep.subr.mxu0 0.0
  %420 = vmatpush1.msra.mxu0 0.0
  %421 = vmatprep.subr.mxu0 0.0
  %422 = vmatpush1.msra.mxu0 0.0
  %423 = vmatprep.subr.mxu0 0.0
  %424 = vmatpush1.msra.mxu0 0.0
  %425 = vmatprep.subr.mxu0 0.0
  %426 = vmatpush1.msra.mxu0 0.0
  %427 = vmatprep.subr.mxu0 0.0
  %428 = vmatpush1.msra.mxu0 0.0
  %429 = vmatprep.subr.mxu0 0.0
  %430 = vmatpush1.msra.mxu0 %v363
  %431 = vmatprep.subr.mxu0 0.0
  %432 = vmatpush1.msra.mxu0 %v360
  %433 = vmatprep.subr.mxu0 0.0
  %434 = vmatpush1.msra.mxu0 %v357
  %435 = vmatprep.subr.mxu0 0.0
  %436 = vmatpush1.msra.mxu0 %v354
  %437 = vmatprep.subr.mxu0 0.0
  %438 = vmatpush2.msra.mxu0 0.0
  %439 = vmatprep.subr.mxu0 0.0
  %440 = vmatpush2.msra.mxu0 0.0
  %441 = vmatprep.subr.mxu0 0.0
  %442 = vmatpush2.msra.mxu0 0.0
  %443 = vmatprep.subr.mxu0 0.0
  %444 = vmatpush2.msra.mxu0 0.0
  %445 = vmatprep.subr.mxu0 0.0
  %446 = vmatpush2.msra.mxu0 0.0
  %447 = vmatprep.subr.mxu0 0.0
  %448 = vmatpush2.msra.mxu0 0.0
  %449 = vmatprep.subr.mxu0 0.0
  %450 = vmatpush2.msra.mxu0 0.0
  %451 = vmatprep.subr.mxu0 0.0
  %452 = vmatpush2.msra.mxu0 0.0
  %453 = vmatprep.subr.mxu0 0.0
  %454 = vmatpush2.msra.mxu0 0.0
  %455 = vmatprep.subr.mxu0 0.0
  %456 = vmatpush2.msra.mxu0 0.0
  %457 = vmatprep.subr.mxu0 0.0
  %458 = vmatpush2.msra.mxu0 0.0
  %459 = vmatprep.subr.mxu0 0.0
  %460 = vmatpush2.msra.mxu0 0.0
  %461 = vmatprep.subr.mxu0 0.0
  %462 = vmatpush2.msra.mxu0 0.0
  %463 = vmatprep.subr.mxu0 0.0
  %464 = vmatpush2.msra.mxu0 0.0
  %465 = vmatprep.subr.mxu0 0.0
  %466 = vmatpush2.msra.mxu0 0.0
  %467 = vmatprep.subr.mxu0 0.0
  %468 = vmatpush2.msra.mxu0 0.0
  %469 = vmatprep.mubr.f32.mxu0 0.0
  %470 = vmatmul.mubr.f32.gmra.mxu0 %v388
  %v471 = vpop.f32.mrf.mxu0
  %v472 = vadd.f32 %v386, %v471
  %v473 = vpop.f32.mrf.mxu0
  %474 = vmatprep.mubr.f32.mxu0 0.0
  %475 = vmatmul.mubr.f32.gmra.mxu0 %v391
  %v476 = vpop.f32.mrf.mxu0
  %v477 = vadd.f32 %v386, %v476
  %v478 = vpop.f32.mrf.mxu0
  %479 = vmatprep.mubr.f32.mxu0 0.0
  %480 = vmatmul.mubr.f32.gmra.mxu0 %v394
  %v481 = vpop.f32.mrf.mxu0
  %v482 = vadd.f32 %v386, %v481
  %v483 = vpop.f32.mrf.mxu0
  %484 = vmatprep.mubr.f32.mxu0 0.0
  %485 = vmatmul.mubr.f32.gmra.mxu0 %v397
  %v486 = vpop.f32.mrf.mxu0
  %v487 = vadd.f32 %v386, %v486
  %v488 = vpop.f32.mrf.mxu0
  %489 = vmatprep.mubr.f32.mxu0 0.0
  %490 = vmatmul.mubr.f32.gmra.mxu0 %v400
  %v491 = vpop.f32.mrf.mxu0
  %v492 = vadd.f32 %v386, %v491
  %v493 = vpop.f32.mrf.mxu0
  %494 = vmatprep.mubr.f32.mxu0 0.0
  %495 = vmatmul.mubr.f32.gmra.mxu0 %v403
  %v496 = vpop.f32.mrf.mxu0
  %v497 = vadd.f32 %v386, %v496
  %v498 = vpop.f32.mrf.mxu0
  %499 = vdwg.mxu0
  %506 = vrot.lane.b32.xlu0 %v472, 96
  %v507 = vpop.permute.xlu0 %506
  %508 = vrot.lane.b32.xlu0 %v477, 96
  %v509 = vpop.permute.xlu0 %508
  %510 = vrot.lane.b32.xlu0 %v482, 96
  %v511 = vpop.permute.xlu0 %510
  %512 = vrot.lane.b32.xlu0 %v487, 96
  %v513 = vpop.permute.xlu0 %512
  %514 = vrot.lane.b32.xlu0 %v492, 96
  %v515 = vpop.permute.xlu0 %514
  %516 = vrot.lane.b32.xlu0 %v497, 96
  %v517 = vpop.permute.xlu0 %516
  %v518 = vsel %vm248, %v472, 0
  %v520 = vsel %vm248, %v477, 0
  %v522 = vsel %vm248, %v482, 0
  %v524 = vsel %vm248, %v487, 0
  %v526 = vsel %vm248, %v492, 0
  %v528 = vsel %vm248, %v497, 0
  %v530 = vsel %vm248, %v507, 0
  %v532 = vsel %vm248, %v509, 0
  %v534 = vsel %vm248, %v511, 0
  %v536 = vsel %vm248, %v513, 0
  %v538 = vsel %vm248, %v515, 0
  %v540 = vsel %vm248, %v517, 0
  %542 = vmatprep.subr.mxu0 0.0
  %543 = vmatpush1.xpose.msra.mxu0 0.0
  %544 = vmatprep.subr.mxu0 0.0
  %545 = vmatpush1.xpose.msra.mxu0 0.0
  %546 = vmatprep.subr.mxu0 0.0
  %547 = vmatpush1.xpose.msra.mxu0 0.0
  %548 = vmatprep.subr.mxu0 0.0
  %549 = vmatpush1.xpose.msra.mxu0 0.0
  %550 = vmatprep.subr.mxu0 0.0
  %551 = vmatpush1.xpose.msra.mxu0 0.0
  %552 = vmatprep.subr.mxu0 0.0
  %553 = vmatpush1.xpose.msra.mxu0 0.0
  %554 = vmatprep.subr.mxu0 0.0
  %555 = vmatpush1.xpose.msra.mxu0 0.0
  %556 = vmatprep.subr.mxu0 0.0
  %557 = vmatpush1.xpose.msra.mxu0 0.0
  %558 = vmatprep.subr.mxu0 0.0
  %559 = vmatpush1.xpose.msra.mxu0 0.0
  %560 = vmatprep.subr.mxu0 0.0
  %561 = vmatpush1.xpose.msra.mxu0 0.0
  %562 = vmatprep.subr.mxu0 0.0
  %563 = vmatpush1.xpose.msra.mxu0 %v540
  %564 = vmatprep.subr.mxu0 0.0
  %565 = vmatpush1.xpose.msra.mxu0 %v538
  %566 = vmatprep.subr.mxu0 0.0
  %567 = vmatpush1.xpose.msra.mxu0 %v536
  %568 = vmatprep.subr.mxu0 0.0
  %569 = vmatpush1.xpose.msra.mxu0 %v534
  %570 = vmatprep.subr.mxu0 0.0
  %571 = vmatpush1.xpose.msra.mxu0 %v532
  %572 = vmatprep.subr.mxu0 0.0
  %573 = vmatpush1.xpose.msra.mxu0 %v530
  %574 = vmatprep.subr.mxu0 0.0
  %575 = vmatpush2.xpose.msra.mxu0 0.0
  %576 = vmatprep.subr.mxu0 0.0
  %577 = vmatpush2.xpose.msra.mxu0 0.0
  %578 = vmatprep.subr.mxu0 0.0
  %579 = vmatpush2.xpose.msra.mxu0 0.0
  %580 = vmatprep.subr.mxu0 0.0
  %581 = vmatpush2.xpose.msra.mxu0 0.0
  %582 = vmatprep.subr.mxu0 0.0
  %583 = vmatpush2.xpose.msra.mxu0 0.0
  %584 = vmatprep.subr.mxu0 0.0
  %585 = vmatpush2.xpose.msra.mxu0 0.0
  %586 = vmatprep.subr.mxu0 0.0
  %587 = vmatpush2.xpose.msra.mxu0 0.0
  %588 = vmatprep.subr.mxu0 0.0
  %589 = vmatpush2.xpose.msra.mxu0 0.0
  %590 = vmatprep.subr.mxu0 0.0
  %591 = vmatpush2.xpose.msra.mxu0 0.0
  %592 = vmatprep.subr.mxu0 0.0
  %593 = vmatpush2.xpose.msra.mxu0 0.0
  %594 = vmatprep.subr.mxu0 0.0
  %595 = vmatpush2.xpose.msra.mxu0 0.0
  %596 = vmatprep.subr.mxu0 0.0
  %597 = vmatpush2.xpose.msra.mxu0 0.0
  %598 = vmatprep.subr.mxu0 0.0
  %599 = vmatpush2.xpose.msra.mxu0 0.0
  %600 = vmatprep.subr.mxu0 0.0
  %601 = vmatpush2.xpose.msra.mxu0 0.0
  %602 = vmatprep.subr.mxu0 0.0
  %603 = vmatpush2.xpose.msra.mxu0 0.0
  %604 = vmatprep.subr.mxu0 0.0
  %605 = vmatpush2.xpose.msra.mxu0 0.0
  %606 = vmatprep.mubr.f32.mxu0 0.0
  %607 = vmatmul.mubr.f32.gmra.mxu0 %v518
  %v608 = vpop.f32.mrf.mxu0
  %v609 = vadd.f32 %v348, %v608
  %v610 = vpop.f32.mrf.mxu0
  %611 = vmatprep.mubr.f32.mxu0 0.0
  %612 = vmatmul.mubr.f32.gmra.mxu0 %v520
  %v613 = vpop.f32.mrf.mxu0
  %v614 = vadd.f32 %v349, %v613
  %v615 = vpop.f32.mrf.mxu0
  %616 = vmatprep.mubr.f32.mxu0 0.0
  %617 = vmatmul.mubr.f32.gmra.mxu0 %v522
  %v618 = vpop.f32.mrf.mxu0
  %v619 = vadd.f32 %v350, %v618
  %v620 = vpop.f32.mrf.mxu0
  %621 = vmatprep.mubr.f32.mxu0 0.0
  %622 = vmatmul.mubr.f32.gmra.mxu0 %v524
  %v623 = vpop.f32.mrf.mxu0
  %v624 = vadd.f32 %v351, %v623
  %v625 = vpop.f32.mrf.mxu0
  %626 = vmatprep.mubr.f32.mxu0 0.0
  %627 = vmatmul.mubr.f32.gmra.mxu0 %v526
  %v628 = vpop.f32.mrf.mxu0
  %v629 = vadd.f32 %v352, %v628
  %v630 = vpop.f32.mrf.mxu0
  %631 = vmatprep.mubr.f32.mxu0 0.0
  %632 = vmatmul.mubr.f32.gmra.mxu0 %v528
  %v633 = vpop.f32.mrf.mxu0
  %v634 = vadd.f32 %v353, %v633
  %v635 = vpop.f32.mrf.mxu0
  %636 = vdwg.mxu0
  %vm637 = vcmask 392192
  %v638 = vsel %vm637, %v609, -inf
  %639 = vmax.xlane.f32.xlu0 %v638
  %v640 = vpop.xlane.xlu0 %639
  %v641 = vsel %vm637, %v614, -inf
  %642 = vmax.xlane.f32.xlu0 %v641
  %v643 = vpop.xlane.xlu0 %642
  %v644 = vsel %vm637, %v619, -inf
  %645 = vmax.xlane.f32.xlu0 %v644
  %v646 = vpop.xlane.xlu0 %645
  %v647 = vsel %vm637, %v624, -inf
  %648 = vmax.xlane.f32.xlu0 %v647
  %v649 = vpop.xlane.xlu0 %648
  %v650 = vsel %vm637, %v629, -inf
  %651 = vmax.xlane.f32.xlu0 %v650
  %v652 = vpop.xlane.xlu0 %651
  %v653 = vsel %vm637, %v634, -inf
  %654 = vmax.xlane.f32.xlu0 %v653
  %v655 = vpop.xlane.xlu0 %654
  %v656 = vsub.f32 %v609, %v640
  %v657 = vsub.f32 %v614, %v643
  %v658 = vsub.f32 %v619, %v646
  %v659 = vsub.f32 %v624, %v649
  %v660 = vsub.f32 %v629, %v652
  %v661 = vsub.f32 %v634, %v655
  %v662 = vmul.f32 %v656, 1.442695
  %v663 = vpow.pop %v662
  %v664 = vmul.f32 %v657, 1.442695
  %v665 = vpow.pop %v664
  %v666 = vmul.f32 %v658, 1.442695
  %v667 = vpow.pop %v666
  %v668 = vmul.f32 %v659, 1.442695
  %v669 = vpow.pop %v668
  %v670 = vmul.f32 %v660, 1.442695
  %v671 = vpow.pop %v670
  %v672 = vmul.f32 %v661, 1.442695
  %v673 = vpow.pop %v672
  %v674 = vsel %vm637, %v663, 0.0
  %675 = vadd.xlane.f32.xlu0 %v674
  %v676 = vpop.xlane.xlu0 %675
  %v677 = vsel %vm637, %v665, 0.0
  %678 = vadd.xlane.f32.xlu0 %v677
  %v679 = vpop.xlane.xlu0 %678
  %v680 = vsel %vm637, %v667, 0.0
  %681 = vadd.xlane.f32.xlu0 %v680
  %v682 = vpop.xlane.xlu0 %681
  %v683 = vsel %vm637, %v669, 0.0
  %684 = vadd.xlane.f32.xlu0 %v683
  %v685 = vpop.xlane.xlu0 %684
  %v686 = vsel %vm637, %v671, 0.0
  %687 = vadd.xlane.f32.xlu0 %v686
  %v688 = vpop.xlane.xlu0 %687
  %v689 = vsel %vm637, %v673, 0.0
  %690 = vadd.xlane.f32.xlu0 %v689
  %v691 = vpop.xlane.xlu0 %690
  %692 = vrot.lane.b32.xlu0 %v472, 64
  %v693 = vpop.permute.xlu0 %692
  %694 = vrot.lane.b32.xlu0 %v477, 64
  %v695 = vpop.permute.xlu0 %694
  %696 = vrot.lane.b32.xlu0 %v482, 64
  %v697 = vpop.permute.xlu0 %696
  %698 = vrot.lane.b32.xlu0 %v487, 64
  %v699 = vpop.permute.xlu0 %698
  %700 = vrot.lane.b32.xlu0 %v492, 64
  %v701 = vpop.permute.xlu0 %700
  %702 = vrot.lane.b32.xlu0 %v497, 64
  %v703 = vpop.permute.xlu0 %702
  %v711 = vsel %vm637, %v663, 0
  %v714 = vsel %vm637, %v665, 0
  %v717 = vsel %vm637, %v667, 0
  %v720 = vsel %vm637, %v669, 0
  %v723 = vsel %vm637, %v671, 0
  %v726 = vsel %vm637, %v673, 0
  %728 = vmatprep.subr.mxu0 0.0
  %729 = vmatpush1.msra.mxu0 0.0
  %730 = vmatprep.subr.mxu0 0.0
  %731 = vmatpush1.msra.mxu0 0.0
  %732 = vmatprep.subr.mxu0 0.0
  %733 = vmatpush1.msra.mxu0 0.0
  %734 = vmatprep.subr.mxu0 0.0
  %735 = vmatpush1.msra.mxu0 0.0
  %736 = vmatprep.subr.mxu0 0.0
  %737 = vmatpush1.msra.mxu0 0.0
  %738 = vmatprep.subr.mxu0 0.0
  %739 = vmatpush1.msra.mxu0 0.0
  %740 = vmatprep.subr.mxu0 0.0
  %741 = vmatpush1.msra.mxu0 0.0
  %742 = vmatprep.subr.mxu0 0.0
  %743 = vmatpush1.msra.mxu0 0.0
  %744 = vmatprep.subr.mxu0 0.0
  %745 = vmatpush1.msra.mxu0 0.0
  %746 = vmatprep.subr.mxu0 0.0
  %747 = vmatpush1.msra.mxu0 0.0
  %748 = vmatprep.subr.mxu0 0.0
  %749 = vmatpush1.msra.mxu0 %v703
  %750 = vmatprep.subr.mxu0 0.0
  %751 = vmatpush1.msra.mxu0 %v701
  %752 = vmatprep.subr.mxu0 0.0
  %753 = vmatpush1.msra.mxu0 %v699
  %754 = vmatprep.subr.mxu0 0.0
  %755 = vmatpush1.msra.mxu0 %v697
  %756 = vmatprep.subr.mxu0 0.0
  %757 = vmatpush1.msra.mxu0 %v695
  %758 = vmatprep.subr.mxu0 0.0
  %759 = vmatpush1.msra.mxu0 %v693
  %760 = vmatprep.subr.mxu0 0.0
  %761 = vmatpush2.msra.mxu0 0.0
  %762 = vmatprep.subr.mxu0 0.0
  %763 = vmatpush2.msra.mxu0 0.0
  %764 = vmatprep.subr.mxu0 0.0
  %765 = vmatpush2.msra.mxu0 0.0
  %766 = vmatprep.subr.mxu0 0.0
  %767 = vmatpush2.msra.mxu0 0.0
  %768 = vmatprep.subr.mxu0 0.0
  %769 = vmatpush2.msra.mxu0 0.0
  %770 = vmatprep.subr.mxu0 0.0
  %771 = vmatpush2.msra.mxu0 0.0
  %772 = vmatprep.subr.mxu0 0.0
  %773 = vmatpush2.msra.mxu0 0.0
  %774 = vmatprep.subr.mxu0 0.0
  %775 = vmatpush2.msra.mxu0 0.0
  %776 = vmatprep.subr.mxu0 0.0
  %777 = vmatpush2.msra.mxu0 0.0
  %778 = vmatprep.subr.mxu0 0.0
  %779 = vmatpush2.msra.mxu0 0.0
  %780 = vmatprep.subr.mxu0 0.0
  %781 = vmatpush2.msra.mxu0 0.0
  %782 = vmatprep.subr.mxu0 0.0
  %783 = vmatpush2.msra.mxu0 0.0
  %784 = vmatprep.subr.mxu0 0.0
  %785 = vmatpush2.msra.mxu0 0.0
  %786 = vmatprep.subr.mxu0 0.0
  %787 = vmatpush2.msra.mxu0 0.0
  %788 = vmatprep.subr.mxu0 0.0
  %789 = vmatpush2.msra.mxu0 0.0
  %790 = vmatprep.subr.mxu0 0.0
  %791 = vmatpush2.msra.mxu0 0.0
  %792 = vmatprep.mubr.f32.mxu0 0.0
  %793 = vmatmul.mubr.f32.gmra.mxu0 %v711
  %v794 = vpop.f32.mrf.mxu0
  %v795 = vadd.f32 0.0, %v794
  %v796 = vpop.f32.mrf.mxu0
  %797 = vmatprep.mubr.f32.mxu0 0.0
  %798 = vmatmul.mubr.f32.gmra.mxu0 %v714
  %v799 = vpop.f32.mrf.mxu0
  %v800 = vadd.f32 0.0, %v799
  %v801 = vpop.f32.mrf.mxu0
  %802 = vmatprep.mubr.f32.mxu0 0.0
  %803 = vmatmul.mubr.f32.gmra.mxu0 %v717
  %v804 = vpop.f32.mrf.mxu0
  %v805 = vadd.f32 0.0, %v804
  %v806 = vpop.f32.mrf.mxu0
  %807 = vmatprep.mubr.f32.mxu0 0.0
  %808 = vmatmul.mubr.f32.gmra.mxu0 %v720
  %v809 = vpop.f32.mrf.mxu0
  %v810 = vadd.f32 0.0, %v809
  %v811 = vpop.f32.mrf.mxu0
  %812 = vmatprep.mubr.f32.mxu0 0.0
  %813 = vmatmul.mubr.f32.gmra.mxu0 %v723
  %v814 = vpop.f32.mrf.mxu0
  %v815 = vadd.f32 0.0, %v814
  %v816 = vpop.f32.mrf.mxu0
  %817 = vmatprep.mubr.f32.mxu0 0.0
  %818 = vmatmul.mubr.f32.gmra.mxu0 %v726
  %v819 = vpop.f32.mrf.mxu0
  %v820 = vadd.f32 0.0, %v819
  %v821 = vpop.f32.mrf.mxu0
  %822 = vdwg.mxu0
  %v823 = vrcp.pop %v676
  %v824 = vrcp.pop %v679
  %v825 = vrcp.pop %v682
  %v826 = vrcp.pop %v685
  %v827 = vrcp.pop %v688
  %v828 = vrcp.pop %v691
  %v829 = vmul.f32 %v795, %v823
  %v830 = vmul.f32 %v800, %v824
  %v831 = vmul.f32 %v805, %v825
  %v832 = vmul.f32 %v810, %v826
  %v833 = vmul.f32 %v815, %v827
  %v834 = vmul.f32 %v820, %v828
  %v836 = vsel %vm248, %v829, 0
  %v839 = vsel %vm248, %v830, 0
  %v842 = vsel %vm248, %v831, 0
  %v845 = vsel %vm248, %v832, 0
  %v848 = vsel %vm248, %v833, 0
  %v851 = vsel %vm248, %v834, 0
  %853 = vmatprep.subr.mxu0 0.0
  %854 = vmatpush1.msra.mxu0 0.0
  %855 = vmatprep.subr.mxu0 0.0
  %856 = vmatpush1.msra.mxu0 0.0
  %857 = vmatprep.subr.mxu0 0.0
  %858 = vmatpush1.msra.mxu0 0.0
  %859 = vmatprep.subr.mxu0 0.0
  %860 = vmatpush1.msra.mxu0 0.0
  %861 = vmatprep.subr.mxu0 0.0
  %862 = vmatpush1.msra.mxu0 0.0
  %863 = vmatprep.subr.mxu0 0.0
  %864 = vmatpush1.msra.mxu0 0.0
  %865 = vmatprep.subr.mxu0 0.0
  %866 = vmatpush1.msra.mxu0 0.0
  %867 = vmatprep.subr.mxu0 0.0
  %868 = vmatpush1.msra.mxu0 0.0
  %869 = vmatprep.subr.mxu0 0.0
  %870 = vmatpush1.msra.mxu0 0.0
  %871 = vmatprep.subr.mxu0 0.0
  %872 = vmatpush1.msra.mxu0 0.0
  %873 = vmatprep.subr.mxu0 0.0
  %874 = vmatpush1.msra.mxu0 0.0
  %875 = vmatprep.subr.mxu0 0.0
  %876 = vmatpush1.msra.mxu0 0.0
  %877 = vmatprep.subr.mxu0 0.0
  %878 = vmatpush1.msra.mxu0 %v364
  %879 = vmatprep.subr.mxu0 0.0
  %880 = vmatpush1.msra.mxu0 %v361
  %881 = vmatprep.subr.mxu0 0.0
  %882 = vmatpush1.msra.mxu0 %v358
  %883 = vmatprep.subr.mxu0 0.0
  %884 = vmatpush1.msra.mxu0 %v355
  %885 = vmatprep.subr.mxu0 0.0
  %886 = vmatpush2.msra.mxu0 0.0
  %887 = vmatprep.subr.mxu0 0.0
  %888 = vmatpush2.msra.mxu0 0.0
  %889 = vmatprep.subr.mxu0 0.0
  %890 = vmatpush2.msra.mxu0 0.0
  %891 = vmatprep.subr.mxu0 0.0
  %892 = vmatpush2.msra.mxu0 0.0
  %893 = vmatprep.subr.mxu0 0.0
  %894 = vmatpush2.msra.mxu0 0.0
  %895 = vmatprep.subr.mxu0 0.0
  %896 = vmatpush2.msra.mxu0 0.0
  %897 = vmatprep.subr.mxu0 0.0
  %898 = vmatpush2.msra.mxu0 0.0
  %899 = vmatprep.subr.mxu0 0.0
  %900 = vmatpush2.msra.mxu0 0.0
  %901 = vmatprep.subr.mxu0 0.0
  %902 = vmatpush2.msra.mxu0 0.0
  %903 = vmatprep.subr.mxu0 0.0
  %904 = vmatpush2.msra.mxu0 0.0
  %905 = vmatprep.subr.mxu0 0.0
  %906 = vmatpush2.msra.mxu0 0.0
  %907 = vmatprep.subr.mxu0 0.0
  %908 = vmatpush2.msra.mxu0 0.0
  %909 = vmatprep.subr.mxu0 0.0
  %910 = vmatpush2.msra.mxu0 0.0
  %911 = vmatprep.subr.mxu0 0.0
  %912 = vmatpush2.msra.mxu0 0.0
  %913 = vmatprep.subr.mxu0 0.0
  %914 = vmatpush2.msra.mxu0 0.0
  %915 = vmatprep.subr.mxu0 0.0
  %916 = vmatpush2.msra.mxu0 0.0
  %917 = vmatprep.mubr.f32.mxu0 0.0
  %918 = vmatmul.mubr.f32.gmra.mxu0 %v836
  %v919 = vpop.f32.mrf.mxu0
  %v920 = vadd.f32 0.0, %v919
  %v921 = vpop.f32.mrf.mxu0
  %922 = vmatprep.mubr.f32.mxu0 0.0
  %923 = vmatmul.mubr.f32.gmra.mxu0 %v839
  %v924 = vpop.f32.mrf.mxu0
  %v925 = vadd.f32 0.0, %v924
  %v926 = vpop.f32.mrf.mxu0
  %927 = vmatprep.mubr.f32.mxu0 0.0
  %928 = vmatmul.mubr.f32.gmra.mxu0 %v842
  %v929 = vpop.f32.mrf.mxu0
  %v930 = vadd.f32 0.0, %v929
  %v931 = vpop.f32.mrf.mxu0
  %932 = vmatprep.mubr.f32.mxu0 0.0
  %933 = vmatmul.mubr.f32.gmra.mxu0 %v845
  %v934 = vpop.f32.mrf.mxu0
  %v935 = vadd.f32 0.0, %v934
  %v936 = vpop.f32.mrf.mxu0
  %937 = vmatprep.mubr.f32.mxu0 0.0
  %938 = vmatmul.mubr.f32.gmra.mxu0 %v848
  %v939 = vpop.f32.mrf.mxu0
  %v940 = vadd.f32 0.0, %v939
  %v941 = vpop.f32.mrf.mxu0
  %942 = vmatprep.mubr.f32.mxu0 0.0
  %943 = vmatmul.mubr.f32.gmra.mxu0 %v851
  %v944 = vpop.f32.mrf.mxu0
  %v945 = vadd.f32 0.0, %v944
  %v946 = vpop.f32.mrf.mxu0
  %947 = vdwg.mxu0
  %v948 = vlaneseq
  %v949 = vshrl.u32 %v948, 7
  %v950 = vsub.s32 1, %v949
  %v951 = vrot.slane %v382, %v950
  %v952 = vadd.f32 %v920, %v951
  %v953 = vadd.f32 %v925, %v951
  %v954 = vadd.f32 %v930, %v951
  %v955 = vadd.f32 %v935, %v951
  %v956 = vadd.f32 %v940, %v951
  %v957 = vadd.f32 %v945, %v951
  %v958 = vadd.f32 %v342, %v952
  %v959 = vadd.f32 %v343, %v953
  %v960 = vadd.f32 %v344, %v954
  %v961 = vadd.f32 %v345, %v955
  %v962 = vadd.f32 %v346, %v956
  %v963 = vadd.f32 %v347, %v957
  %v964 = vsel %vm248, %v958, 0.0
  %965 = vadd.xlane.f32.xlu0 %v964
  %v966 = vpop.xlane.xlu0 %965
  %v967 = vsel %vm248, %v959, 0.0
  %968 = vadd.xlane.f32.xlu0 %v967
  %v969 = vpop.xlane.xlu0 %968
  %v970 = vsel %vm248, %v960, 0.0
  %971 = vadd.xlane.f32.xlu0 %v970
  %v972 = vpop.xlane.xlu0 %971
  %v973 = vsel %vm248, %v961, 0.0
  %974 = vadd.xlane.f32.xlu0 %v973
  %v975 = vpop.xlane.xlu0 %974
  %v976 = vsel %vm248, %v962, 0.0
  %977 = vadd.xlane.f32.xlu0 %v976
  %v978 = vpop.xlane.xlu0 %977
  %v979 = vsel %vm248, %v963, 0.0
  %980 = vadd.xlane.f32.xlu0 %v979
  %v981 = vpop.xlane.xlu0 %980
  %v982 = vmul.f32 %v966, %v267
  %v983 = vmul.f32 %v969, %v267
  %v984 = vmul.f32 %v972, %v267
  %v985 = vmul.f32 %v975, %v267
  %v986 = vmul.f32 %v978, %v267
  %v987 = vmul.f32 %v981, %v267
  %v988 = vsub.f32 %v958, %v982
  %v989 = vsub.f32 %v959, %v983
  %v990 = vsub.f32 %v960, %v984
  %v991 = vsub.f32 %v961, %v985
  %v992 = vsub.f32 %v962, %v986
  %v993 = vsub.f32 %v963, %v987
  %v994 = vmul.f32 %v988, %v988
  %v995 = vmul.f32 %v989, %v989
  %v996 = vmul.f32 %v990, %v990
  %v997 = vmul.f32 %v991, %v991
  %v998 = vmul.f32 %v992, %v992
  %v999 = vmul.f32 %v993, %v993
  %v1000 = vsel %vm248, %v994, 0.0
  %1001 = vadd.xlane.f32.xlu0 %v1000
  %v1002 = vpop.xlane.xlu0 %1001
  %v1003 = vsel %vm248, %v995, 0.0
  %1004 = vadd.xlane.f32.xlu0 %v1003
  %v1005 = vpop.xlane.xlu0 %1004
  %v1006 = vsel %vm248, %v996, 0.0
  %1007 = vadd.xlane.f32.xlu0 %v1006
  %v1008 = vpop.xlane.xlu0 %1007
  %v1009 = vsel %vm248, %v997, 0.0
  %1010 = vadd.xlane.f32.xlu0 %v1009
  %v1011 = vpop.xlane.xlu0 %1010
  %v1012 = vsel %vm248, %v998, 0.0
  %1013 = vadd.xlane.f32.xlu0 %v1012
  %v1014 = vpop.xlane.xlu0 %1013
  %v1015 = vsel %vm248, %v999, 0.0
  %1016 = vadd.xlane.f32.xlu0 %v1015
  %v1017 = vpop.xlane.xlu0 %1016
  %v1018 = vmul.f32 %v1002, %v267
  %v1019 = vmul.f32 %v1005, %v267
  %v1020 = vmul.f32 %v1008, %v267
  %v1021 = vmul.f32 %v1011, %v267
  %v1022 = vmul.f32 %v1014, %v267
  %v1023 = vmul.f32 %v1017, %v267
  %v1024 = vadd.f32 %v1018, 1e-05
  %v1025 = vadd.f32 %v1019, 1e-05
  %v1026 = vadd.f32 %v1020, 1e-05
  %v1027 = vadd.f32 %v1021, 1e-05
  %v1028 = vadd.f32 %v1022, 1e-05
  %v1029 = vadd.f32 %v1023, 1e-05
  %v1030 = vrsqrt.pop %v1024
  %v1031 = vrsqrt.pop %v1025
  %v1032 = vrsqrt.pop %v1026
  %v1033 = vrsqrt.pop %v1027
  %v1034 = vrsqrt.pop %v1028
  %v1035 = vrsqrt.pop %v1029
  %v1036 = vmul.f32 %v988, %v1030
  %v1037 = vmul.f32 %v989, %v1031
  %v1038 = vmul.f32 %v990, %v1032
  %v1039 = vmul.f32 %v991, %v1033
  %v1040 = vmul.f32 %v992, %v1034
  %v1041 = vmul.f32 %v993, %v1035
  %v1042 = vlaneseq
  %v1043 = vshrl.u32 %v1042, 7
  %v1044 = vsub.s32 4, %v1043
  %v1045 = vrot.slane %v382, %v1044
  %v1046 = vmul.f32 %v1036, %v1045
  %v1047 = vmul.f32 %v1037, %v1045
  %v1048 = vmul.f32 %v1038, %v1045
  %v1049 = vmul.f32 %v1039, %v1045
  %v1050 = vmul.f32 %v1040, %v1045
  %v1051 = vmul.f32 %v1041, %v1045
  %v1052 = vlaneseq
  %v1053 = vshrl.u32 %v1052, 7
  %v1054 = vsub.s32 5, %v1053
  %v1055 = vrot.slane %v382, %v1054
  %v1056 = vadd.f32 %v1046, %v1055
  %v1057 = vadd.f32 %v1047, %v1055
  %v1058 = vadd.f32 %v1048, %v1055
  %v1059 = vadd.f32 %v1049, %v1055
  %v1060 = vadd.f32 %v1050, %v1055
  %v1061 = vadd.f32 %v1051, %v1055
  %v1062 = vlaneseq
  %v1063 = vshrl.u32 %v1062, 7
  %v1064 = vsub.s32 2, %v1063
  %v1065 = vrot.slane %v382, %v1064
  %v1067 = vsel %vm248, %v1056, 0
  %v1070 = vsel %vm248, %v1057, 0
  %v1073 = vsel %vm248, %v1058, 0
  %v1076 = vsel %vm248, %v1059, 0
  %v1079 = vsel %vm248, %v1060, 0
  %v1082 = vsel %vm248, %v1061, 0
  %1084 = vmatprep.subr.mxu0 0.0
  %1085 = vmatpush1.msra.mxu0 0.0
  %1086 = vmatprep.subr.mxu0 0.0
  %1087 = vmatpush1.msra.mxu0 0.0
  %1088 = vmatprep.subr.mxu0 0.0
  %1089 = vmatpush1.msra.mxu0 0.0
  %1090 = vmatprep.subr.mxu0 0.0
  %1091 = vmatpush1.msra.mxu0 0.0
  %1092 = vmatprep.subr.mxu0 0.0
  %1093 = vmatpush1.msra.mxu0 0.0
  %1094 = vmatprep.subr.mxu0 0.0
  %1095 = vmatpush1.msra.mxu0 0.0
  %1096 = vmatprep.subr.mxu0 0.0
  %1097 = vmatpush1.msra.mxu0 0.0
  %1098 = vmatprep.subr.mxu0 0.0
  %1099 = vmatpush1.msra.mxu0 0.0
  %1100 = vmatprep.subr.mxu0 0.0
  %1101 = vmatpush1.msra.mxu0 0.0
  %1102 = vmatprep.subr.mxu0 0.0
  %1103 = vmatpush1.msra.mxu0 0.0
  %1104 = vmatprep.subr.mxu0 0.0
  %1105 = vmatpush1.msra.mxu0 0.0
  %1106 = vmatprep.subr.mxu0 0.0
  %1107 = vmatpush1.msra.mxu0 0.0
  %1108 = vmatprep.subr.mxu0 0.0
  %1109 = vmatpush1.msra.mxu0 %v365
  %1110 = vmatprep.subr.mxu0 0.0
  %1111 = vmatpush1.msra.mxu0 %v362
  %1112 = vmatprep.subr.mxu0 0.0
  %1113 = vmatpush1.msra.mxu0 %v359
  %1114 = vmatprep.subr.mxu0 0.0
  %1115 = vmatpush1.msra.mxu0 %v356
  %1116 = vmatprep.subr.mxu0 0.0
  %1117 = vmatpush2.msra.mxu0 0.0
  %1118 = vmatprep.subr.mxu0 0.0
  %1119 = vmatpush2.msra.mxu0 0.0
  %1120 = vmatprep.subr.mxu0 0.0
  %1121 = vmatpush2.msra.mxu0 0.0
  %1122 = vmatprep.subr.mxu0 0.0
  %1123 = vmatpush2.msra.mxu0 0.0
  %1124 = vmatprep.subr.mxu0 0.0
  %1125 = vmatpush2.msra.mxu0 0.0
  %1126 = vmatprep.subr.mxu0 0.0
  %1127 = vmatpush2.msra.mxu0 0.0
  %1128 = vmatprep.subr.mxu0 0.0
  %1129 = vmatpush2.msra.mxu0 0.0
  %1130 = vmatprep.subr.mxu0 0.0
  %1131 = vmatpush2.msra.mxu0 0.0
  %1132 = vmatprep.subr.mxu0 0.0
  %1133 = vmatpush2.msra.mxu0 0.0
  %1134 = vmatprep.subr.mxu0 0.0
  %1135 = vmatpush2.msra.mxu0 0.0
  %1136 = vmatprep.subr.mxu0 0.0
  %1137 = vmatpush2.msra.mxu0 0.0
  %1138 = vmatprep.subr.mxu0 0.0
  %1139 = vmatpush2.msra.mxu0 0.0
  %1140 = vmatprep.subr.mxu0 0.0
  %1141 = vmatpush2.msra.mxu0 0.0
  %1142 = vmatprep.subr.mxu0 0.0
  %1143 = vmatpush2.msra.mxu0 0.0
  %1144 = vmatprep.subr.mxu0 0.0
  %1145 = vmatpush2.msra.mxu0 0.0
  %1146 = vmatprep.subr.mxu0 0.0
  %1147 = vmatpush2.msra.mxu0 0.0
  %1148 = vmatprep.mubr.f32.mxu0 0.0
  %1149 = vmatmul.mubr.f32.gmra.mxu0 %v1067
  %v1150 = vpop.f32.mrf.mxu0
  %v1151 = vadd.f32 %v1065, %v1150
  %v1152 = vpop.f32.mrf.mxu0
  %1153 = vmatprep.mubr.f32.mxu0 0.0
  %1154 = vmatmul.mubr.f32.gmra.mxu0 %v1070
  %v1155 = vpop.f32.mrf.mxu0
  %v1156 = vadd.f32 %v1065, %v1155
  %v1157 = vpop.f32.mrf.mxu0
  %1158 = vmatprep.mubr.f32.mxu0 0.0
  %1159 = vmatmul.mubr.f32.gmra.mxu0 %v1073
  %v1160 = vpop.f32.mrf.mxu0
  %v1161 = vadd.f32 %v1065, %v1160
  %v1162 = vpop.f32.mrf.mxu0
  %1163 = vmatprep.mubr.f32.mxu0 0.0
  %1164 = vmatmul.mubr.f32.gmra.mxu0 %v1076
  %v1165 = vpop.f32.mrf.mxu0
  %v1166 = vadd.f32 %v1065, %v1165
  %v1167 = vpop.f32.mrf.mxu0
  %1168 = vmatprep.mubr.f32.mxu0 0.0
  %1169 = vmatmul.mubr.f32.gmra.mxu0 %v1079
  %v1170 = vpop.f32.mrf.mxu0
  %v1171 = vadd.f32 %v1065, %v1170
  %v1172 = vpop.f32.mrf.mxu0
  %1173 = vmatprep.mubr.f32.mxu0 0.0
  %1174 = vmatmul.mubr.f32.gmra.mxu0 %v1082
  %v1175 = vpop.f32.mrf.mxu0
  %v1176 = vadd.f32 %v1065, %v1175
  %v1177 = vpop.f32.mrf.mxu0
  %1178 = vdwg.mxu0
  %v1179 = vmul.f32 %v1151, 0.5
  %v1180 = vmul.f32 %v1156, 0.5
  %v1181 = vmul.f32 %v1161, 0.5
  %v1182 = vmul.f32 %v1166, 0.5
  %v1183 = vmul.f32 %v1171, 0.5
  %v1184 = vmul.f32 %v1176, 0.5
  %v1185 = vmul.f32 %v1151, 0.70710677
  %v1186 = vmul.f32 %v1156, 0.70710677
  %v1187 = vmul.f32 %v1161, 0.70710677
  %v1188 = vmul.f32 %v1166, 0.70710677
  %v1189 = vmul.f32 %v1171, 0.70710677
  %v1190 = vmul.f32 %v1176, 0.70710677
  %v1191 = vand.u32 2147483647, %v1185
  %v1192 = vand.u32 2147483647, %v1186
  %v1193 = vand.u32 2147483647, %v1187
  %v1194 = vand.u32 2147483647, %v1188
  %v1195 = vand.u32 2147483647, %v1189
  %v1196 = vand.u32 2147483647, %v1190
  %v1197 = vmul.f32 %v1191, 0.3275911
  %v1198 = vmul.f32 %v1192, 0.3275911
  %v1199 = vmul.f32 %v1193, 0.3275911
  %v1200 = vmul.f32 %v1194, 0.3275911
  %v1201 = vmul.f32 %v1195, 0.3275911
  %v1202 = vmul.f32 %v1196, 0.3275911
  %v1203 = vadd.f32 %v1197, 1.0
  %v1204 = vadd.f32 %v1198, 1.0
  %v1205 = vadd.f32 %v1199, 1.0
  %v1206 = vadd.f32 %v1200, 1.0
  %v1207 = vadd.f32 %v1201, 1.0
  %v1208 = vadd.f32 %v1202, 1.0
  %v1209 = vrcp.pop %v1203
  %v1210 = vmul.f32 1.0, %v1209
  %v1211 = vrcp.pop %v1204
  %v1212 = vmul.f32 1.0, %v1211
  %v1213 = vrcp.pop %v1205
  %v1214 = vmul.f32 1.0, %v1213
  %v1215 = vrcp.pop %v1206
  %v1216 = vmul.f32 1.0, %v1215
  %v1217 = vrcp.pop %v1207
  %v1218 = vmul.f32 1.0, %v1217
  %v1219 = vrcp.pop %v1208
  %v1220 = vmul.f32 1.0, %v1219
  %v1221 = vmul.f32 %v1210, 1.0614054
  %v1222 = vmul.f32 %v1212, 1.0614054
  %v1223 = vmul.f32 %v1214, 1.0614054
  %v1224 = vmul.f32 %v1216, 1.0614054
  %v1225 = vmul.f32 %v1218, 1.0614054
  %v1226 = vmul.f32 %v1220, 1.0614054
  %v1227 = vadd.f32 %v1221, -1.4531521
  %v1228 = vadd.f32 %v1222, -1.4531521
  %v1229 = vadd.f32 %v1223, -1.4531521
  %v1230 = vadd.f32 %v1224, -1.4531521
  %v1231 = vadd.f32 %v1225, -1.4531521
  %v1232 = vadd.f32 %v1226, -1.4531521
  %v1233 = vmul.f32 %v1227, %v1210
  %v1234 = vmul.f32 %v1228, %v1212
  %v1235 = vmul.f32 %v1229, %v1214
  %v1236 = vmul.f32 %v1230, %v1216
  %v1237 = vmul.f32 %v1231, %v1218
  %v1238 = vmul.f32 %v1232, %v1220
  %v1239 = vadd.f32 %v1233, 1.4214138
  %v1240 = vadd.f32 %v1234, 1.4214138
  %v1241 = vadd.f32 %v1235, 1.4214138
  %v1242 = vadd.f32 %v1236, 1.4214138
  %v1243 = vadd.f32 %v1237, 1.4214138
  %v1244 = vadd.f32 %v1238, 1.4214138
  %v1245 = vmul.f32 %v1239, %v1210
  %v1246 = vmul.f32 %v1240, %v1212
  %v1247 = vmul.f32 %v1241, %v1214
  %v1248 = vmul.f32 %v1242, %v1216
  %v1249 = vmul.f32 %v1243, %v1218
  %v1250 = vmul.f32 %v1244, %v1220
  %v1251 = vadd.f32 %v1245, -0.28449672
  %v1252 = vadd.f32 %v1246, -0.28449672
  %v1253 = vadd.f32 %v1247, -0.28449672
  %v1254 = vadd.f32 %v1248, -0.28449672
  %v1255 = vadd.f32 %v1249, -0.28449672
  %v1256 = vadd.f32 %v1250, -0.28449672
  %v1257 = vmul.f32 %v1251, %v1210
  %v1258 = vmul.f32 %v1252, %v1212
  %v1259 = vmul.f32 %v1253, %v1214
  %v1260 = vmul.f32 %v1254, %v1216
  %v1261 = vmul.f32 %v1255, %v1218
  %v1262 = vmul.f32 %v1256, %v1220
  %v1263 = vadd.f32 %v1257, 0.2548296
  %v1264 = vadd.f32 %v1258, 0.2548296
  %v1265 = vadd.f32 %v1259, 0.2548296
  %v1266 = vadd.f32 %v1260, 0.2548296
  %v1267 = vadd.f32 %v1261, 0.2548296
  %v1268 = vadd.f32 %v1262, 0.2548296
  %v1269 = vmul.f32 %v1263, %v1210
  %v1270 = vmul.f32 %v1264, %v1212
  %v1271 = vmul.f32 %v1265, %v1214
  %v1272 = vmul.f32 %v1266, %v1216
  %v1273 = vmul.f32 %v1267, %v1218
  %v1274 = vmul.f32 %v1268, %v1220
  %v1275 = vsub.f32 0.0, %v1191
  %v1276 = vsub.f32 0.0, %v1192
  %v1277 = vsub.f32 0.0, %v1193
  %v1278 = vsub.f32 0.0, %v1194
  %v1279 = vsub.f32 0.0, %v1195
  %v1280 = vsub.f32 0.0, %v1196
  %v1281 = vmul.f32 %v1275, %v1191
  %v1282 = vmul.f32 %v1276, %v1192
  %v1283 = vmul.f32 %v1277, %v1193
  %v1284 = vmul.f32 %v1278, %v1194
  %v1285 = vmul.f32 %v1279, %v1195
  %v1286 = vmul.f32 %v1280, %v1196
  %v1287 = vmul.f32 %v1281, 1.442695
  %v1288 = vpow.pop %v1287
  %v1289 = vmul.f32 %v1282, 1.442695
  %v1290 = vpow.pop %v1289
  %v1291 = vmul.f32 %v1283, 1.442695
  %v1292 = vpow.pop %v1291
  %v1293 = vmul.f32 %v1284, 1.442695
  %v1294 = vpow.pop %v1293
  %v1295 = vmul.f32 %v1285, 1.442695
  %v1296 = vpow.pop %v1295
  %v1297 = vmul.f32 %v1286, 1.442695
  %v1298 = vpow.pop %v1297
  %v1299 = vmul.f32 %v1269, %v1288
  %v1300 = vmul.f32 %v1270, %v1290
  %v1301 = vmul.f32 %v1271, %v1292
  %v1302 = vmul.f32 %v1272, %v1294
  %v1303 = vmul.f32 %v1273, %v1296
  %v1304 = vmul.f32 %v1274, %v1298
  %v1305 = vsub.f32 1.0, %v1299
  %v1306 = vsub.f32 1.0, %v1300
  %v1307 = vsub.f32 1.0, %v1301
  %v1308 = vsub.f32 1.0, %v1302
  %v1309 = vsub.f32 1.0, %v1303
  %v1310 = vsub.f32 1.0, %v1304
  %vm1311 = vcmp.ge.f32.partialorder %v1185, 0.0
  %vm1312 = vcmp.ge.f32.partialorder %v1186, 0.0
  %vm1313 = vcmp.ge.f32.partialorder %v1187, 0.0
  %vm1314 = vcmp.ge.f32.partialorder %v1188, 0.0
  %vm1315 = vcmp.ge.f32.partialorder %v1189, 0.0
  %vm1316 = vcmp.ge.f32.partialorder %v1190, 0.0
  %v1317 = vsub.f32 0.0, %v1305
  %v1318 = vsub.f32 0.0, %v1306
  %v1319 = vsub.f32 0.0, %v1307
  %v1320 = vsub.f32 0.0, %v1308
  %v1321 = vsub.f32 0.0, %v1309
  %v1322 = vsub.f32 0.0, %v1310
  %v1323 = vsel %vm1311, %v1305, %v1317
  %v1324 = vsel %vm1312, %v1306, %v1318
  %v1325 = vsel %vm1313, %v1307, %v1319
  %v1326 = vsel %vm1314, %v1308, %v1320
  %v1327 = vsel %vm1315, %v1309, %v1321
  %v1328 = vsel %vm1316, %v1310, %v1322
  %v1329 = vadd.f32 %v1323, 1.0
  %v1330 = vadd.f32 %v1324, 1.0
  %v1331 = vadd.f32 %v1325, 1.0
  %v1332 = vadd.f32 %v1326, 1.0
  %v1333 = vadd.f32 %v1327, 1.0
  %v1334 = vadd.f32 %v1328, 1.0
  %v1335 = vmul.f32 %v1179, %v1329
  %v1336 = vmul.f32 %v1180, %v1330
  %v1337 = vmul.f32 %v1181, %v1331
  %v1338 = vmul.f32 %v1182, %v1332
  %v1339 = vmul.f32 %v1183, %v1333
  %v1340 = vmul.f32 %v1184, %v1334
  %v1341 = vlaneseq
  %v1342 = vshrl.u32 %v1341, 7
  %v1343 = vsub.s32 3, %v1342
  %v1344 = vrot.slane %v382, %v1343
  %1345 = vmatprep.subr.mxu0 0.0
  %1346 = vmatpush1.msra.mxu0 %v381
  %1347 = vmatprep.subr.mxu0 0.0
  %1348 = vmatpush1.msra.mxu0 %v380
  %1349 = vmatprep.subr.mxu0 0.0
  %1350 = vmatpush1.msra.mxu0 %v379
  %1351 = vmatprep.subr.mxu0 0.0
  %1352 = vmatpush1.msra.mxu0 %v378
  %1353 = vmatprep.subr.mxu0 0.0
  %1354 = vmatpush1.msra.mxu0 %v377
  %1355 = vmatprep.subr.mxu0 0.0
  %1356 = vmatpush1.msra.mxu0 %v376
  %1357 = vmatprep.subr.mxu0 0.0
  %1358 = vmatpush1.msra.mxu0 %v375
  %1359 = vmatprep.subr.mxu0 0.0
  %1360 = vmatpush1.msra.mxu0 %v374
  %1361 = vmatprep.subr.mxu0 0.0
  %1362 = vmatpush1.msra.mxu0 %v373
  %1363 = vmatprep.subr.mxu0 0.0
  %1364 = vmatpush1.msra.mxu0 %v372
  %1365 = vmatprep.subr.mxu0 0.0
  %1366 = vmatpush1.msra.mxu0 %v371
  %1367 = vmatprep.subr.mxu0 0.0
  %1368 = vmatpush1.msra.mxu0 %v370
  %1369 = vmatprep.subr.mxu0 0.0
  %1370 = vmatpush1.msra.mxu0 %v369
  %1371 = vmatprep.subr.mxu0 0.0
  %1372 = vmatpush1.msra.mxu0 %v368
  %1373 = vmatprep.subr.mxu0 0.0
  %1374 = vmatpush1.msra.mxu0 %v367
  %1375 = vmatprep.subr.mxu0 0.0
  %1376 = vmatpush1.msra.mxu0 %v366
  %1377 = vmatprep.subr.mxu0 0.0
  %1378 = vmatpush2.msra.mxu0 0.0
  %1379 = vmatprep.subr.mxu0 0.0
  %1380 = vmatpush2.msra.mxu0 0.0
  %1381 = vmatprep.subr.mxu0 0.0
  %1382 = vmatpush2.msra.mxu0 0.0
  %1383 = vmatprep.subr.mxu0 0.0
  %1384 = vmatpush2.msra.mxu0 0.0
  %1385 = vmatprep.subr.mxu0 0.0
  %1386 = vmatpush2.msra.mxu0 0.0
  %1387 = vmatprep.subr.mxu0 0.0
  %1388 = vmatpush2.msra.mxu0 0.0
  %1389 = vmatprep.subr.mxu0 0.0
  %1390 = vmatpush2.msra.mxu0 0.0
  %1391 = vmatprep.subr.mxu0 0.0
  %1392 = vmatpush2.msra.mxu0 0.0
  %1393 = vmatprep.subr.mxu0 0.0
  %1394 = vmatpush2.msra.mxu0 0.0
  %1395 = vmatprep.subr.mxu0 0.0
  %1396 = vmatpush2.msra.mxu0 0.0
  %1397 = vmatprep.subr.mxu0 0.0
  %1398 = vmatpush2.msra.mxu0 0.0
  %1399 = vmatprep.subr.mxu0 0.0
  %1400 = vmatpush2.msra.mxu0 0.0
  %1401 = vmatprep.subr.mxu0 0.0
  %1402 = vmatpush2.msra.mxu0 0.0
  %1403 = vmatprep.subr.mxu0 0.0
  %1404 = vmatpush2.msra.mxu0 0.0
  %1405 = vmatprep.subr.mxu0 0.0
  %1406 = vmatpush2.msra.mxu0 0.0
  %1407 = vmatprep.subr.mxu0 0.0
  %1408 = vmatpush2.msra.mxu0 0.0
  %1409 = vmatprep.mubr.f32.mxu0 0.0
  %1410 = vmatmul.mubr.f32.gmra.mxu0 %v1335
  %v1411 = vpop.f32.mrf.mxu0
  %v1412 = vadd.f32 %v1344, %v1411
  %v1413 = vpop.f32.mrf.mxu0
  %1414 = vmatprep.mubr.f32.mxu0 0.0
  %1415 = vmatmul.mubr.f32.gmra.mxu0 %v1336
  %v1416 = vpop.f32.mrf.mxu0
  %v1417 = vadd.f32 %v1344, %v1416
  %v1418 = vpop.f32.mrf.mxu0
  %1419 = vmatprep.mubr.f32.mxu0 0.0
  %1420 = vmatmul.mubr.f32.gmra.mxu0 %v1337
  %v1421 = vpop.f32.mrf.mxu0
  %v1422 = vadd.f32 %v1344, %v1421
  %v1423 = vpop.f32.mrf.mxu0
  %1424 = vmatprep.mubr.f32.mxu0 0.0
  %1425 = vmatmul.mubr.f32.gmra.mxu0 %v1338
  %v1426 = vpop.f32.mrf.mxu0
  %v1427 = vadd.f32 %v1344, %v1426
  %v1428 = vpop.f32.mrf.mxu0
  %1429 = vmatprep.mubr.f32.mxu0 0.0
  %1430 = vmatmul.mubr.f32.gmra.mxu0 %v1339
  %v1431 = vpop.f32.mrf.mxu0
  %v1432 = vadd.f32 %v1344, %v1431
  %v1433 = vpop.f32.mrf.mxu0
  %1434 = vmatprep.mubr.f32.mxu0 0.0
  %1435 = vmatmul.mubr.f32.gmra.mxu0 %v1340
  %v1436 = vpop.f32.mrf.mxu0
  %v1437 = vadd.f32 %v1344, %v1436
  %v1438 = vpop.f32.mrf.mxu0
  %1439 = vdwg.mxu0
  %v1440 = vadd.f32 %v1056, %v1412
  %v1441 = vadd.f32 %v1057, %v1417
  %v1442 = vadd.f32 %v1058, %v1422
  %v1443 = vadd.f32 %v1059, %v1427
  %v1444 = vadd.f32 %v1060, %v1432
  %v1445 = vadd.f32 %v1061, %v1437
  %v1446 = vsel %vm248, %v1440, 0.0
  %1447 = vadd.xlane.f32.xlu0 %v1446
  %v1448 = vpop.xlane.xlu0 %1447
  %v1449 = vsel %vm248, %v1441, 0.0
  %1450 = vadd.xlane.f32.xlu0 %v1449
  %v1451 = vpop.xlane.xlu0 %1450
  %v1452 = vsel %vm248, %v1442, 0.0
  %1453 = vadd.xlane.f32.xlu0 %v1452
  %v1454 = vpop.xlane.xlu0 %1453
  %v1455 = vsel %vm248, %v1443, 0.0
  %1456 = vadd.xlane.f32.xlu0 %v1455
  %v1457 = vpop.xlane.xlu0 %1456
  %v1458 = vsel %vm248, %v1444, 0.0
  %1459 = vadd.xlane.f32.xlu0 %v1458
  %v1460 = vpop.xlane.xlu0 %1459
  %v1461 = vsel %vm248, %v1445, 0.0
  %1462 = vadd.xlane.f32.xlu0 %v1461
  %v1463 = vpop.xlane.xlu0 %1462
  %v1464 = vmul.f32 %v1448, %v267
  %v1465 = vmul.f32 %v1451, %v267
  %v1466 = vmul.f32 %v1454, %v267
  %v1467 = vmul.f32 %v1457, %v267
  %v1468 = vmul.f32 %v1460, %v267
  %v1469 = vmul.f32 %v1463, %v267
  %v1470 = vsub.f32 %v1440, %v1464
  %v1471 = vsub.f32 %v1441, %v1465
  %v1472 = vsub.f32 %v1442, %v1466
  %v1473 = vsub.f32 %v1443, %v1467
  %v1474 = vsub.f32 %v1444, %v1468
  %v1475 = vsub.f32 %v1445, %v1469
  %v1476 = vmul.f32 %v1470, %v1470
  %v1477 = vmul.f32 %v1471, %v1471
  %v1478 = vmul.f32 %v1472, %v1472
  %v1479 = vmul.f32 %v1473, %v1473
  %v1480 = vmul.f32 %v1474, %v1474
  %v1481 = vmul.f32 %v1475, %v1475
  %v1482 = vsel %vm248, %v1476, 0.0
  %1483 = vadd.xlane.f32.xlu0 %v1482
  %v1484 = vpop.xlane.xlu0 %1483
  %v1485 = vsel %vm248, %v1477, 0.0
  %1486 = vadd.xlane.f32.xlu0 %v1485
  %v1487 = vpop.xlane.xlu0 %1486
  %v1488 = vsel %vm248, %v1478, 0.0
  %1489 = vadd.xlane.f32.xlu0 %v1488
  %v1490 = vpop.xlane.xlu0 %1489
  %v1491 = vsel %vm248, %v1479, 0.0
  %1492 = vadd.xlane.f32.xlu0 %v1491
  %v1493 = vpop.xlane.xlu0 %1492
  %v1494 = vsel %vm248, %v1480, 0.0
  %1495 = vadd.xlane.f32.xlu0 %v1494
  %v1496 = vpop.xlane.xlu0 %1495
  %v1497 = vsel %vm248, %v1481, 0.0
  %1498 = vadd.xlane.f32.xlu0 %v1497
  %v1499 = vpop.xlane.xlu0 %1498
  %v1500 = vmul.f32 %v1484, %v267
  %v1501 = vmul.f32 %v1487, %v267
  %v1502 = vmul.f32 %v1490, %v267
  %v1503 = vmul.f32 %v1493, %v267
  %v1504 = vmul.f32 %v1496, %v267
  %v1505 = vmul.f32 %v1499, %v267
  %v1506 = vadd.f32 %v1500, 1e-05
  %v1507 = vadd.f32 %v1501, 1e-05
  %v1508 = vadd.f32 %v1502, 1e-05
  %v1509 = vadd.f32 %v1503, 1e-05
  %v1510 = vadd.f32 %v1504, 1e-05
  %v1511 = vadd.f32 %v1505, 1e-05
  %v1512 = vrsqrt.pop %v1506
  %v1513 = vrsqrt.pop %v1507
  %v1514 = vrsqrt.pop %v1508
  %v1515 = vrsqrt.pop %v1509
  %v1516 = vrsqrt.pop %v1510
  %v1517 = vrsqrt.pop %v1511
  %v1518 = vmul.f32 %v1470, %v1512
  %v1519 = vmul.f32 %v1471, %v1513
  %v1520 = vmul.f32 %v1472, %v1514
  %v1521 = vmul.f32 %v1473, %v1515
  %v1522 = vmul.f32 %v1474, %v1516
  %v1523 = vmul.f32 %v1475, %v1517
  %v1524 = vlaneseq
  %v1525 = vshrl.u32 %v1524, 7
  %v1526 = vsub.s32 6, %v1525
  %v1527 = vrot.slane %v382, %v1526
  %v1528 = vmul.f32 %v1518, %v1527
  %v1529 = vmul.f32 %v1519, %v1527
  %v1530 = vmul.f32 %v1520, %v1527
  %v1531 = vmul.f32 %v1521, %v1527
  %v1532 = vmul.f32 %v1522, %v1527
  %v1533 = vmul.f32 %v1523, %v1527
  %v1534 = vlaneseq
  %v1535 = vshrl.u32 %v1534, 7
  %v1536 = vsub.s32 7, %v1535
  %v1537 = vrot.slane %v382, %v1536
  %v1538 = vadd.f32 %v1528, %v1537
  %v1539 = vadd.f32 %v1529, %v1537
  %v1540 = vadd.f32 %v1530, %v1537
  %v1541 = vadd.f32 %v1531, %v1537
  %v1542 = vadd.f32 %v1532, %v1537
  %v1543 = vadd.f32 %v1533, %v1537
  %s1544 = scalar_lea.vmem %s5, 96
  %v1545 = vld [vmem:[%s1544] sm:$0xff]
  %v1546 = vld [vmem:[%s1544 + $0x8] sm:$0xff]
  %v1547 = vld [vmem:[%s1544 + $0x10] sm:$0xff]
  %v1548 = vld [vmem:[%s1544 + $0x18] sm:$0xff]
  %v1549 = vld [vmem:[%s1544 + $0x20] sm:$0xff]
  %v1550 = vld [vmem:[%s1544 + $0x28] sm:$0xff]
  %v1551 = vld [vmem:[%s1544 + $0x30] sm:$0xff]
  %v1552 = vld [vmem:[%s1544 + $0x38] sm:$0xff]
  %v1553 = vld [vmem:[%s1544 + $0x40] sm:$0xff]
  %v1554 = vld [vmem:[%s1544 + $0x48] sm:$0xff]
  %v1555 = vld [vmem:[%s1544 + $0x50] sm:$0xff]
  %v1556 = vld [vmem:[%s1544 + $0x58] sm:$0xff]
  %s1557 = scalar_lea.vmem %s6, 128
  %v1558 = vld [vmem:[%s1557] sm:$0xff]
  %v1559 = vld [vmem:[%s1557 + $0x8] sm:$0xff]
  %v1560 = vld [vmem:[%s1557 + $0x10] sm:$0xff]
  %v1561 = vld [vmem:[%s1557 + $0x18] sm:$0xff]
  %v1562 = vld [vmem:[%s1557 + $0x20] sm:$0xff]
  %v1563 = vld [vmem:[%s1557 + $0x28] sm:$0xff]
  %v1564 = vld [vmem:[%s1557 + $0x30] sm:$0xff]
  %v1565 = vld [vmem:[%s1557 + $0x38] sm:$0xff]
  %v1566 = vld [vmem:[%s1557 + $0x40] sm:$0xff]
  %v1567 = vld [vmem:[%s1557 + $0x48] sm:$0xff]
  %v1568 = vld [vmem:[%s1557 + $0x50] sm:$0xff]
  %v1569 = vld [vmem:[%s1557 + $0x58] sm:$0xff]
  %v1570 = vld [vmem:[%s1557 + $0x60] sm:$0xff]
  %v1571 = vld [vmem:[%s1557 + $0x68] sm:$0xff]
  %v1572 = vld [vmem:[%s1557 + $0x70] sm:$0xff]
  %v1573 = vld [vmem:[%s1557 + $0x78] sm:$0xff]
  %s1574 = scalar_lea.vmem %s8, 8
  %v1575 = vld [vmem:[%s1574] sm:$0xff]
  %v1576 = vlaneseq
  %v1577 = vshrl.u32 %v1576, 7
  %v1578 = vsub.s32 0, %v1577
  %v1579 = vrot.slane %v1575, %v1578
  %v1581 = vsel %vm248, %v1538, 0
  %v1584 = vsel %vm248, %v1539, 0
  %v1587 = vsel %vm248, %v1540, 0
  %v1590 = vsel %vm248, %v1541, 0
  %v1593 = vsel %vm248, %v1542, 0
  %v1596 = vsel %vm248, %v1543, 0
  %1598 = vmatprep.subr.mxu0 0.0
  %1599 = vmatpush1.msra.mxu0 0.0
  %1600 = vmatprep.subr.mxu0 0.0
  %1601 = vmatpush1.msra.mxu0 0.0
  %1602 = vmatprep.subr.mxu0 0.0
  %1603 = vmatpush1.msra.mxu0 0.0
  %1604 = vmatprep.subr.mxu0 0.0
  %1605 = vmatpush1.msra.mxu0 0.0
  %1606 = vmatprep.subr.mxu0 0.0
  %1607 = vmatpush1.msra.mxu0 0.0
  %1608 = vmatprep.subr.mxu0 0.0
  %1609 = vmatpush1.msra.mxu0 0.0
  %1610 = vmatprep.subr.mxu0 0.0
  %1611 = vmatpush1.msra.mxu0 0.0
  %1612 = vmatprep.subr.mxu0 0.0
  %1613 = vmatpush1.msra.mxu0 0.0
  %1614 = vmatprep.subr.mxu0 0.0
  %1615 = vmatpush1.msra.mxu0 0.0
  %1616 = vmatprep.subr.mxu0 0.0
  %1617 = vmatpush1.msra.mxu0 0.0
  %1618 = vmatprep.subr.mxu0 0.0
  %1619 = vmatpush1.msra.mxu0 0.0
  %1620 = vmatprep.subr.mxu0 0.0
  %1621 = vmatpush1.msra.mxu0 0.0
  %1622 = vmatprep.subr.mxu0 0.0
  %1623 = vmatpush1.msra.mxu0 %v1554
  %1624 = vmatprep.subr.mxu0 0.0
  %1625 = vmatpush1.msra.mxu0 %v1551
  %1626 = vmatprep.subr.mxu0 0.0
  %1627 = vmatpush1.msra.mxu0 %v1548
  %1628 = vmatprep.subr.mxu0 0.0
  %1629 = vmatpush1.msra.mxu0 %v1545
  %1630 = vmatprep.subr.mxu0 0.0
  %1631 = vmatpush2.msra.mxu0 0.0
  %1632 = vmatprep.subr.mxu0 0.0
  %1633 = vmatpush2.msra.mxu0 0.0
  %1634 = vmatprep.subr.mxu0 0.0
  %1635 = vmatpush2.msra.mxu0 0.0
  %1636 = vmatprep.subr.mxu0 0.0
  %1637 = vmatpush2.msra.mxu0 0.0
  %1638 = vmatprep.subr.mxu0 0.0
  %1639 = vmatpush2.msra.mxu0 0.0
  %1640 = vmatprep.subr.mxu0 0.0
  %1641 = vmatpush2.msra.mxu0 0.0
  %1642 = vmatprep.subr.mxu0 0.0
  %1643 = vmatpush2.msra.mxu0 0.0
  %1644 = vmatprep.subr.mxu0 0.0
  %1645 = vmatpush2.msra.mxu0 0.0
  %1646 = vmatprep.subr.mxu0 0.0
  %1647 = vmatpush2.msra.mxu0 0.0
  %1648 = vmatprep.subr.mxu0 0.0
  %1649 = vmatpush2.msra.mxu0 0.0
  %1650 = vmatprep.subr.mxu0 0.0
  %1651 = vmatpush2.msra.mxu0 0.0
  %1652 = vmatprep.subr.mxu0 0.0
  %1653 = vmatpush2.msra.mxu0 0.0
  %1654 = vmatprep.subr.mxu0 0.0
  %1655 = vmatpush2.msra.mxu0 0.0
  %1656 = vmatprep.subr.mxu0 0.0
  %1657 = vmatpush2.msra.mxu0 0.0
  %1658 = vmatprep.subr.mxu0 0.0
  %1659 = vmatpush2.msra.mxu0 0.0
  %1660 = vmatprep.subr.mxu0 0.0
  %1661 = vmatpush2.msra.mxu0 0.0
  %1662 = vmatprep.mubr.f32.mxu0 0.0
  %1663 = vmatmul.mubr.f32.gmra.mxu0 %v1581
  %v1664 = vpop.f32.mrf.mxu0
  %v1665 = vadd.f32 %v1579, %v1664
  %v1666 = vpop.f32.mrf.mxu0
  %1667 = vmatprep.mubr.f32.mxu0 0.0
  %1668 = vmatmul.mubr.f32.gmra.mxu0 %v1584
  %v1669 = vpop.f32.mrf.mxu0
  %v1670 = vadd.f32 %v1579, %v1669
  %v1671 = vpop.f32.mrf.mxu0
  %1672 = vmatprep.mubr.f32.mxu0 0.0
  %1673 = vmatmul.mubr.f32.gmra.mxu0 %v1587
  %v1674 = vpop.f32.mrf.mxu0
  %v1675 = vadd.f32 %v1579, %v1674
  %v1676 = vpop.f32.mrf.mxu0
  %1677 = vmatprep.mubr.f32.mxu0 0.0
  %1678 = vmatmul.mubr.f32.gmra.mxu0 %v1590
  %v1679 = vpop.f32.mrf.mxu0
  %v1680 = vadd.f32 %v1579, %v1679
  %v1681 = vpop.f32.mrf.mxu0
  %1682 = vmatprep.mubr.f32.mxu0 0.0
  %1683 = vmatmul.mubr.f32.gmra.mxu0 %v1593
  %v1684 = vpop.f32.mrf.mxu0
  %v1685 = vadd.f32 %v1579, %v1684
  %v1686 = vpop.f32.mrf.mxu0
  %1687 = vmatprep.mubr.f32.mxu0 0.0
  %1688 = vmatmul.mubr.f32.gmra.mxu0 %v1596
  %v1689 = vpop.f32.mrf.mxu0
  %v1690 = vadd.f32 %v1579, %v1689
  %v1691 = vpop.f32.mrf.mxu0
  %1692 = vdwg.mxu0
  %1699 = vrot.lane.b32.xlu0 %v1665, 96
  %v1700 = vpop.permute.xlu0 %1699
  %1701 = vrot.lane.b32.xlu0 %v1670, 96
  %v1702 = vpop.permute.xlu0 %1701
  %1703 = vrot.lane.b32.xlu0 %v1675, 96
  %v1704 = vpop.permute.xlu0 %1703
  %1705 = vrot.lane.b32.xlu0 %v1680, 96
  %v1706 = vpop.permute.xlu0 %1705
  %1707 = vrot.lane.b32.xlu0 %v1685, 96
  %v1708 = vpop.permute.xlu0 %1707
  %1709 = vrot.lane.b32.xlu0 %v1690, 96
  %v1710 = vpop.permute.xlu0 %1709
  %v1711 = vsel %vm248, %v1665, 0
  %v1713 = vsel %vm248, %v1670, 0
  %v1715 = vsel %vm248, %v1675, 0
  %v1717 = vsel %vm248, %v1680, 0
  %v1719 = vsel %vm248, %v1685, 0
  %v1721 = vsel %vm248, %v1690, 0
  %v1723 = vsel %vm248, %v1700, 0
  %v1725 = vsel %vm248, %v1702, 0
  %v1727 = vsel %vm248, %v1704, 0
  %v1729 = vsel %vm248, %v1706, 0
  %v1731 = vsel %vm248, %v1708, 0
  %v1733 = vsel %vm248, %v1710, 0
  %1735 = vmatprep.subr.mxu0 0.0
  %1736 = vmatpush1.xpose.msra.mxu0 0.0
  %1737 = vmatprep.subr.mxu0 0.0
  %1738 = vmatpush1.xpose.msra.mxu0 0.0
  %1739 = vmatprep.subr.mxu0 0.0
  %1740 = vmatpush1.xpose.msra.mxu0 0.0
  %1741 = vmatprep.subr.mxu0 0.0
  %1742 = vmatpush1.xpose.msra.mxu0 0.0
  %1743 = vmatprep.subr.mxu0 0.0
  %1744 = vmatpush1.xpose.msra.mxu0 0.0
  %1745 = vmatprep.subr.mxu0 0.0
  %1746 = vmatpush1.xpose.msra.mxu0 0.0
  %1747 = vmatprep.subr.mxu0 0.0
  %1748 = vmatpush1.xpose.msra.mxu0 0.0
  %1749 = vmatprep.subr.mxu0 0.0
  %1750 = vmatpush1.xpose.msra.mxu0 0.0
  %1751 = vmatprep.subr.mxu0 0.0
  %1752 = vmatpush1.xpose.msra.mxu0 0.0
  %1753 = vmatprep.subr.mxu0 0.0
  %1754 = vmatpush1.xpose.msra.mxu0 0.0
  %1755 = vmatprep.subr.mxu0 0.0
  %1756 = vmatpush1.xpose.msra.mxu0 %v1733
  %1757 = vmatprep.subr.mxu0 0.0
  %1758 = vmatpush1.xpose.msra.mxu0 %v1731
  %1759 = vmatprep.subr.mxu0 0.0
  %1760 = vmatpush1.xpose.msra.mxu0 %v1729
  %1761 = vmatprep.subr.mxu0 0.0
  %1762 = vmatpush1.xpose.msra.mxu0 %v1727
  %1763 = vmatprep.subr.mxu0 0.0
  %1764 = vmatpush1.xpose.msra.mxu0 %v1725
  %1765 = vmatprep.subr.mxu0 0.0
  %1766 = vmatpush1.xpose.msra.mxu0 %v1723
  %1767 = vmatprep.subr.mxu0 0.0
  %1768 = vmatpush2.xpose.msra.mxu0 0.0
  %1769 = vmatprep.subr.mxu0 0.0
  %1770 = vmatpush2.xpose.msra.mxu0 0.0
  %1771 = vmatprep.subr.mxu0 0.0
  %1772 = vmatpush2.xpose.msra.mxu0 0.0
  %1773 = vmatprep.subr.mxu0 0.0
  %1774 = vmatpush2.xpose.msra.mxu0 0.0
  %1775 = vmatprep.subr.mxu0 0.0
  %1776 = vmatpush2.xpose.msra.mxu0 0.0
  %1777 = vmatprep.subr.mxu0 0.0
  %1778 = vmatpush2.xpose.msra.mxu0 0.0
  %1779 = vmatprep.subr.mxu0 0.0
  %1780 = vmatpush2.xpose.msra.mxu0 0.0
  %1781 = vmatprep.subr.mxu0 0.0
  %1782 = vmatpush2.xpose.msra.mxu0 0.0
  %1783 = vmatprep.subr.mxu0 0.0
  %1784 = vmatpush2.xpose.msra.mxu0 0.0
  %1785 = vmatprep.subr.mxu0 0.0
  %1786 = vmatpush2.xpose.msra.mxu0 0.0
  %1787 = vmatprep.subr.mxu0 0.0
  %1788 = vmatpush2.xpose.msra.mxu0 0.0
  %1789 = vmatprep.subr.mxu0 0.0
  %1790 = vmatpush2.xpose.msra.mxu0 0.0
  %1791 = vmatprep.subr.mxu0 0.0
  %1792 = vmatpush2.xpose.msra.mxu0 0.0
  %1793 = vmatprep.subr.mxu0 0.0
  %1794 = vmatpush2.xpose.msra.mxu0 0.0
  %1795 = vmatprep.subr.mxu0 0.0
  %1796 = vmatpush2.xpose.msra.mxu0 0.0
  %1797 = vmatprep.subr.mxu0 0.0
  %1798 = vmatpush2.xpose.msra.mxu0 0.0
  %1799 = vmatprep.mubr.f32.mxu0 0.0
  %1800 = vmatmul.mubr.f32.gmra.mxu0 %v1711
  %v1801 = vpop.f32.mrf.mxu0
  %v1802 = vadd.f32 %v348, %v1801
  %v1803 = vpop.f32.mrf.mxu0
  %1804 = vmatprep.mubr.f32.mxu0 0.0
  %1805 = vmatmul.mubr.f32.gmra.mxu0 %v1713
  %v1806 = vpop.f32.mrf.mxu0
  %v1807 = vadd.f32 %v349, %v1806
  %v1808 = vpop.f32.mrf.mxu0
  %1809 = vmatprep.mubr.f32.mxu0 0.0
  %1810 = vmatmul.mubr.f32.gmra.mxu0 %v1715
  %v1811 = vpop.f32.mrf.mxu0
  %v1812 = vadd.f32 %v350, %v1811
  %v1813 = vpop.f32.mrf.mxu0
  %1814 = vmatprep.mubr.f32.mxu0 0.0
  %1815 = vmatmul.mubr.f32.gmra.mxu0 %v1717
  %v1816 = vpop.f32.mrf.mxu0
  %v1817 = vadd.f32 %v351, %v1816
  %v1818 = vpop.f32.mrf.mxu0
  %1819 = vmatprep.mubr.f32.mxu0 0.0
  %1820 = vmatmul.mubr.f32.gmra.mxu0 %v1719
  %v1821 = vpop.f32.mrf.mxu0
  %v1822 = vadd.f32 %v352, %v1821
  %v1823 = vpop.f32.mrf.mxu0
  %1824 = vmatprep.mubr.f32.mxu0 0.0
  %1825 = vmatmul.mubr.f32.gmra.mxu0 %v1721
  %v1826 = vpop.f32.mrf.mxu0
  %v1827 = vadd.f32 %v353, %v1826
  %v1828 = vpop.f32.mrf.mxu0
  %1829 = vdwg.mxu0
  %v1830 = vsel %vm637, %v1802, -inf
  %1831 = vmax.xlane.f32.xlu0 %v1830
  %v1832 = vpop.xlane.xlu0 %1831
  %v1833 = vsel %vm637, %v1807, -inf
  %1834 = vmax.xlane.f32.xlu0 %v1833
  %v1835 = vpop.xlane.xlu0 %1834
  %v1836 = vsel %vm637, %v1812, -inf
  %1837 = vmax.xlane.f32.xlu0 %v1836
  %v1838 = vpop.xlane.xlu0 %1837
  %v1839 = vsel %vm637, %v1817, -inf
  %1840 = vmax.xlane.f32.xlu0 %v1839
  %v1841 = vpop.xlane.xlu0 %1840
  %v1842 = vsel %vm637, %v1822, -inf
  %1843 = vmax.xlane.f32.xlu0 %v1842
  %v1844 = vpop.xlane.xlu0 %1843
  %v1845 = vsel %vm637, %v1827, -inf
  %1846 = vmax.xlane.f32.xlu0 %v1845
  %v1847 = vpop.xlane.xlu0 %1846
  %v1848 = vsub.f32 %v1802, %v1832
  %v1849 = vsub.f32 %v1807, %v1835
  %v1850 = vsub.f32 %v1812, %v1838
  %v1851 = vsub.f32 %v1817, %v1841
  %v1852 = vsub.f32 %v1822, %v1844
  %v1853 = vsub.f32 %v1827, %v1847
  %v1854 = vmul.f32 %v1848, 1.442695
  %v1855 = vpow.pop %v1854
  %v1856 = vmul.f32 %v1849, 1.442695
  %v1857 = vpow.pop %v1856
  %v1858 = vmul.f32 %v1850, 1.442695
  %v1859 = vpow.pop %v1858
  %v1860 = vmul.f32 %v1851, 1.442695
  %v1861 = vpow.pop %v1860
  %v1862 = vmul.f32 %v1852, 1.442695
  %v1863 = vpow.pop %v1862
  %v1864 = vmul.f32 %v1853, 1.442695
  %v1865 = vpow.pop %v1864
  %v1866 = vsel %vm637, %v1855, 0.0
  %1867 = vadd.xlane.f32.xlu0 %v1866
  %v1868 = vpop.xlane.xlu0 %1867
  %v1869 = vsel %vm637, %v1857, 0.0
  %1870 = vadd.xlane.f32.xlu0 %v1869
  %v1871 = vpop.xlane.xlu0 %1870
  %v1872 = vsel %vm637, %v1859, 0.0
  %1873 = vadd.xlane.f32.xlu0 %v1872
  %v1874 = vpop.xlane.xlu0 %1873
  %v1875 = vsel %vm637, %v1861, 0.0
  %1876 = vadd.xlane.f32.xlu0 %v1875
  %v1877 = vpop.xlane.xlu0 %1876
  %v1878 = vsel %vm637, %v1863, 0.0
  %1879 = vadd.xlane.f32.xlu0 %v1878
  %v1880 = vpop.xlane.xlu0 %1879
  %v1881 = vsel %vm637, %v1865, 0.0
  %1882 = vadd.xlane.f32.xlu0 %v1881
  %v1883 = vpop.xlane.xlu0 %1882
  %1884 = vrot.lane.b32.xlu0 %v1665, 64
  %v1885 = vpop.permute.xlu0 %1884
  %1886 = vrot.lane.b32.xlu0 %v1670, 64
  %v1887 = vpop.permute.xlu0 %1886
  %1888 = vrot.lane.b32.xlu0 %v1675, 64
  %v1889 = vpop.permute.xlu0 %1888
  %1890 = vrot.lane.b32.xlu0 %v1680, 64
  %v1891 = vpop.permute.xlu0 %1890
  %1892 = vrot.lane.b32.xlu0 %v1685, 64
  %v1893 = vpop.permute.xlu0 %1892
  %1894 = vrot.lane.b32.xlu0 %v1690, 64
  %v1895 = vpop.permute.xlu0 %1894
  %v1903 = vsel %vm637, %v1855, 0
  %v1906 = vsel %vm637, %v1857, 0
  %v1909 = vsel %vm637, %v1859, 0
  %v1912 = vsel %vm637, %v1861, 0
  %v1915 = vsel %vm637, %v1863, 0
  %v1918 = vsel %vm637, %v1865, 0
  %1920 = vmatprep.subr.mxu0 0.0
  %1921 = vmatpush1.msra.mxu0 0.0
  %1922 = vmatprep.subr.mxu0 0.0
  %1923 = vmatpush1.msra.mxu0 0.0
  %1924 = vmatprep.subr.mxu0 0.0
  %1925 = vmatpush1.msra.mxu0 0.0
  %1926 = vmatprep.subr.mxu0 0.0
  %1927 = vmatpush1.msra.mxu0 0.0
  %1928 = vmatprep.subr.mxu0 0.0
  %1929 = vmatpush1.msra.mxu0 0.0
  %1930 = vmatprep.subr.mxu0 0.0
  %1931 = vmatpush1.msra.mxu0 0.0
  %1932 = vmatprep.subr.mxu0 0.0
  %1933 = vmatpush1.msra.mxu0 0.0
  %1934 = vmatprep.subr.mxu0 0.0
  %1935 = vmatpush1.msra.mxu0 0.0
  %1936 = vmatprep.subr.mxu0 0.0
  %1937 = vmatpush1.msra.mxu0 0.0
  %1938 = vmatprep.subr.mxu0 0.0
  %1939 = vmatpush1.msra.mxu0 0.0
  %1940 = vmatprep.subr.mxu0 0.0
  %1941 = vmatpush1.msra.mxu0 %v1895
  %1942 = vmatprep.subr.mxu0 0.0
  %1943 = vmatpush1.msra.mxu0 %v1893
  %1944 = vmatprep.subr.mxu0 0.0
  %1945 = vmatpush1.msra.mxu0 %v1891
  %1946 = vmatprep.subr.mxu0 0.0
  %1947 = vmatpush1.msra.mxu0 %v1889
  %1948 = vmatprep.subr.mxu0 0.0
  %1949 = vmatpush1.msra.mxu0 %v1887
  %1950 = vmatprep.subr.mxu0 0.0
  %1951 = vmatpush1.msra.mxu0 %v1885
  %1952 = vmatprep.subr.mxu0 0.0
  %1953 = vmatpush2.msra.mxu0 0.0
  %1954 = vmatprep.subr.mxu0 0.0
  %1955 = vmatpush2.msra.mxu0 0.0
  %1956 = vmatprep.subr.mxu0 0.0
  %1957 = vmatpush2.msra.mxu0 0.0
  %1958 = vmatprep.subr.mxu0 0.0
  %1959 = vmatpush2.msra.mxu0 0.0
  %1960 = vmatprep.subr.mxu0 0.0
  %1961 = vmatpush2.msra.mxu0 0.0
  %1962 = vmatprep.subr.mxu0 0.0
  %1963 = vmatpush2.msra.mxu0 0.0
  %1964 = vmatprep.subr.mxu0 0.0
  %1965 = vmatpush2.msra.mxu0 0.0
  %1966 = vmatprep.subr.mxu0 0.0
  %1967 = vmatpush2.msra.mxu0 0.0
  %1968 = vmatprep.subr.mxu0 0.0
  %1969 = vmatpush2.msra.mxu0 0.0
  %1970 = vmatprep.subr.mxu0 0.0
  %1971 = vmatpush2.msra.mxu0 0.0
  %1972 = vmatprep.subr.mxu0 0.0
  %1973 = vmatpush2.msra.mxu0 0.0
  %1974 = vmatprep.subr.mxu0 0.0
  %1975 = vmatpush2.msra.mxu0 0.0
  %1976 = vmatprep.subr.mxu0 0.0
  %1977 = vmatpush2.msra.mxu0 0.0
  %1978 = vmatprep.subr.mxu0 0.0
  %1979 = vmatpush2.msra.mxu0 0.0
  %1980 = vmatprep.subr.mxu0 0.0
  %1981 = vmatpush2.msra.mxu0 0.0
  %1982 = vmatprep.subr.mxu0 0.0
  %1983 = vmatpush2.msra.mxu0 0.0
  %1984 = vmatprep.mubr.f32.mxu0 0.0
  %1985 = vmatmul.mubr.f32.gmra.mxu0 %v1903
  %v1986 = vpop.f32.mrf.mxu0
  %v1987 = vadd.f32 0.0, %v1986
  %v1988 = vpop.f32.mrf.mxu0
  %1989 = vmatprep.mubr.f32.mxu0 0.0
  %1990 = vmatmul.mubr.f32.gmra.mxu0 %v1906
  %v1991 = vpop.f32.mrf.mxu0
  %v1992 = vadd.f32 0.0, %v1991
  %v1993 = vpop.f32.mrf.mxu0
  %1994 = vmatprep.mubr.f32.mxu0 0.0
  %1995 = vmatmul.mubr.f32.gmra.mxu0 %v1909
  %v1996 = vpop.f32.mrf.mxu0
  %v1997 = vadd.f32 0.0, %v1996
  %v1998 = vpop.f32.mrf.mxu0
  %1999 = vmatprep.mubr.f32.mxu0 0.0
  %2000 = vmatmul.mubr.f32.gmra.mxu0 %v1912
  %v2001 = vpop.f32.mrf.mxu0
  %v2002 = vadd.f32 0.0, %v2001
  %v2003 = vpop.f32.mrf.mxu0
  %2004 = vmatprep.mubr.f32.mxu0 0.0
  %2005 = vmatmul.mubr.f32.gmra.mxu0 %v1915
  %v2006 = vpop.f32.mrf.mxu0
  %v2007 = vadd.f32 0.0, %v2006
  %v2008 = vpop.f32.mrf.mxu0
  %2009 = vmatprep.mubr.f32.mxu0 0.0
  %2010 = vmatmul.mubr.f32.gmra.mxu0 %v1918
  %v2011 = vpop.f32.mrf.mxu0
  %v2012 = vadd.f32 0.0, %v2011
  %v2013 = vpop.f32.mrf.mxu0
  %2014 = vdwg.mxu0
  %v2015 = vrcp.pop %v1868
  %v2016 = vrcp.pop %v1871
  %v2017 = vrcp.pop %v1874
  %v2018 = vrcp.pop %v1877
  %v2019 = vrcp.pop %v1880
  %v2020 = vrcp.pop %v1883
  %v2021 = vmul.f32 %v1987, %v2015
  %v2022 = vmul.f32 %v1992, %v2016
  %v2023 = vmul.f32 %v1997, %v2017
  %v2024 = vmul.f32 %v2002, %v2018
  %v2025 = vmul.f32 %v2007, %v2019
  %v2026 = vmul.f32 %v2012, %v2020
  %v2028 = vsel %vm248, %v2021, 0
  %v2031 = vsel %vm248, %v2022, 0
  %v2034 = vsel %vm248, %v2023, 0
  %v2037 = vsel %vm248, %v2024, 0
  %v2040 = vsel %vm248, %v2025, 0
  %v2043 = vsel %vm248, %v2026, 0
  %2045 = vmatprep.subr.mxu0 0.0
  %2046 = vmatpush1.msra.mxu0 0.0
  %2047 = vmatprep.subr.mxu0 0.0
  %2048 = vmatpush1.msra.mxu0 0.0
  %2049 = vmatprep.subr.mxu0 0.0
  %2050 = vmatpush1.msra.mxu0 0.0
  %2051 = vmatprep.subr.mxu0 0.0
  %2052 = vmatpush1.msra.mxu0 0.0
  %2053 = vmatprep.subr.mxu0 0.0
  %2054 = vmatpush1.msra.mxu0 0.0
  %2055 = vmatprep.subr.mxu0 0.0
  %2056 = vmatpush1.msra.mxu0 0.0
  %2057 = vmatprep.subr.mxu0 0.0
  %2058 = vmatpush1.msra.mxu0 0.0
  %2059 = vmatprep.subr.mxu0 0.0
  %2060 = vmatpush1.msra.mxu0 0.0
  %2061 = vmatprep.subr.mxu0 0.0
  %2062 = vmatpush1.msra.mxu0 0.0
  %2063 = vmatprep.subr.mxu0 0.0
  %2064 = vmatpush1.msra.mxu0 0.0
  %2065 = vmatprep.subr.mxu0 0.0
  %2066 = vmatpush1.msra.mxu0 0.0
  %2067 = vmatprep.subr.mxu0 0.0
  %2068 = vmatpush1.msra.mxu0 0.0
  %2069 = vmatprep.subr.mxu0 0.0
  %2070 = vmatpush1.msra.mxu0 %v1555
  %2071 = vmatprep.subr.mxu0 0.0
  %2072 = vmatpush1.msra.mxu0 %v1552
  %2073 = vmatprep.subr.mxu0 0.0
  %2074 = vmatpush1.msra.mxu0 %v1549
  %2075 = vmatprep.subr.mxu0 0.0
  %2076 = vmatpush1.msra.mxu0 %v1546
  %2077 = vmatprep.subr.mxu0 0.0
  %2078 = vmatpush2.msra.mxu0 0.0
  %2079 = vmatprep.subr.mxu0 0.0
  %2080 = vmatpush2.msra.mxu0 0.0
  %2081 = vmatprep.subr.mxu0 0.0
  %2082 = vmatpush2.msra.mxu0 0.0
  %2083 = vmatprep.subr.mxu0 0.0
  %2084 = vmatpush2.msra.mxu0 0.0
  %2085 = vmatprep.subr.mxu0 0.0
  %2086 = vmatpush2.msra.mxu0 0.0
  %2087 = vmatprep.subr.mxu0 0.0
  %2088 = vmatpush2.msra.mxu0 0.0
  %2089 = vmatprep.subr.mxu0 0.0
  %2090 = vmatpush2.msra.mxu0 0.0
  %2091 = vmatprep.subr.mxu0 0.0
  %2092 = vmatpush2.msra.mxu0 0.0
  %2093 = vmatprep.subr.mxu0 0.0
  %2094 = vmatpush2.msra.mxu0 0.0
  %2095 = vmatprep.subr.mxu0 0.0
  %2096 = vmatpush2.msra.mxu0 0.0
  %2097 = vmatprep.subr.mxu0 0.0
  %2098 = vmatpush2.msra.mxu0 0.0
  %2099 = vmatprep.subr.mxu0 0.0
  %2100 = vmatpush2.msra.mxu0 0.0
  %2101 = vmatprep.subr.mxu0 0.0
  %2102 = vmatpush2.msra.mxu0 0.0
  %2103 = vmatprep.subr.mxu0 0.0
  %2104 = vmatpush2.msra.mxu0 0.0
  %2105 = vmatprep.subr.mxu0 0.0
  %2106 = vmatpush2.msra.mxu0 0.0
  %2107 = vmatprep.subr.mxu0 0.0
  %2108 = vmatpush2.msra.mxu0 0.0
  %2109 = vmatprep.mubr.f32.mxu0 0.0
  %2110 = vmatmul.mubr.f32.gmra.mxu0 %v2028
  %v2111 = vpop.f32.mrf.mxu0
  %v2112 = vadd.f32 0.0, %v2111
  %v2113 = vpop.f32.mrf.mxu0
  %2114 = vmatprep.mubr.f32.mxu0 0.0
  %2115 = vmatmul.mubr.f32.gmra.mxu0 %v2031
  %v2116 = vpop.f32.mrf.mxu0
  %v2117 = vadd.f32 0.0, %v2116
  %v2118 = vpop.f32.mrf.mxu0
  %2119 = vmatprep.mubr.f32.mxu0 0.0
  %2120 = vmatmul.mubr.f32.gmra.mxu0 %v2034
  %v2121 = vpop.f32.mrf.mxu0
  %v2122 = vadd.f32 0.0, %v2121
  %v2123 = vpop.f32.mrf.mxu0
  %2124 = vmatprep.mubr.f32.mxu0 0.0
  %2125 = vmatmul.mubr.f32.gmra.mxu0 %v2037
  %v2126 = vpop.f32.mrf.mxu0
  %v2127 = vadd.f32 0.0, %v2126
  %v2128 = vpop.f32.mrf.mxu0
  %2129 = vmatprep.mubr.f32.mxu0 0.0
  %2130 = vmatmul.mubr.f32.gmra.mxu0 %v2040
  %v2131 = vpop.f32.mrf.mxu0
  %v2132 = vadd.f32 0.0, %v2131
  %v2133 = vpop.f32.mrf.mxu0
  %2134 = vmatprep.mubr.f32.mxu0 0.0
  %2135 = vmatmul.mubr.f32.gmra.mxu0 %v2043
  %v2136 = vpop.f32.mrf.mxu0
  %v2137 = vadd.f32 0.0, %v2136
  %v2138 = vpop.f32.mrf.mxu0
  %2139 = vdwg.mxu0
  %v2140 = vlaneseq
  %v2141 = vshrl.u32 %v2140, 7
  %v2142 = vsub.s32 1, %v2141
  %v2143 = vrot.slane %v1575, %v2142
  %v2144 = vadd.f32 %v2112, %v2143
  %v2145 = vadd.f32 %v2117, %v2143
  %v2146 = vadd.f32 %v2122, %v2143
  %v2147 = vadd.f32 %v2127, %v2143
  %v2148 = vadd.f32 %v2132, %v2143
  %v2149 = vadd.f32 %v2137, %v2143
  %v2150 = vadd.f32 %v1538, %v2144
  %v2151 = vadd.f32 %v1539, %v2145
  %v2152 = vadd.f32 %v1540, %v2146
  %v2153 = vadd.f32 %v1541, %v2147
  %v2154 = vadd.f32 %v1542, %v2148
  %v2155 = vadd.f32 %v1543, %v2149
  %v2156 = vsel %vm248, %v2150, 0.0
  %2157 = vadd.xlane.f32.xlu0 %v2156
  %v2158 = vpop.xlane.xlu0 %2157
  %v2159 = vsel %vm248, %v2151, 0.0
  %2160 = vadd.xlane.f32.xlu0 %v2159
  %v2161 = vpop.xlane.xlu0 %2160
  %v2162 = vsel %vm248, %v2152, 0.0
  %2163 = vadd.xlane.f32.xlu0 %v2162
  %v2164 = vpop.xlane.xlu0 %2163
  %v2165 = vsel %vm248, %v2153, 0.0
  %2166 = vadd.xlane.f32.xlu0 %v2165
  %v2167 = vpop.xlane.xlu0 %2166
  %v2168 = vsel %vm248, %v2154, 0.0
  %2169 = vadd.xlane.f32.xlu0 %v2168
  %v2170 = vpop.xlane.xlu0 %2169
  %v2171 = vsel %vm248, %v2155, 0.0
  %2172 = vadd.xlane.f32.xlu0 %v2171
  %v2173 = vpop.xlane.xlu0 %2172
  %v2174 = vmul.f32 %v2158, %v267
  %v2175 = vmul.f32 %v2161, %v267
  %v2176 = vmul.f32 %v2164, %v267
  %v2177 = vmul.f32 %v2167, %v267
  %v2178 = vmul.f32 %v2170, %v267
  %v2179 = vmul.f32 %v2173, %v267
  %v2180 = vsub.f32 %v2150, %v2174
  %v2181 = vsub.f32 %v2151, %v2175
  %v2182 = vsub.f32 %v2152, %v2176
  %v2183 = vsub.f32 %v2153, %v2177
  %v2184 = vsub.f32 %v2154, %v2178
  %v2185 = vsub.f32 %v2155, %v2179
  %v2186 = vmul.f32 %v2180, %v2180
  %v2187 = vmul.f32 %v2181, %v2181
  %v2188 = vmul.f32 %v2182, %v2182
  %v2189 = vmul.f32 %v2183, %v2183
  %v2190 = vmul.f32 %v2184, %v2184
  %v2191 = vmul.f32 %v2185, %v2185
  %v2192 = vsel %vm248, %v2186, 0.0
  %2193 = vadd.xlane.f32.xlu0 %v2192
  %v2194 = vpop.xlane.xlu0 %2193
  %v2195 = vsel %vm248, %v2187, 0.0
  %2196 = vadd.xlane.f32.xlu0 %v2195
  %v2197 = vpop.xlane.xlu0 %2196
  %v2198 = vsel %vm248, %v2188, 0.0
  %2199 = vadd.xlane.f32.xlu0 %v2198
  %v2200 = vpop.xlane.xlu0 %2199
  %v2201 = vsel %vm248, %v2189, 0.0
  %2202 = vadd.xlane.f32.xlu0 %v2201
  %v2203 = vpop.xlane.xlu0 %2202
  %v2204 = vsel %vm248, %v2190, 0.0
  %2205 = vadd.xlane.f32.xlu0 %v2204
  %v2206 = vpop.xlane.xlu0 %2205
  %v2207 = vsel %vm248, %v2191, 0.0
  %2208 = vadd.xlane.f32.xlu0 %v2207
  %v2209 = vpop.xlane.xlu0 %2208
  %v2210 = vmul.f32 %v2194, %v267
  %v2211 = vmul.f32 %v2197, %v267
  %v2212 = vmul.f32 %v2200, %v267
  %v2213 = vmul.f32 %v2203, %v267
  %v2214 = vmul.f32 %v2206, %v267
  %v2215 = vmul.f32 %v2209, %v267
  %v2216 = vadd.f32 %v2210, 1e-05
  %v2217 = vadd.f32 %v2211, 1e-05
  %v2218 = vadd.f32 %v2212, 1e-05
  %v2219 = vadd.f32 %v2213, 1e-05
  %v2220 = vadd.f32 %v2214, 1e-05
  %v2221 = vadd.f32 %v2215, 1e-05
  %v2222 = vrsqrt.pop %v2216
  %v2223 = vrsqrt.pop %v2217
  %v2224 = vrsqrt.pop %v2218
  %v2225 = vrsqrt.pop %v2219
  %v2226 = vrsqrt.pop %v2220
  %v2227 = vrsqrt.pop %v2221
  %v2228 = vmul.f32 %v2180, %v2222
  %v2229 = vmul.f32 %v2181, %v2223
  %v2230 = vmul.f32 %v2182, %v2224
  %v2231 = vmul.f32 %v2183, %v2225
  %v2232 = vmul.f32 %v2184, %v2226
  %v2233 = vmul.f32 %v2185, %v2227
  %v2234 = vlaneseq
  %v2235 = vshrl.u32 %v2234, 7
  %v2236 = vsub.s32 4, %v2235
  %v2237 = vrot.slane %v1575, %v2236
  %v2238 = vmul.f32 %v2228, %v2237
  %v2239 = vmul.f32 %v2229, %v2237
  %v2240 = vmul.f32 %v2230, %v2237
  %v2241 = vmul.f32 %v2231, %v2237
  %v2242 = vmul.f32 %v2232, %v2237
  %v2243 = vmul.f32 %v2233, %v2237
  %v2244 = vlaneseq
  %v2245 = vshrl.u32 %v2244, 7
  %v2246 = vsub.s32 5, %v2245
  %v2247 = vrot.slane %v1575, %v2246
  %v2248 = vadd.f32 %v2238, %v2247
  %v2249 = vadd.f32 %v2239, %v2247
  %v2250 = vadd.f32 %v2240, %v2247
  %v2251 = vadd.f32 %v2241, %v2247
  %v2252 = vadd.f32 %v2242, %v2247
  %v2253 = vadd.f32 %v2243, %v2247
  %v2254 = vlaneseq
  %v2255 = vshrl.u32 %v2254, 7
  %v2256 = vsub.s32 2, %v2255
  %v2257 = vrot.slane %v1575, %v2256
  %v2259 = vsel %vm248, %v2248, 0
  %v2262 = vsel %vm248, %v2249, 0
  %v2265 = vsel %vm248, %v2250, 0
  %v2268 = vsel %vm248, %v2251, 0
  %v2271 = vsel %vm248, %v2252, 0
  %v2274 = vsel %vm248, %v2253, 0
  %2276 = vmatprep.subr.mxu0 0.0
  %2277 = vmatpush1.msra.mxu0 0.0
  %2278 = vmatprep.subr.mxu0 0.0
  %2279 = vmatpush1.msra.mxu0 0.0
  %2280 = vmatprep.subr.mxu0 0.0
  %2281 = vmatpush1.msra.mxu0 0.0
  %2282 = vmatprep.subr.mxu0 0.0
  %2283 = vmatpush1.msra.mxu0 0.0
  %2284 = vmatprep.subr.mxu0 0.0
  %2285 = vmatpush1.msra.mxu0 0.0
  %2286 = vmatprep.subr.mxu0 0.0
  %2287 = vmatpush1.msra.mxu0 0.0
  %2288 = vmatprep.subr.mxu0 0.0
  %2289 = vmatpush1.msra.mxu0 0.0
  %2290 = vmatprep.subr.mxu0 0.0
  %2291 = vmatpush1.msra.mxu0 0.0
  %2292 = vmatprep.subr.mxu0 0.0
  %2293 = vmatpush1.msra.mxu0 0.0
  %2294 = vmatprep.subr.mxu0 0.0
  %2295 = vmatpush1.msra.mxu0 0.0
  %2296 = vmatprep.subr.mxu0 0.0
  %2297 = vmatpush1.msra.mxu0 0.0
  %2298 = vmatprep.subr.mxu0 0.0
  %2299 = vmatpush1.msra.mxu0 0.0
  %2300 = vmatprep.subr.mxu0 0.0
  %2301 = vmatpush1.msra.mxu0 %v1556
  %2302 = vmatprep.subr.mxu0 0.0
  %2303 = vmatpush1.msra.mxu0 %v1553
  %2304 = vmatprep.subr.mxu0 0.0
  %2305 = vmatpush1.msra.mxu0 %v1550
  %2306 = vmatprep.subr.mxu0 0.0
  %2307 = vmatpush1.msra.mxu0 %v1547
  %2308 = vmatprep.subr.mxu0 0.0
  %2309 = vmatpush2.msra.mxu0 0.0
  %2310 = vmatprep.subr.mxu0 0.0
  %2311 = vmatpush2.msra.mxu0 0.0
  %2312 = vmatprep.subr.mxu0 0.0
  %2313 = vmatpush2.msra.mxu0 0.0
  %2314 = vmatprep.subr.mxu0 0.0
  %2315 = vmatpush2.msra.mxu0 0.0
  %2316 = vmatprep.subr.mxu0 0.0
  %2317 = vmatpush2.msra.mxu0 0.0
  %2318 = vmatprep.subr.mxu0 0.0
  %2319 = vmatpush2.msra.mxu0 0.0
  %2320 = vmatprep.subr.mxu0 0.0
  %2321 = vmatpush2.msra.mxu0 0.0
  %2322 = vmatprep.subr.mxu0 0.0
  %2323 = vmatpush2.msra.mxu0 0.0
  %2324 = vmatprep.subr.mxu0 0.0
  %2325 = vmatpush2.msra.mxu0 0.0
  %2326 = vmatprep.subr.mxu0 0.0
  %2327 = vmatpush2.msra.mxu0 0.0
  %2328 = vmatprep.subr.mxu0 0.0
  %2329 = vmatpush2.msra.mxu0 0.0
  %2330 = vmatprep.subr.mxu0 0.0
  %2331 = vmatpush2.msra.mxu0 0.0
  %2332 = vmatprep.subr.mxu0 0.0
  %2333 = vmatpush2.msra.mxu0 0.0
  %2334 = vmatprep.subr.mxu0 0.0
  %2335 = vmatpush2.msra.mxu0 0.0
  %2336 = vmatprep.subr.mxu0 0.0
  %2337 = vmatpush2.msra.mxu0 0.0
  %2338 = vmatprep.subr.mxu0 0.0
  %2339 = vmatpush2.msra.mxu0 0.0
  %2340 = vmatprep.mubr.f32.mxu0 0.0
  %2341 = vmatmul.mubr.f32.gmra.mxu0 %v2259
  %v2342 = vpop.f32.mrf.mxu0
  %v2343 = vadd.f32 %v2257, %v2342
  %v2344 = vpop.f32.mrf.mxu0
  %2345 = vmatprep.mubr.f32.mxu0 0.0
  %2346 = vmatmul.mubr.f32.gmra.mxu0 %v2262
  %v2347 = vpop.f32.mrf.mxu0
  %v2348 = vadd.f32 %v2257, %v2347
  %v2349 = vpop.f32.mrf.mxu0
  %2350 = vmatprep.mubr.f32.mxu0 0.0
  %2351 = vmatmul.mubr.f32.gmra.mxu0 %v2265
  %v2352 = vpop.f32.mrf.mxu0
  %v2353 = vadd.f32 %v2257, %v2352
  %v2354 = vpop.f32.mrf.mxu0
  %2355 = vmatprep.mubr.f32.mxu0 0.0
  %2356 = vmatmul.mubr.f32.gmra.mxu0 %v2268
  %v2357 = vpop.f32.mrf.mxu0
  %v2358 = vadd.f32 %v2257, %v2357
  %v2359 = vpop.f32.mrf.mxu0
  %2360 = vmatprep.mubr.f32.mxu0 0.0
  %2361 = vmatmul.mubr.f32.gmra.mxu0 %v2271
  %v2362 = vpop.f32.mrf.mxu0
  %v2363 = vadd.f32 %v2257, %v2362
  %v2364 = vpop.f32.mrf.mxu0
  %2365 = vmatprep.mubr.f32.mxu0 0.0
  %2366 = vmatmul.mubr.f32.gmra.mxu0 %v2274
  %v2367 = vpop.f32.mrf.mxu0
  %v2368 = vadd.f32 %v2257, %v2367
  %v2369 = vpop.f32.mrf.mxu0
  %2370 = vdwg.mxu0
  %v2371 = vmul.f32 %v2343, 0.5
  %v2372 = vmul.f32 %v2348, 0.5
  %v2373 = vmul.f32 %v2353, 0.5
  %v2374 = vmul.f32 %v2358, 0.5
  %v2375 = vmul.f32 %v2363, 0.5
  %v2376 = vmul.f32 %v2368, 0.5
  %v2377 = vmul.f32 %v2343, 0.70710677
  %v2378 = vmul.f32 %v2348, 0.70710677
  %v2379 = vmul.f32 %v2353, 0.70710677
  %v2380 = vmul.f32 %v2358, 0.70710677
  %v2381 = vmul.f32 %v2363, 0.70710677
  %v2382 = vmul.f32 %v2368, 0.70710677
  %v2383 = vand.u32 2147483647, %v2377
  %v2384 = vand.u32 2147483647, %v2378
  %v2385 = vand.u32 2147483647, %v2379
  %v2386 = vand.u32 2147483647, %v2380
  %v2387 = vand.u32 2147483647, %v2381
  %v2388 = vand.u32 2147483647, %v2382
  %v2389 = vmul.f32 %v2383, 0.3275911
  %v2390 = vmul.f32 %v2384, 0.3275911
  %v2391 = vmul.f32 %v2385, 0.3275911
  %v2392 = vmul.f32 %v2386, 0.3275911
  %v2393 = vmul.f32 %v2387, 0.3275911
  %v2394 = vmul.f32 %v2388, 0.3275911
  %v2395 = vadd.f32 %v2389, 1.0
  %v2396 = vadd.f32 %v2390, 1.0
  %v2397 = vadd.f32 %v2391, 1.0
  %v2398 = vadd.f32 %v2392, 1.0
  %v2399 = vadd.f32 %v2393, 1.0
  %v2400 = vadd.f32 %v2394, 1.0
  %v2401 = vrcp.pop %v2395
  %v2402 = vmul.f32 1.0, %v2401
  %v2403 = vrcp.pop %v2396
  %v2404 = vmul.f32 1.0, %v2403
  %v2405 = vrcp.pop %v2397
  %v2406 = vmul.f32 1.0, %v2405
  %v2407 = vrcp.pop %v2398
  %v2408 = vmul.f32 1.0, %v2407
  %v2409 = vrcp.pop %v2399
  %v2410 = vmul.f32 1.0, %v2409
  %v2411 = vrcp.pop %v2400
  %v2412 = vmul.f32 1.0, %v2411
  %v2413 = vmul.f32 %v2402, 1.0614054
  %v2414 = vmul.f32 %v2404, 1.0614054
  %v2415 = vmul.f32 %v2406, 1.0614054
  %v2416 = vmul.f32 %v2408, 1.0614054
  %v2417 = vmul.f32 %v2410, 1.0614054
  %v2418 = vmul.f32 %v2412, 1.0614054
  %v2419 = vadd.f32 %v2413, -1.4531521
  %v2420 = vadd.f32 %v2414, -1.4531521
  %v2421 = vadd.f32 %v2415, -1.4531521
  %v2422 = vadd.f32 %v2416, -1.4531521
  %v2423 = vadd.f32 %v2417, -1.4531521
  %v2424 = vadd.f32 %v2418, -1.4531521
  %v2425 = vmul.f32 %v2419, %v2402
  %v2426 = vmul.f32 %v2420, %v2404
  %v2427 = vmul.f32 %v2421, %v2406
  %v2428 = vmul.f32 %v2422, %v2408
  %v2429 = vmul.f32 %v2423, %v2410
  %v2430 = vmul.f32 %v2424, %v2412
  %v2431 = vadd.f32 %v2425, 1.4214138
  %v2432 = vadd.f32 %v2426, 1.4214138
  %v2433 = vadd.f32 %v2427, 1.4214138
  %v2434 = vadd.f32 %v2428, 1.4214138
  %v2435 = vadd.f32 %v2429, 1.4214138
  %v2436 = vadd.f32 %v2430, 1.4214138
  %v2437 = vmul.f32 %v2431, %v2402
  %v2438 = vmul.f32 %v2432, %v2404
  %v2439 = vmul.f32 %v2433, %v2406
  %v2440 = vmul.f32 %v2434, %v2408
  %v2441 = vmul.f32 %v2435, %v2410
  %v2442 = vmul.f32 %v2436, %v2412
  %v2443 = vadd.f32 %v2437, -0.28449672
  %v2444 = vadd.f32 %v2438, -0.28449672
  %v2445 = vadd.f32 %v2439, -0.28449672
  %v2446 = vadd.f32 %v2440, -0.28449672
  %v2447 = vadd.f32 %v2441, -0.28449672
  %v2448 = vadd.f32 %v2442, -0.28449672
  %v2449 = vmul.f32 %v2443, %v2402
  %v2450 = vmul.f32 %v2444, %v2404
  %v2451 = vmul.f32 %v2445, %v2406
  %v2452 = vmul.f32 %v2446, %v2408
  %v2453 = vmul.f32 %v2447, %v2410
  %v2454 = vmul.f32 %v2448, %v2412
  %v2455 = vadd.f32 %v2449, 0.2548296
  %v2456 = vadd.f32 %v2450, 0.2548296
  %v2457 = vadd.f32 %v2451, 0.2548296
  %v2458 = vadd.f32 %v2452, 0.2548296
  %v2459 = vadd.f32 %v2453, 0.2548296
  %v2460 = vadd.f32 %v2454, 0.2548296
  %v2461 = vmul.f32 %v2455, %v2402
  %v2462 = vmul.f32 %v2456, %v2404
  %v2463 = vmul.f32 %v2457, %v2406
  %v2464 = vmul.f32 %v2458, %v2408
  %v2465 = vmul.f32 %v2459, %v2410
  %v2466 = vmul.f32 %v2460, %v2412
  %v2467 = vsub.f32 0.0, %v2383
  %v2468 = vsub.f32 0.0, %v2384
  %v2469 = vsub.f32 0.0, %v2385
  %v2470 = vsub.f32 0.0, %v2386
  %v2471 = vsub.f32 0.0, %v2387
  %v2472 = vsub.f32 0.0, %v2388
  %v2473 = vmul.f32 %v2467, %v2383
  %v2474 = vmul.f32 %v2468, %v2384
  %v2475 = vmul.f32 %v2469, %v2385
  %v2476 = vmul.f32 %v2470, %v2386
  %v2477 = vmul.f32 %v2471, %v2387
  %v2478 = vmul.f32 %v2472, %v2388
  %v2479 = vmul.f32 %v2473, 1.442695
  %v2480 = vpow.pop %v2479
  %v2481 = vmul.f32 %v2474, 1.442695
  %v2482 = vpow.pop %v2481
  %v2483 = vmul.f32 %v2475, 1.442695
  %v2484 = vpow.pop %v2483
  %v2485 = vmul.f32 %v2476, 1.442695
  %v2486 = vpow.pop %v2485
  %v2487 = vmul.f32 %v2477, 1.442695
  %v2488 = vpow.pop %v2487
  %v2489 = vmul.f32 %v2478, 1.442695
  %v2490 = vpow.pop %v2489
  %v2491 = vmul.f32 %v2461, %v2480
  %v2492 = vmul.f32 %v2462, %v2482
  %v2493 = vmul.f32 %v2463, %v2484
  %v2494 = vmul.f32 %v2464, %v2486
  %v2495 = vmul.f32 %v2465, %v2488
  %v2496 = vmul.f32 %v2466, %v2490
  %v2497 = vsub.f32 1.0, %v2491
  %v2498 = vsub.f32 1.0, %v2492
  %v2499 = vsub.f32 1.0, %v2493
  %v2500 = vsub.f32 1.0, %v2494
  %v2501 = vsub.f32 1.0, %v2495
  %v2502 = vsub.f32 1.0, %v2496
  %vm2503 = vcmp.ge.f32.partialorder %v2377, 0.0
  %vm2504 = vcmp.ge.f32.partialorder %v2378, 0.0
  %vm2505 = vcmp.ge.f32.partialorder %v2379, 0.0
  %vm2506 = vcmp.ge.f32.partialorder %v2380, 0.0
  %vm2507 = vcmp.ge.f32.partialorder %v2381, 0.0
  %vm2508 = vcmp.ge.f32.partialorder %v2382, 0.0
  %v2509 = vsub.f32 0.0, %v2497
  %v2510 = vsub.f32 0.0, %v2498
  %v2511 = vsub.f32 0.0, %v2499
  %v2512 = vsub.f32 0.0, %v2500
  %v2513 = vsub.f32 0.0, %v2501
  %v2514 = vsub.f32 0.0, %v2502
  %v2515 = vsel %vm2503, %v2497, %v2509
  %v2516 = vsel %vm2504, %v2498, %v2510
  %v2517 = vsel %vm2505, %v2499, %v2511
  %v2518 = vsel %vm2506, %v2500, %v2512
  %v2519 = vsel %vm2507, %v2501, %v2513
  %v2520 = vsel %vm2508, %v2502, %v2514
  %v2521 = vadd.f32 %v2515, 1.0
  %v2522 = vadd.f32 %v2516, 1.0
  %v2523 = vadd.f32 %v2517, 1.0
  %v2524 = vadd.f32 %v2518, 1.0
  %v2525 = vadd.f32 %v2519, 1.0
  %v2526 = vadd.f32 %v2520, 1.0
  %v2527 = vmul.f32 %v2371, %v2521
  %v2528 = vmul.f32 %v2372, %v2522
  %v2529 = vmul.f32 %v2373, %v2523
  %v2530 = vmul.f32 %v2374, %v2524
  %v2531 = vmul.f32 %v2375, %v2525
  %v2532 = vmul.f32 %v2376, %v2526
  %v2533 = vlaneseq
  %v2534 = vshrl.u32 %v2533, 7
  %v2535 = vsub.s32 3, %v2534
  %v2536 = vrot.slane %v1575, %v2535
  %2537 = vmatprep.subr.mxu0 0.0
  %2538 = vmatpush1.msra.mxu0 %v1573
  %2539 = vmatprep.subr.mxu0 0.0
  %2540 = vmatpush1.msra.mxu0 %v1572
  %2541 = vmatprep.subr.mxu0 0.0
  %2542 = vmatpush1.msra.mxu0 %v1571
  %2543 = vmatprep.subr.mxu0 0.0
  %2544 = vmatpush1.msra.mxu0 %v1570
  %2545 = vmatprep.subr.mxu0 0.0
  %2546 = vmatpush1.msra.mxu0 %v1569
  %2547 = vmatprep.subr.mxu0 0.0
  %2548 = vmatpush1.msra.mxu0 %v1568
  %2549 = vmatprep.subr.mxu0 0.0
  %2550 = vmatpush1.msra.mxu0 %v1567
  %2551 = vmatprep.subr.mxu0 0.0
  %2552 = vmatpush1.msra.mxu0 %v1566
  %2553 = vmatprep.subr.mxu0 0.0
  %2554 = vmatpush1.msra.mxu0 %v1565
  %2555 = vmatprep.subr.mxu0 0.0
  %2556 = vmatpush1.msra.mxu0 %v1564
  %2557 = vmatprep.subr.mxu0 0.0
  %2558 = vmatpush1.msra.mxu0 %v1563
  %2559 = vmatprep.subr.mxu0 0.0
  %2560 = vmatpush1.msra.mxu0 %v1562
  %2561 = vmatprep.subr.mxu0 0.0
  %2562 = vmatpush1.msra.mxu0 %v1561
  %2563 = vmatprep.subr.mxu0 0.0
  %2564 = vmatpush1.msra.mxu0 %v1560
  %2565 = vmatprep.subr.mxu0 0.0
  %2566 = vmatpush1.msra.mxu0 %v1559
  %2567 = vmatprep.subr.mxu0 0.0
  %2568 = vmatpush1.msra.mxu0 %v1558
  %2569 = vmatprep.subr.mxu0 0.0
  %2570 = vmatpush2.msra.mxu0 0.0
  %2571 = vmatprep.subr.mxu0 0.0
  %2572 = vmatpush2.msra.mxu0 0.0
  %2573 = vmatprep.subr.mxu0 0.0
  %2574 = vmatpush2.msra.mxu0 0.0
  %2575 = vmatprep.subr.mxu0 0.0
  %2576 = vmatpush2.msra.mxu0 0.0
  %2577 = vmatprep.subr.mxu0 0.0
  %2578 = vmatpush2.msra.mxu0 0.0
  %2579 = vmatprep.subr.mxu0 0.0
  %2580 = vmatpush2.msra.mxu0 0.0
  %2581 = vmatprep.subr.mxu0 0.0
  %2582 = vmatpush2.msra.mxu0 0.0
  %2583 = vmatprep.subr.mxu0 0.0
  %2584 = vmatpush2.msra.mxu0 0.0
  %2585 = vmatprep.subr.mxu0 0.0
  %2586 = vmatpush2.msra.mxu0 0.0
  %2587 = vmatprep.subr.mxu0 0.0
  %2588 = vmatpush2.msra.mxu0 0.0
  %2589 = vmatprep.subr.mxu0 0.0
  %2590 = vmatpush2.msra.mxu0 0.0
  %2591 = vmatprep.subr.mxu0 0.0
  %2592 = vmatpush2.msra.mxu0 0.0
  %2593 = vmatprep.subr.mxu0 0.0
  %2594 = vmatpush2.msra.mxu0 0.0
  %2595 = vmatprep.subr.mxu0 0.0
  %2596 = vmatpush2.msra.mxu0 0.0
  %2597 = vmatprep.subr.mxu0 0.0
  %2598 = vmatpush2.msra.mxu0 0.0
  %2599 = vmatprep.subr.mxu0 0.0
  %2600 = vmatpush2.msra.mxu0 0.0
  %2601 = vmatprep.mubr.f32.mxu0 0.0
  %2602 = vmatmul.mubr.f32.gmra.mxu0 %v2527
  %v2603 = vpop.f32.mrf.mxu0
  %v2604 = vadd.f32 %v2536, %v2603
  %v2605 = vpop.f32.mrf.mxu0
  %2606 = vmatprep.mubr.f32.mxu0 0.0
  %2607 = vmatmul.mubr.f32.gmra.mxu0 %v2528
  %v2608 = vpop.f32.mrf.mxu0
  %v2609 = vadd.f32 %v2536, %v2608
  %v2610 = vpop.f32.mrf.mxu0
  %2611 = vmatprep.mubr.f32.mxu0 0.0
  %2612 = vmatmul.mubr.f32.gmra.mxu0 %v2529
  %v2613 = vpop.f32.mrf.mxu0
  %v2614 = vadd.f32 %v2536, %v2613
  %v2615 = vpop.f32.mrf.mxu0
  %2616 = vmatprep.mubr.f32.mxu0 0.0
  %2617 = vmatmul.mubr.f32.gmra.mxu0 %v2530
  %v2618 = vpop.f32.mrf.mxu0
  %v2619 = vadd.f32 %v2536, %v2618
  %v2620 = vpop.f32.mrf.mxu0
  %2621 = vmatprep.mubr.f32.mxu0 0.0
  %2622 = vmatmul.mubr.f32.gmra.mxu0 %v2531
  %v2623 = vpop.f32.mrf.mxu0
  %v2624 = vadd.f32 %v2536, %v2623
  %v2625 = vpop.f32.mrf.mxu0
  %2626 = vmatprep.mubr.f32.mxu0 0.0
  %2627 = vmatmul.mubr.f32.gmra.mxu0 %v2532
  %v2628 = vpop.f32.mrf.mxu0
  %v2629 = vadd.f32 %v2536, %v2628
  %v2630 = vpop.f32.mrf.mxu0
  %2631 = vdwg.mxu0
  %v2632 = vadd.f32 %v2248, %v2604
  %v2633 = vadd.f32 %v2249, %v2609
  %v2634 = vadd.f32 %v2250, %v2614
  %v2635 = vadd.f32 %v2251, %v2619
  %v2636 = vadd.f32 %v2252, %v2624
  %v2637 = vadd.f32 %v2253, %v2629
  %v2638 = vsel %vm248, %v2632, 0.0
  %2639 = vadd.xlane.f32.xlu0 %v2638
  %v2640 = vpop.xlane.xlu0 %2639
  %v2641 = vsel %vm248, %v2633, 0.0
  %2642 = vadd.xlane.f32.xlu0 %v2641
  %v2643 = vpop.xlane.xlu0 %2642
  %v2644 = vsel %vm248, %v2634, 0.0
  %2645 = vadd.xlane.f32.xlu0 %v2644
  %v2646 = vpop.xlane.xlu0 %2645
  %v2647 = vsel %vm248, %v2635, 0.0
  %2648 = vadd.xlane.f32.xlu0 %v2647
  %v2649 = vpop.xlane.xlu0 %2648
  %v2650 = vsel %vm248, %v2636, 0.0
  %2651 = vadd.xlane.f32.xlu0 %v2650
  %v2652 = vpop.xlane.xlu0 %2651
  %v2653 = vsel %vm248, %v2637, 0.0
  %2654 = vadd.xlane.f32.xlu0 %v2653
  %v2655 = vpop.xlane.xlu0 %2654
  %v2656 = vmul.f32 %v2640, %v267
  %v2657 = vmul.f32 %v2643, %v267
  %v2658 = vmul.f32 %v2646, %v267
  %v2659 = vmul.f32 %v2649, %v267
  %v2660 = vmul.f32 %v2652, %v267
  %v2661 = vmul.f32 %v2655, %v267
  %v2662 = vsub.f32 %v2632, %v2656
  %v2663 = vsub.f32 %v2633, %v2657
  %v2664 = vsub.f32 %v2634, %v2658
  %v2665 = vsub.f32 %v2635, %v2659
  %v2666 = vsub.f32 %v2636, %v2660
  %v2667 = vsub.f32 %v2637, %v2661
  %v2668 = vmul.f32 %v2662, %v2662
  %v2669 = vmul.f32 %v2663, %v2663
  %v2670 = vmul.f32 %v2664, %v2664
  %v2671 = vmul.f32 %v2665, %v2665
  %v2672 = vmul.f32 %v2666, %v2666
  %v2673 = vmul.f32 %v2667, %v2667
  %v2674 = vsel %vm248, %v2668, 0.0
  %2675 = vadd.xlane.f32.xlu0 %v2674
  %v2676 = vpop.xlane.xlu0 %2675
  %v2677 = vsel %vm248, %v2669, 0.0
  %2678 = vadd.xlane.f32.xlu0 %v2677
  %v2679 = vpop.xlane.xlu0 %2678
  %v2680 = vsel %vm248, %v2670, 0.0
  %2681 = vadd.xlane.f32.xlu0 %v2680
  %v2682 = vpop.xlane.xlu0 %2681
  %v2683 = vsel %vm248, %v2671, 0.0
  %2684 = vadd.xlane.f32.xlu0 %v2683
  %v2685 = vpop.xlane.xlu0 %2684
  %v2686 = vsel %vm248, %v2672, 0.0
  %2687 = vadd.xlane.f32.xlu0 %v2686
  %v2688 = vpop.xlane.xlu0 %2687
  %v2689 = vsel %vm248, %v2673, 0.0
  %2690 = vadd.xlane.f32.xlu0 %v2689
  %v2691 = vpop.xlane.xlu0 %2690
  %v2692 = vmul.f32 %v2676, %v267
  %v2693 = vmul.f32 %v2679, %v267
  %v2694 = vmul.f32 %v2682, %v267
  %v2695 = vmul.f32 %v2685, %v267
  %v2696 = vmul.f32 %v2688, %v267
  %v2697 = vmul.f32 %v2691, %v267
  %v2698 = vadd.f32 %v2692, 1e-05
  %v2699 = vadd.f32 %v2693, 1e-05
  %v2700 = vadd.f32 %v2694, 1e-05
  %v2701 = vadd.f32 %v2695, 1e-05
  %v2702 = vadd.f32 %v2696, 1e-05
  %v2703 = vadd.f32 %v2697, 1e-05
  %v2704 = vrsqrt.pop %v2698
  %v2705 = vrsqrt.pop %v2699
  %v2706 = vrsqrt.pop %v2700
  %v2707 = vrsqrt.pop %v2701
  %v2708 = vrsqrt.pop %v2702
  %v2709 = vrsqrt.pop %v2703
  %v2710 = vmul.f32 %v2662, %v2704
  %v2711 = vmul.f32 %v2663, %v2705
  %v2712 = vmul.f32 %v2664, %v2706
  %v2713 = vmul.f32 %v2665, %v2707
  %v2714 = vmul.f32 %v2666, %v2708
  %v2715 = vmul.f32 %v2667, %v2709
  %v2716 = vlaneseq
  %v2717 = vshrl.u32 %v2716, 7
  %v2718 = vsub.s32 6, %v2717
  %v2719 = vrot.slane %v1575, %v2718
  %v2720 = vmul.f32 %v2710, %v2719
  %v2721 = vmul.f32 %v2711, %v2719
  %v2722 = vmul.f32 %v2712, %v2719
  %v2723 = vmul.f32 %v2713, %v2719
  %v2724 = vmul.f32 %v2714, %v2719
  %v2725 = vmul.f32 %v2715, %v2719
  %v2726 = vlaneseq
  %v2727 = vshrl.u32 %v2726, 7
  %v2728 = vsub.s32 7, %v2727
  %v2729 = vrot.slane %v1575, %v2728
  %v2730 = vadd.f32 %v2720, %v2729
  %v2731 = vadd.f32 %v2721, %v2729
  %v2732 = vadd.f32 %v2722, %v2729
  %v2733 = vadd.f32 %v2723, %v2729
  %v2734 = vadd.f32 %v2724, %v2729
  %v2735 = vadd.f32 %v2725, %v2729
  %v2736 = vld [vmem:[%s7] sm:$0xff]
  %v2737 = vld [vmem:[%s7 + $0x8] sm:$0xff]
  %v2738 = vld [vmem:[%s7 + $0x10] sm:$0xff]
  %v2739 = vld [vmem:[%s7 + $0x18] sm:$0xff]
  %v2740 = vlaneseq
  %v2741 = vshrl.u32 %v2740, 7
  %v2742 = vsub.s32 2, %v2741
  %v2743 = vrot.slane %v35, %v2742
  %v2745 = vsel %vm248, %v2730, 0
  %v2748 = vsel %vm248, %v2731, 0
  %v2751 = vsel %vm248, %v2732, 0
  %v2754 = vsel %vm248, %v2733, 0
  %v2757 = vsel %vm248, %v2734, 0
  %v2760 = vsel %vm248, %v2735, 0
  %2762 = vmatprep.subr.mxu0 0.0
  %2763 = vmatpush1.msra.mxu0 0.0
  %2764 = vmatprep.subr.mxu0 0.0
  %2765 = vmatpush1.msra.mxu0 0.0
  %2766 = vmatprep.subr.mxu0 0.0
  %2767 = vmatpush1.msra.mxu0 0.0
  %2768 = vmatprep.subr.mxu0 0.0
  %2769 = vmatpush1.msra.mxu0 0.0
  %2770 = vmatprep.subr.mxu0 0.0
  %2771 = vmatpush1.msra.mxu0 0.0
  %2772 = vmatprep.subr.mxu0 0.0
  %2773 = vmatpush1.msra.mxu0 0.0
  %2774 = vmatprep.subr.mxu0 0.0
  %2775 = vmatpush1.msra.mxu0 0.0
  %2776 = vmatprep.subr.mxu0 0.0
  %2777 = vmatpush1.msra.mxu0 0.0
  %2778 = vmatprep.subr.mxu0 0.0
  %2779 = vmatpush1.msra.mxu0 0.0
  %2780 = vmatprep.subr.mxu0 0.0
  %2781 = vmatpush1.msra.mxu0 0.0
  %2782 = vmatprep.subr.mxu0 0.0
  %2783 = vmatpush1.msra.mxu0 0.0
  %2784 = vmatprep.subr.mxu0 0.0
  %2785 = vmatpush1.msra.mxu0 0.0
  %2786 = vmatprep.subr.mxu0 0.0
  %2787 = vmatpush1.msra.mxu0 %v2739
  %2788 = vmatprep.subr.mxu0 0.0
  %2789 = vmatpush1.msra.mxu0 %v2738
  %2790 = vmatprep.subr.mxu0 0.0
  %2791 = vmatpush1.msra.mxu0 %v2737
  %2792 = vmatprep.subr.mxu0 0.0
  %2793 = vmatpush1.msra.mxu0 %v2736
  %2794 = vmatprep.subr.mxu0 0.0
  %2795 = vmatpush2.msra.mxu0 0.0
  %2796 = vmatprep.subr.mxu0 0.0
  %2797 = vmatpush2.msra.mxu0 0.0
  %2798 = vmatprep.subr.mxu0 0.0
  %2799 = vmatpush2.msra.mxu0 0.0
  %2800 = vmatprep.subr.mxu0 0.0
  %2801 = vmatpush2.msra.mxu0 0.0
  %2802 = vmatprep.subr.mxu0 0.0
  %2803 = vmatpush2.msra.mxu0 0.0
  %2804 = vmatprep.subr.mxu0 0.0
  %2805 = vmatpush2.msra.mxu0 0.0
  %2806 = vmatprep.subr.mxu0 0.0
  %2807 = vmatpush2.msra.mxu0 0.0
  %2808 = vmatprep.subr.mxu0 0.0
  %2809 = vmatpush2.msra.mxu0 0.0
  %2810 = vmatprep.subr.mxu0 0.0
  %2811 = vmatpush2.msra.mxu0 0.0
  %2812 = vmatprep.subr.mxu0 0.0
  %2813 = vmatpush2.msra.mxu0 0.0
  %2814 = vmatprep.subr.mxu0 0.0
  %2815 = vmatpush2.msra.mxu0 0.0
  %2816 = vmatprep.subr.mxu0 0.0
  %2817 = vmatpush2.msra.mxu0 0.0
  %2818 = vmatprep.subr.mxu0 0.0
  %2819 = vmatpush2.msra.mxu0 0.0
  %2820 = vmatprep.subr.mxu0 0.0
  %2821 = vmatpush2.msra.mxu0 0.0
  %2822 = vmatprep.subr.mxu0 0.0
  %2823 = vmatpush2.msra.mxu0 0.0
  %2824 = vmatprep.subr.mxu0 0.0
  %2825 = vmatpush2.msra.mxu0 0.0
  %2826 = vmatprep.mubr.f32.mxu0 0.0
  %2827 = vmatmul.mubr.f32.gmra.mxu0 %v2745
  %v2828 = vpop.f32.mrf.mxu0
  %v2829 = vadd.f32 %v2743, %v2828
  %v2830 = vpop.f32.mrf.mxu0
  %2831 = vmatprep.mubr.f32.mxu0 0.0
  %2832 = vmatmul.mubr.f32.gmra.mxu0 %v2748
  %v2833 = vpop.f32.mrf.mxu0
  %v2834 = vadd.f32 %v2743, %v2833
  %v2835 = vpop.f32.mrf.mxu0
  %2836 = vmatprep.mubr.f32.mxu0 0.0
  %2837 = vmatmul.mubr.f32.gmra.mxu0 %v2751
  %v2838 = vpop.f32.mrf.mxu0
  %v2839 = vadd.f32 %v2743, %v2838
  %v2840 = vpop.f32.mrf.mxu0
  %2841 = vmatprep.mubr.f32.mxu0 0.0
  %2842 = vmatmul.mubr.f32.gmra.mxu0 %v2754
  %v2843 = vpop.f32.mrf.mxu0
  %v2844 = vadd.f32 %v2743, %v2843
  %v2845 = vpop.f32.mrf.mxu0
  %2846 = vmatprep.mubr.f32.mxu0 0.0
  %2847 = vmatmul.mubr.f32.gmra.mxu0 %v2757
  %v2848 = vpop.f32.mrf.mxu0
  %v2849 = vadd.f32 %v2743, %v2848
  %v2850 = vpop.f32.mrf.mxu0
  %2851 = vmatprep.mubr.f32.mxu0 0.0
  %2852 = vmatmul.mubr.f32.gmra.mxu0 %v2760
  %v2853 = vpop.f32.mrf.mxu0
  %v2854 = vadd.f32 %v2743, %v2853
  %v2855 = vpop.f32.mrf.mxu0
  %2856 = vdwg.mxu0
  %2857 = vst [vmem:[%s10] sm:$0xff] %v2829
  %2858 = vst [vmem:[%s10 + $0x8] sm:$0xff] %v2834
  %2859 = vst [vmem:[%s10 + $0x10] sm:$0xff] %v2839
  %2860 = vst [vmem:[%s10 + $0x18] sm:$0xff] %v2844
  %2861 = vst [vmem:[%s10 + $0x20] sm:$0xff] %v2849
  %2862 = vst [vmem:[%s10 + $0x28] sm:$0xff] %v2854
  // Predicated region
  $region42: #{decision_transformer_forward.1} parent=0 // pred_check
    _
  $region43: #{decision_transformer_forward.1} parent=0 // pred_check_branch
    %2864 = sbr.rel (0) target = $region45
  $region44: #{decision_transformer_forward.1} parent=0 // pred_region
    _
  $region45: #{decision_transformer_forward.1} parent=0 // pred_fallthru
    _
  // Predicated region
  $region46: #{decision_transformer_forward.1} parent=0 // pred_check
    _
  $region47: #{decision_transformer_forward.1} parent=0 // pred_check_branch
    %2866 = sbr.rel (0) target = $region49
  $region48: #{decision_transformer_forward.1} parent=0 // pred_region
    _
  $region49: #{decision_transformer_forward.1} parent=0 // pred_fallthru
    _

</llo_original>
